<compile_context>
chip_gen: v7x
topology: tpu7x:2x2x1
jax: 0.10.0
libtpu: 0.0.40
codegen_flags: <defaults>
</compile_context>

<pallas_src>
import functools
import math

import jax
import jax.numpy as jnp
from jax.experimental import pallas as pl
from jax.experimental.pallas import tpu as pltpu


def _round_up(v, m):
    return ((v + m - 1) // m) * m


# ----------------------------------------------------------------------------
# Pallas kernel: one GAT layer (multi-head), online softmax over source tiles
# ----------------------------------------------------------------------------
def gat_layer_kernel(blk_ref, ad_ref, ast_ref, hx_ref, mask_ref, b_ref,
                     out_ref, m_sc, acc_sc,
                     *, heads, ch, caug, concat, apply_elu, apply_log_softmax):
    i = pl.program_id(0)
    j = pl.program_id(1)
    nj = pl.num_programs(1)

    @pl.when(j == 0)
    def _init():
        m_sc[...] = jnp.full_like(m_sc, -1e30)
        acc_sc[...] = jnp.zeros_like(acc_sc)

    # Block-sparse gating: skip tiles with no edges entirely. Exact in real
    # math (a fully masked tile contributes exp(-inf)=0 attention and leaves
    # m/acc unchanged), and avoids the -1e30-vs--1e30 precision pitfall.
    @pl.when(blk_ref[i, j] > 0)
    def _compute():
        a_d = ad_ref[...]                                   # [TI, H]  f32
        a_s_t = ast_ref[...]                                # [H, TJ]  f32 (lane-major)
        hs_aug = hx_ref[...]                                # [TJ, H*caug] bf16
        mask = mask_ref[...].astype(jnp.float32)            # 0 edge / -1e30 non-edge

        for h in range(heads):
            # e[i, j] = a_dst[i] + a_src[j]   (VPU broadcast add)
            e = a_d[:, h:h + 1] + a_s_t[h:h + 1, :]         # [TI, TJ]
            e = jnp.maximum(e, 0.2 * e)                     # LeakyReLU(0.2)
            e = e + mask                                    # additive mask bias

            m_prev = m_sc[h]
            m_new = jnp.maximum(m_prev, jnp.max(e, axis=-1, keepdims=True))
            alpha = jnp.exp(m_prev - m_new)
            # TODO(synk): on v6e/v7x a bf16 exp (bf16 EUP) would ~halve the exp
            # cost and drop the pack; kept f32 for v5e portability.
            p = jnp.exp(e - m_new).astype(jnp.bfloat16)     # unnormalized attention
            # Each head's hs_aug slice carries a trailing ones column, so this
            # single MXU matmul accumulates the numerator AND sum(p).
            acc_sc[h] = alpha * acc_sc[h] + jnp.dot(
                p, hs_aug[:, h * caug:(h + 1) * caug],
                preferred_element_type=jnp.float32)
            m_sc[h] = m_new

    @pl.when(j == nj - 1)
    def _finalize():
        head_out = []
        for h in range(heads):
            acc_h = acc_sc[h]                               # [TI, caug]
            inv_l = pl.reciprocal(acc_h[:, ch:ch + 1], approx=True)
            head_out.append(acc_h[:, :ch] * inv_l)
        if concat:
            y = jnp.concatenate(head_out, axis=-1)          # in-register concat
        else:
            y = head_out[0]
            for h in range(1, heads):
                y = y + head_out[h]
            y = y * (1.0 / heads)
        y = y + b_ref[...]
        if apply_elu:
            y = jnp.where(y > 0, y, jnp.exp(jnp.minimum(y, 0.0)) - 1.0)
        if apply_log_softmax:
            row_max = jnp.max(y, axis=-1, keepdims=True)
            z = y - row_max
            lse = jnp.log(jnp.sum(jnp.exp(z), axis=-1, keepdims=True))
            y = z - lse
        # out_dim is lane-sparse (32 / 4) -> masked stores; written once per row
        # tile so the cost is negligible.
        out_ref[...] = y.astype(out_ref.dtype)


def _gat_layer(x, mask_bias, blk, w, w_ad, w_as, b, *, heads, ch, concat,
               apply_elu, apply_log_softmax, ti, tj):
    n_pad, _ = x.shape
    out_dim = heads * ch if concat else ch
    nt_i, nt_j = n_pad // ti, n_pad // tj
    caug = _round_up(ch + 1, 8)        # per-head width incl. ones col, 8-lane aligned

    # Projections computed ONCE in XLA and streamed as tiles (not per grid step).
    hx = x @ w                                              # [N, H*C]  f32
    a_dst = x @ w_ad                                        # [N, H]
    a_src_t = (x @ w_as).T                                  # [H, N]    lane-major
    hx_r = hx.reshape(n_pad, heads, ch)
    hx_aug = jnp.concatenate(
        [hx_r,
         jnp.ones((n_pad, heads, 1), hx.dtype),
         jnp.zeros((n_pad, heads, caug - ch - 1), hx.dtype)],
        axis=-1).reshape(n_pad, heads * caug).astype(jnp.bfloat16)

    kernel = functools.partial(
        gat_layer_kernel, heads=heads, ch=ch, caug=caug, concat=concat,
        apply_elu=apply_elu, apply_log_softmax=apply_log_softmax)

    def _src(i, j, blk_ref):
        # Empty blocks are remapped to source block 0: consecutive empties keep
        # the same block index, so the pipeline elides their DMA (never worse
        # than the dense fetch count). Their data is never read (pl.when gate).
        return jnp.where(blk_ref[i, j] > 0, j, 0)

    return pl.pallas_call(
        kernel,
        out_shape=jax.ShapeDtypeStruct((n_pad, out_dim), jnp.float32),
        grid_spec=pltpu.PrefetchScalarGridSpec(
            num_scalar_prefetch=1,
            grid=(nt_i, nt_j),                              # (dest rows, src cols)
            in_specs=[
                pl.BlockSpec((ti, heads), lambda i, j, blk: (i, 0)),              # a_dst
                pl.BlockSpec((heads, tj),
                             lambda i, j, blk: (0, _src(i, j, blk))),             # a_src^T
                pl.BlockSpec((tj, heads * caug),
                             lambda i, j, blk: (_src(i, j, blk), 0)),             # hx (+ ones)
                pl.BlockSpec((ti, tj),
                             lambda i, j, blk: (i, _src(i, j, blk))),             # bf16 mask bias
                pl.BlockSpec((1, out_dim), lambda i, j, blk: (0, 0)),             # bias
            ],
            out_specs=pl.BlockSpec((ti, out_dim), lambda i, j, blk: (i, 0)),
            scratch_shapes=[
                pltpu.VMEM((heads, ti, 1), jnp.float32),    # running max
                pltpu.VMEM((heads, ti, caug), jnp.float32), # running numerator + denom
            ]),
        compiler_params=pltpu.CompilerParams(
            dimension_semantics=("parallel", "arbitrary")),
    )(blk, a_dst, a_src_t, hx_aug, mask_bias, b)


# ----------------------------------------------------------------------------
# Wrapper: full NetGATSimple forward
# ----------------------------------------------------------------------------
def netgat_forward(x, adj, params, *, ti=128, tj=256):
    """x: [N, F] f32; adj: [N, N] f32 with adj[i, j] = 1 iff edge j -> i.
    ti/tj are dest-row / source-col tile sizes; pick from vreg/temporary
    pressure (heads x ti x tj f32), not VMEM — footprint here is < 1 MiB."""
    w1, as1, ad1, b1, w2, as2, ad2, b2 = params
    n, f_in = x.shape
    hid, heads1 = as1.shape
    out_ch, heads2 = as2.shape

    # pad node count so both tile sizes divide it
    n_pad = _round_up(n, math.lcm(ti, tj))
    x_p = jnp.zeros((n_pad, f_in), jnp.float32).at[:n, :].set(x)
    adj_p = jnp.zeros((n_pad, n_pad), jnp.float32).at[:n, :n].set(adj)
    # Self loops for ALL rows (incl. padded): every row has >= 1 edge, which the
    # online softmax relies on to flush fully-masked leading tiles (alpha -> 0).
    adj_p = jnp.maximum(adj_p, jnp.eye(n_pad, dtype=jnp.float32))
    # additive attention-mask bias, stored narrow (bf16): 0 on edges, -1e30 off
    mask_bias = ((adj_p - 1.0) * 1e30).astype(jnp.bfloat16)

    # per-(row tile, col tile) "block has edges" table for block-sparse skipping
    nt_i, nt_j = n_pad // ti, n_pad // tj
    blk = (adj_p.reshape(nt_i, ti, nt_j, tj).sum(axis=(1, 3)) > 0).astype(jnp.int32)

    # Fold per-head attention vectors into the layer weights so each layer's
    # source/dest scores for ALL heads come from one small x @ (...) matmul.
    def fold(w, a_vec, heads, ch):
        w_r = w.reshape(w.shape[0], heads, ch)
        return jnp.einsum('fhc,ch->fh', w_r, a_vec)         # [F, heads]

    w_ad1, w_as1 = fold(w1, ad1, heads1, hid), fold(w1, as1, heads1, hid)
    w_ad2, w_as2 = fold(w2, ad2, heads2, out_ch), fold(w2, as2, heads2, out_ch)

    # F.dropout(..., training=False) -> identity (deterministic forward)
    x1 = _gat_layer(x_p, mask_bias, blk, w1, w_ad1, w_as1, b1,
                    heads=heads1, ch=hid, concat=True,
                    apply_elu=True, apply_log_softmax=False, ti=ti, tj=tj)
    out = _gat_layer(x1, mask_bias, blk, w2, w_ad2, w_as2, b2,
                     heads=heads2, ch=out_ch, concat=False,
                     apply_elu=False, apply_log_softmax=True, ti=ti, tj=tj)
    return out[:n]


def build_adj(edge_index, num_nodes):
    """Dense adjacency: adj[i, j] = 1 iff edge j -> i; self loops added."""
    src, dst = edge_index[0], edge_index[1]
    adj = jnp.zeros((num_nodes, num_nodes), jnp.float32)
    adj = adj.at[dst, src].set(1.0)
    adj = jnp.minimum(adj + jnp.eye(num_nodes, dtype=jnp.float32), 1.0)
    return adj


# ----------------------------------------------------------------------------
# Pure-JAX reference (for correctness check)
# ----------------------------------------------------------------------------
def _gat_layer_ref(x, adj, w, a_src, a_dst, bias, heads, ch, concat):
    n = x.shape[0]
    h = (x @ w).reshape(n, heads, ch)
    alpha_src = jnp.einsum('nhc,ch->nh', h, a_src)
    alpha_dst = jnp.einsum('nhc,ch->nh', h, a_dst)
    e = alpha_dst[:, None, :] + alpha_src[None, :, :]       # [i, j, head]
    e = jnp.where(e > 0, e, 0.2 * e)
    e = jnp.where(adj[:, :, None] > 0, e, -1e30)
    e = e - e.max(axis=1, keepdims=True)
    p = jnp.exp(e)
    attn = p / p.sum(axis=1, keepdims=True)
    out = jnp.einsum('ijh,jhc->ihc', attn, h)
    if concat:
        return out.reshape(n, heads * ch) + bias
    return out.mean(axis=1) + bias


def netgat_reference(x, adj, params, heads1, hid, heads2, out_ch):
    w1, as1, ad1, b1, w2, as2, ad2, b2 = params
    x1 = _gat_layer_ref(x, adj, w1, as1, ad1, b1, heads1, hid, True)
    x1 = jnp.where(x1 > 0, x1, jnp.exp(x1) - 1.0)
    x2 = _gat_layer_ref(x1, adj, w2, as2, ad2, b2, heads2, out_ch, False)
    return jax.nn.log_softmax(x2, axis=-1)


# ----------------------------------------------------------------------------
if __name__ == "__main__":
    # NetGATSimple(in_channels=16, out_channels=4, hidden_channels=8, heads=4, heads2=1)
    # N=512 with (TI, TJ)=(128, 256) gives a (4, 2) grid: exercises cross-tile
    # online softmax, decoupled TI/TJ, and (via the path graph) empty-block skipping.
    N, IN_CH, HID, HEADS, OUT_CH, HEADS2 = 512, 16, 8, 4, 4, 1
    TI, TJ = 128, 256

    key = jax.random.PRNGKey(0)
    ks = jax.random.split(key, 9)
    x = jax.random.normal(ks[0], (N, IN_CH), jnp.float32)

    # deterministic path graph (both directions, no wraparound) -> some fully
    # empty 128x256 adjacency blocks; PyG layout: row0 = src, row1 = dst
    idx = jnp.arange(N - 1)
    src = jnp.concatenate([idx, idx + 1])
    dst = jnp.concatenate([idx + 1, idx])
    edge_index = jnp.stack([src, dst])
    adj = build_adj(edge_index, N)

    def glorot(k, shape):
        fan = shape[0] + shape[-1]
        return jax.random.normal(k, shape, jnp.float32) * jnp.sqrt(2.0 / fan)

    # conv1: GATConv(IN_CH -> HID, heads=HEADS, concat=True)
    w1 = glorot(ks[1], (IN_CH, HEADS * HID))
    as1 = glorot(ks[2], (HID, HEADS))
    ad1 = glorot(ks[3], (HID, HEADS))
    b1 = 0.1 * jax.random.normal(ks[7], (1, HEADS * HID), jnp.float32)
    # conv2: GATConv(HEADS*HID -> OUT_CH, heads=HEADS2, concat=False)
    w2 = glorot(ks[4], (HEADS * HID, HEADS2 * OUT_CH))
    as2 = glorot(ks[5], (OUT_CH, HEADS2))
    ad2 = glorot(ks[6], (OUT_CH, HEADS2))
    b2 = 0.1 * jax.random.normal(ks[8], (1, OUT_CH), jnp.float32)
    params = (w1, as1, ad1, b1, w2, as2, ad2, b2)

    out = jax.block_until_ready(netgat_forward(x, adj, params, ti=TI, tj=TJ))

    ref = netgat_reference(x, adj, params, HEADS, HID, HEADS2, OUT_CH)
    max_err = float(jnp.max(jnp.abs(out - ref)))
    assert out.shape == (N, OUT_CH)
    # bf16 MXU operands for attn@V (+ ones column denominator) and the EUP
    # approx reciprocal trade a little precision for speed; the pure-JAX f32
    # reference itself uses default reduced-precision TPU matmuls -> 2e-2.
    assert max_err < 2e-2, f"mismatch vs reference: {max_err}"

    print("KERNEL_OK")
</pallas_src>

<mosaic_0001>
module attributes {stable_mosaic.version = 11 : i64} {
  func.func @gat_layer_kernel(%arg0: i32, %arg1: i32, %arg2: memref<4x2xi32, #tpu.memory_space<smem>>, %arg3: memref<128x4xf32, #tpu.memory_space<vmem>>, %arg4: memref<4x256xf32, #tpu.memory_space<vmem>>, %arg5: memref<256x64xbf16, #tpu.memory_space<vmem>>, %arg6: memref<128x256xbf16, #tpu.memory_space<vmem>>, %arg7: memref<1x32xf32, #tpu.memory_space<vmem>>, %arg8: memref<128x32xf32, #tpu.memory_space<vmem>>, %arg9: memref<4x128x1xf32, #tpu.memory_space<vmem>>, %arg10: memref<4x128x16xf32, #tpu.memory_space<vmem>>) attributes {dimension_semantics = [#tpu.dimension_semantics<parallel>, #tpu.dimension_semantics<arbitrary>], iteration_bounds = array<i64: 4, 2>, scalar_prefetch = 1 : i64, scratch_operands = 2 : i64, tpu.core_type = #tpu.core_type<tc>, window_params = [{transform_indices = @transform_0, window_bounds = array<i64: 128, 4>}, {transform_indices = @transform_1, window_bounds = array<i64: 4, 256>}, {transform_indices = @transform_2, window_bounds = array<i64: 256, 64>}, {transform_indices = @transform_3, window_bounds = array<i64: 128, 256>}, {pipeline_mode = #tpu.pipeline_mode<synchronous>, transform_indices = @transform_4, window_bounds = array<i64: 1, 32>}, {transform_indices = @transform_5, window_bounds = array<i64: 128, 32>}]} {
    %c0_i32 = arith.constant 0 : i32
    %0 = arith.cmpi eq, %arg1, %c0_i32 : i32
    %1 = arith.extui %0 : i1 to i32
    %c0_i32_0 = arith.constant 0 : i32
    %2 = arith.cmpi ne, %1, %c0_i32_0 : i32
    scf.if %2 {
      %cst = arith.constant -1.000000e+30 : f32
      %12 = vector.broadcast %cst : f32 to vector<4x128x1xf32>
      %c0 = arith.constant 0 : index
      %c0_4 = arith.constant 0 : index
      %c0_5 = arith.constant 0 : index
      %13 = vector.load %arg9[%c0, %c0_4, %c0_5] : memref<4x128x1xf32, #tpu.memory_space<vmem>>, vector<4x128x1xf32>
      tpu.vector_store %arg9[%c0, %c0_4, %c0_5], %12 {strides = array<i32>} : memref<4x128x1xf32, #tpu.memory_space<vmem>>, vector<4x128x1xf32>,
      %cst_6 = arith.constant 0.000000e+00 : f32
      %14 = vector.broadcast %cst_6 : f32 to vector<4x128x16xf32>
      %c0_7 = arith.constant 0 : index
      %c0_8 = arith.constant 0 : index
      %c0_9 = arith.constant 0 : index
      %15 = vector.load %arg10[%c0_7, %c0_8, %c0_9] : memref<4x128x16xf32, #tpu.memory_space<vmem>>, vector<4x128x16xf32>
      tpu.vector_store %arg10[%c0_7, %c0_8, %c0_9], %14 {strides = array<i32>} : memref<4x128x16xf32, #tpu.memory_space<vmem>>, vector<4x128x16xf32>,
    } else {
    }
    %3 = arith.index_cast %arg0 : i32 to index
    %4 = arith.index_cast %arg1 : i32 to index
    %5 = memref.load %arg2[%3, %4] : memref<4x2xi32, #tpu.memory_space<smem>>
    %c0_i32_1 = arith.constant 0 : i32
    %6 = arith.cmpi sgt, %5, %c0_i32_1 : i32
    %7 = arith.extui %6 : i1 to i32
    %c0_i32_2 = arith.constant 0 : i32
    %8 = arith.cmpi ne, %7, %c0_i32_2 : i32
    scf.if %8 {
      %c0 = arith.constant 0 : index
      %c0_4 = arith.constant 0 : index
      %12 = vector.load %arg3[%c0, %c0_4] : memref<128x4xf32, #tpu.memory_space<vmem>>, vector<128x4xf32>
      %c0_5 = arith.constant 0 : index
      %c0_6 = arith.constant 0 : index
      %13 = vector.load %arg4[%c0_5, %c0_6] : memref<4x256xf32, #tpu.memory_space<vmem>>, vector<4x256xf32>
      %c0_7 = arith.constant 0 : index
      %c0_8 = arith.constant 0 : index
      %14 = vector.load %arg5[%c0_7, %c0_8] : memref<256x64xbf16, #tpu.memory_space<vmem>>, vector<256x64xbf16>
      %c0_9 = arith.constant 0 : index
      %c0_10 = arith.constant 0 : index
      %15 = vector.load %arg6[%c0_9, %c0_10] : memref<128x256xbf16, #tpu.memory_space<vmem>>, vector<128x256xbf16>
      %16 = arith.extf %15 : vector<128x256xbf16> to vector<128x256xf32>
      %17 = vector.extract_strided_slice %12 {offsets = [0, 0], sizes = [128, 1], strides = [1, 1]} : vector<128x4xf32> to vector<128x1xf32>
      %18 = vector.extract_strided_slice %13 {offsets = [0, 0], sizes = [1, 256], strides = [1, 1]} : vector<4x256xf32> to vector<1x256xf32>
      %19 = vector.broadcast %17 : vector<128x1xf32> to vector<128x256xf32>
      %20 = vector.broadcast %18 : vector<1x256xf32> to vector<128x256xf32>
      %21 = arith.addf %19, %20 : vector<128x256xf32>
      %cst = arith.constant 2.000000e-01 : f32
      %22 = vector.broadcast %cst : f32 to vector<128x256xf32>
      %23 = arith.mulf %22, %21 : vector<128x256xf32>
      %24 = arith.maximumf %21, %23 : vector<128x256xf32>
      %25 = arith.addf %24, %16 : vector<128x256xf32>
      %c0_11 = arith.constant 0 : index
      %c0_12 = arith.constant 0 : index
      %c0_13 = arith.constant 0 : index
      %26 = vector.load %arg9[%c0_11, %c0_12, %c0_13] : memref<4x128x1xf32, #tpu.memory_space<vmem>>, vector<1x128x1xf32>
      %27 = vector.shape_cast %26 : vector<1x128x1xf32> to vector<128x1xf32>
      %cst_14 = arith.constant dense<0xFF800000> : vector<128xf32>
      %28 = vector.multi_reduction <maximumf>, %25, %cst_14 [1] : vector<128x256xf32> to vector<128xf32>
      %29 = vector.shape_cast %28 : vector<128xf32> to vector<128x1xf32>
      %30 = arith.maximumf %27, %29 : vector<128x1xf32>
      %31 = arith.subf %27, %30 : vector<128x1xf32>
      %32 = math.exp %31 : vector<128x1xf32>
      %33 = vector.broadcast %30 : vector<128x1xf32> to vector<128x256xf32>
      %34 = arith.subf %25, %33 : vector<128x256xf32>
      %35 = math.exp %34 : vector<128x256xf32>
      %36 = arith.truncf %35 : vector<128x256xf32> to vector<128x256xbf16>
      %c0_15 = arith.constant 0 : index
      %c0_16 = arith.constant 0 : index
      %c0_17 = arith.constant 0 : index
      %37 = vector.load %arg10[%c0_15, %c0_16, %c0_17] : memref<4x128x16xf32, #tpu.memory_space<vmem>>, vector<1x128x16xf32>
      %38 = vector.shape_cast %37 : vector<1x128x16xf32> to vector<128x16xf32>
      %39 = vector.broadcast %32 : vector<128x1xf32> to vector<128x16xf32>
      %40 = arith.mulf %39, %38 : vector<128x16xf32>
      %41 = vector.extract_strided_slice %14 {offsets = [0, 0], sizes = [256, 16], strides = [1, 1]} : vector<256x64xbf16> to vector<256x16xbf16>
      %cst_18 = arith.constant dense<0.000000e+00> : vector<128x16xf32>
      %42 = tpu.matmul %36, %41, %cst_18 {dimension_numbers = #tpu.dot_dimension_numbers<[1], [0], [0], [1], [0, 0, 1, 1], [], []>} : vector<128x256xbf16>, vector<256x16xbf16>, vector<128x16xf32> -> vector<128x16xf32>
      %43 = arith.addf %40, %42 : vector<128x16xf32>
      %c0_19 = arith.constant 0 : index
      %c0_20 = arith.constant 0 : index
      %c0_21 = arith.constant 0 : index
      %44 = vector.load %arg10[%c0_19, %c0_20, %c0_21] : memref<4x128x16xf32, #tpu.memory_space<vmem>>, vector<1x128x16xf32>
      %45 = vector.shape_cast %44 : vector<1x128x16xf32> to vector<128x16xf32>
      %46 = vector.shape_cast %43 : vector<128x16xf32> to vector<1x128x16xf32>
      tpu.vector_store %arg10[%c0_19, %c0_20, %c0_21], %46 {strides = array<i32>} : memref<4x128x16xf32, #tpu.memory_space<vmem>>, vector<1x128x16xf32>,
      %c0_22 = arith.constant 0 : index
      %c0_23 = arith.constant 0 : index
      %c0_24 = arith.constant 0 : index
      %47 = vector.load %arg9[%c0_22, %c0_23, %c0_24] : memref<4x128x1xf32, #tpu.memory_space<vmem>>, vector<1x128x1xf32>
      %48 = vector.shape_cast %47 : vector<1x128x1xf32> to vector<128x1xf32>
      %49 = vector.shape_cast %30 : vector<128x1xf32> to vector<1x128x1xf32>
      tpu.vector_store %arg9[%c0_22, %c0_23, %c0_24], %49 {strides = array<i32>} : memref<4x128x1xf32, #tpu.memory_space<vmem>>, vector<1x128x1xf32>,
      %50 = vector.extract_strided_slice %12 {offsets = [0, 1], sizes = [128, 1], strides = [1, 1]} : vector<128x4xf32> to vector<128x1xf32>
      %51 = vector.extract_strided_slice %13 {offsets = [1, 0], sizes = [1, 256], strides = [1, 1]} : vector<4x256xf32> to vector<1x256xf32>
      %52 = vector.broadcast %50 : vector<128x1xf32> to vector<128x256xf32>
      %53 = vector.broadcast %51 : vector<1x256xf32> to vector<128x256xf32>
      %54 = arith.addf %52, %53 : vector<128x256xf32>
      %cst_25 = arith.constant 2.000000e-01 : f32
      %55 = vector.broadcast %cst_25 : f32 to vector<128x256xf32>
      %56 = arith.mulf %55, %54 : vector<128x256xf32>
      %57 = arith.maximumf %54, %56 : vector<128x256xf32>
      %58 = arith.addf %57, %16 : vector<128x256xf32>
      %c1 = arith.constant 1 : index
      %c0_26 = arith.constant 0 : index
      %c0_27 = arith.constant 0 : index
      %59 = vector.load %arg9[%c1, %c0_26, %c0_27] : memref<4x128x1xf32, #tpu.memory_space<vmem>>, vector<1x128x1xf32>
      %60 = vector.shape_cast %59 : vector<1x128x1xf32> to vector<128x1xf32>
      %cst_28 = arith.constant dense<0xFF800000> : vector<128xf32>
      %61 = vector.multi_reduction <maximumf>, %58, %cst_28 [1] : vector<128x256xf32> to vector<128xf32>
      %62 = vector.shape_cast %61 : vector<128xf32> to vector<128x1xf32>
      %63 = arith.maximumf %60, %62 : vector<128x1xf32>
      %64 = arith.subf %60, %63 : vector<128x1xf32>
      %65 = math.exp %64 : vector<128x1xf32>
      %66 = vector.broadcast %63 : vector<128x1xf32> to vector<128x256xf32>
      %67 = arith.subf %58, %66 : vector<128x256xf32>
      %68 = math.exp %67 : vector<128x256xf32>
      %69 = arith.truncf %68 : vector<128x256xf32> to vector<128x256xbf16>
      %c1_29 = arith.constant 1 : index
      %c0_30 = arith.constant 0 : index
      %c0_31 = arith.constant 0 : index
      %70 = vector.load %arg10[%c1_29, %c0_30, %c0_31] : memref<4x128x16xf32, #tpu.memory_space<vmem>>, vector<1x128x16xf32>
      %71 = vector.shape_cast %70 : vector<1x128x16xf32> to vector<128x16xf32>
      %72 = vector.broadcast %65 : vector<128x1xf32> to vector<128x16xf32>
      %73 = arith.mulf %72, %71 : vector<128x16xf32>
      %74 = vector.extract_strided_slice %14 {offsets = [0, 16], sizes = [256, 16], strides = [1, 1]} : vector<256x64xbf16> to vector<256x16xbf16>
      %cst_32 = arith.constant dense<0.000000e+00> : vector<128x16xf32>
      %75 = tpu.matmul %69, %74, %cst_32 {dimension_numbers = #tpu.dot_dimension_numbers<[1], [0], [0], [1], [0, 0, 1, 1], [], []>} : vector<128x256xbf16>, vector<256x16xbf16>, vector<128x16xf32> -> vector<128x16xf32>
      %76 = arith.addf %73, %75 : vector<128x16xf32>
      %c1_33 = arith.constant 1 : index
      %c0_34 = arith.constant 0 : index
      %c0_35 = arith.constant 0 : index
      %77 = vector.load %arg10[%c1_33, %c0_34, %c0_35] : memref<4x128x16xf32, #tpu.memory_space<vmem>>, vector<1x128x16xf32>
      %78 = vector.shape_cast %77 : vector<1x128x16xf32> to vector<128x16xf32>
      %79 = vector.shape_cast %76 : vector<128x16xf32> to vector<1x128x16xf32>
      tpu.vector_store %arg10[%c1_33, %c0_34, %c0_35], %79 {strides = array<i32>} : memref<4x128x16xf32, #tpu.memory_space<vmem>>, vector<1x128x16xf32>,
      %c1_36 = arith.constant 1 : index
      %c0_37 = arith.constant 0 : index
      %c0_38 = arith.constant 0 : index
      %80 = vector.load %arg9[%c1_36, %c0_37, %c0_38] : memref<4x128x1xf32, #tpu.memory_space<vmem>>, vector<1x128x1xf32>
      %81 = vector.shape_cast %80 : vector<1x128x1xf32> to vector<128x1xf32>
      %82 = vector.shape_cast %63 : vector<128x1xf32> to vector<1x128x1xf32>
      tpu.vector_store %arg9[%c1_36, %c0_37, %c0_38], %82 {strides = array<i32>} : memref<4x128x1xf32, #tpu.memory_space<vmem>>, vector<1x128x1xf32>,
      %83 = vector.extract_strided_slice %12 {offsets = [0, 2], sizes = [128, 1], strides = [1, 1]} : vector<128x4xf32> to vector<128x1xf32>
      %84 = vector.extract_strided_slice %13 {offsets = [2, 0], sizes = [1, 256], strides = [1, 1]} : vector<4x256xf32> to vector<1x256xf32>
      %85 = vector.broadcast %83 : vector<128x1xf32> to vector<128x256xf32>
      %86 = vector.broadcast %84 : vector<1x256xf32> to vector<128x256xf32>
      %87 = arith.addf %85, %86 : vector<128x256xf32>
      %cst_39 = arith.constant 2.000000e-01 : f32
      %88 = vector.broadcast %cst_39 : f32 to vector<128x256xf32>
      %89 = arith.mulf %88, %87 : vector<128x256xf32>
      %90 = arith.maximumf %87, %89 : vector<128x256xf32>
      %91 = arith.addf %90, %16 : vector<128x256xf32>
      %c2 = arith.constant 2 : index
      %c0_40 = arith.constant 0 : index
      %c0_41 = arith.constant 0 : index
      %92 = vector.load %arg9[%c2, %c0_40, %c0_41] : memref<4x128x1xf32, #tpu.memory_space<vmem>>, vector<1x128x1xf32>
      %93 = vector.shape_cast %92 : vector<1x128x1xf32> to vector<128x1xf32>
      %cst_42 = arith.constant dense<0xFF800000> : vector<128xf32>
      %94 = vector.multi_reduction <maximumf>, %91, %cst_42 [1] : vector<128x256xf32> to vector<128xf32>
      %95 = vector.shape_cast %94 : vector<128xf32> to vector<128x1xf32>
      %96 = arith.maximumf %93, %95 : vector<128x1xf32>
      %97 = arith.subf %93, %96 : vector<128x1xf32>
      %98 = math.exp %97 : vector<128x1xf32>
      %99 = vector.broadcast %96 : vector<128x1xf32> to vector<128x256xf32>
      %100 = arith.subf %91, %99 : vector<128x256xf32>
      %101 = math.exp %100 : vector<128x256xf32>
      %102 = arith.truncf %101 : vector<128x256xf32> to vector<128x256xbf16>
      %c2_43 = arith.constant 2 : index
      %c0_44 = arith.constant 0 : index
      %c0_45 = arith.constant 0 : index
      %103 = vector.load %arg10[%c2_43, %c0_44, %c0_45] : memref<4x128x16xf32, #tpu.memory_space<vmem>>, vector<1x128x16xf32>
      %104 = vector.shape_cast %103 : vector<1x128x16xf32> to vector<128x16xf32>
      %105 = vector.broadcast %98 : vector<128x1xf32> to vector<128x16xf32>
      %106 = arith.mulf %105, %104 : vector<128x16xf32>
      %107 = vector.extract_strided_slice %14 {offsets = [0, 32], sizes = [256, 16], strides = [1, 1]} : vector<256x64xbf16> to vector<256x16xbf16>
      %cst_46 = arith.constant dense<0.000000e+00> : vector<128x16xf32>
      %108 = tpu.matmul %102, %107, %cst_46 {dimension_numbers = #tpu.dot_dimension_numbers<[1], [0], [0], [1], [0, 0, 1, 1], [], []>} : vector<128x256xbf16>, vector<256x16xbf16>, vector<128x16xf32> -> vector<128x16xf32>
      %109 = arith.addf %106, %108 : vector<128x16xf32>
      %c2_47 = arith.constant 2 : index
      %c0_48 = arith.constant 0 : index
      %c0_49 = arith.constant 0 : index
      %110 = vector.load %arg10[%c2_47, %c0_48, %c0_49] : memref<4x128x16xf32, #tpu.memory_space<vmem>>, vector<1x128x16xf32>
      %111 = vector.shape_cast %110 : vector<1x128x16xf32> to vector<128x16xf32>
      %112 = vector.shape_cast %109 : vector<128x16xf32> to vector<1x128x16xf32>
      tpu.vector_store %arg10[%c2_47, %c0_48, %c0_49], %112 {strides = array<i32>} : memref<4x128x16xf32, #tpu.memory_space<vmem>>, vector<1x128x16xf32>,
      %c2_50 = arith.constant 2 : index
      %c0_51 = arith.constant 0 : index
      %c0_52 = arith.constant 0 : index
      %113 = vector.load %arg9[%c2_50, %c0_51, %c0_52] : memref<4x128x1xf32, #tpu.memory_space<vmem>>, vector<1x128x1xf32>
      %114 = vector.shape_cast %113 : vector<1x128x1xf32> to vector<128x1xf32>
      %115 = vector.shape_cast %96 : vector<128x1xf32> to vector<1x128x1xf32>
      tpu.vector_store %arg9[%c2_50, %c0_51, %c0_52], %115 {strides = array<i32>} : memref<4x128x1xf32, #tpu.memory_space<vmem>>, vector<1x128x1xf32>,
      %116 = vector.extract_strided_slice %12 {offsets = [0, 3], sizes = [128, 1], strides = [1, 1]} : vector<128x4xf32> to vector<128x1xf32>
      %117 = vector.extract_strided_slice %13 {offsets = [3, 0], sizes = [1, 256], strides = [1, 1]} : vector<4x256xf32> to vector<1x256xf32>
      %118 = vector.broadcast %116 : vector<128x1xf32> to vector<128x256xf32>
      %119 = vector.broadcast %117 : vector<1x256xf32> to vector<128x256xf32>
      %120 = arith.addf %118, %119 : vector<128x256xf32>
      %cst_53 = arith.constant 2.000000e-01 : f32
      %121 = vector.broadcast %cst_53 : f32 to vector<128x256xf32>
      %122 = arith.mulf %121, %120 : vector<128x256xf32>
      %123 = arith.maximumf %120, %122 : vector<128x256xf32>
      %124 = arith.addf %123, %16 : vector<128x256xf32>
      %c3 = arith.constant 3 : index
      %c0_54 = arith.constant 0 : index
      %c0_55 = arith.constant 0 : index
      %125 = vector.load %arg9[%c3, %c0_54, %c0_55] : memref<4x128x1xf32, #tpu.memory_space<vmem>>, vector<1x128x1xf32>
      %126 = vector.shape_cast %125 : vector<1x128x1xf32> to vector<128x1xf32>
      %cst_56 = arith.constant dense<0xFF800000> : vector<128xf32>
      %127 = vector.multi_reduction <maximumf>, %124, %cst_56 [1] : vector<128x256xf32> to vector<128xf32>
      %128 = vector.shape_cast %127 : vector<128xf32> to vector<128x1xf32>
      %129 = arith.maximumf %126, %128 : vector<128x1xf32>
      %130 = arith.subf %126, %129 : vector<128x1xf32>
      %131 = math.exp %130 : vector<128x1xf32>
      %132 = vector.broadcast %129 : vector<128x1xf32> to vector<128x256xf32>
      %133 = arith.subf %124, %132 : vector<128x256xf32>
      %134 = math.exp %133 : vector<128x256xf32>
      %135 = arith.truncf %134 : vector<128x256xf32> to vector<128x256xbf16>
      %c3_57 = arith.constant 3 : index
      %c0_58 = arith.constant 0 : index
      %c0_59 = arith.constant 0 : index
      %136 = vector.load %arg10[%c3_57, %c0_58, %c0_59] : memref<4x128x16xf32, #tpu.memory_space<vmem>>, vector<1x128x16xf32>
      %137 = vector.shape_cast %136 : vector<1x128x16xf32> to vector<128x16xf32>
      %138 = vector.broadcast %131 : vector<128x1xf32> to vector<128x16xf32>
      %139 = arith.mulf %138, %137 : vector<128x16xf32>
      %140 = vector.extract_strided_slice %14 {offsets = [0, 48], sizes = [256, 16], strides = [1, 1]} : vector<256x64xbf16> to vector<256x16xbf16>
      %cst_60 = arith.constant dense<0.000000e+00> : vector<128x16xf32>
      %141 = tpu.matmul %135, %140, %cst_60 {dimension_numbers = #tpu.dot_dimension_numbers<[1], [0], [0], [1], [0, 0, 1, 1], [], []>} : vector<128x256xbf16>, vector<256x16xbf16>, vector<128x16xf32> -> vector<128x16xf32>
      %142 = arith.addf %139, %141 : vector<128x16xf32>
      %c3_61 = arith.constant 3 : index
      %c0_62 = arith.constant 0 : index
      %c0_63 = arith.constant 0 : index
      %143 = vector.load %arg10[%c3_61, %c0_62, %c0_63] : memref<4x128x16xf32, #tpu.memory_space<vmem>>, vector<1x128x16xf32>
      %144 = vector.shape_cast %143 : vector<1x128x16xf32> to vector<128x16xf32>
      %145 = vector.shape_cast %142 : vector<128x16xf32> to vector<1x128x16xf32>
      tpu.vector_store %arg10[%c3_61, %c0_62, %c0_63], %145 {strides = array<i32>} : memref<4x128x16xf32, #tpu.memory_space<vmem>>, vector<1x128x16xf32>,
      %c3_64 = arith.constant 3 : index
      %c0_65 = arith.constant 0 : index
      %c0_66 = arith.constant 0 : index
      %146 = vector.load %arg9[%c3_64, %c0_65, %c0_66] : memref<4x128x1xf32, #tpu.memory_space<vmem>>, vector<1x128x1xf32>
      %147 = vector.shape_cast %146 : vector<1x128x1xf32> to vector<128x1xf32>
      %148 = vector.shape_cast %129 : vector<128x1xf32> to vector<1x128x1xf32>
      tpu.vector_store %arg9[%c3_64, %c0_65, %c0_66], %148 {strides = array<i32>} : memref<4x128x1xf32, #tpu.memory_space<vmem>>, vector<1x128x1xf32>,
    } else {
    }
    %c1_i32 = arith.constant 1 : i32
    %9 = arith.cmpi eq, %arg1, %c1_i32 : i32
    %10 = arith.extui %9 : i1 to i32
    %c0_i32_3 = arith.constant 0 : i32
    %11 = arith.cmpi ne, %10, %c0_i32_3 : i32
    scf.if %11 {
      %c0 = arith.constant 0 : index
      %c0_4 = arith.constant 0 : index
      %c0_5 = arith.constant 0 : index
      %12 = vector.load %arg10[%c0, %c0_4, %c0_5] : memref<4x128x16xf32, #tpu.memory_space<vmem>>, vector<1x128x16xf32>
      %13 = vector.shape_cast %12 : vector<1x128x16xf32> to vector<128x16xf32>
      %14 = vector.extract_strided_slice %13 {offsets = [0, 8], sizes = [128, 1], strides = [1, 1]} : vector<128x16xf32> to vector<128x1xf32>
      %15 = tpu.reciprocal %14 {approx = true} : vector<128x1xf32> -> vector<128x1xf32>
      %16 = vector.extract_strided_slice %13 {offsets = [0, 0], sizes = [128, 8], strides = [1, 1]} : vector<128x16xf32> to vector<128x8xf32>
      %17 = vector.broadcast %15 : vector<128x1xf32> to vector<128x8xf32>
      %18 = arith.mulf %16, %17 : vector<128x8xf32>
      %c1 = arith.constant 1 : index
      %c0_6 = arith.constant 0 : index
      %c0_7 = arith.constant 0 : index
      %19 = vector.load %arg10[%c1, %c0_6, %c0_7] : memref<4x128x16xf32, #tpu.memory_space<vmem>>, vector<1x128x16xf32>
      %20 = vector.shape_cast %19 : vector<1x128x16xf32> to vector<128x16xf32>
      %21 = vector.extract_strided_slice %20 {offsets = [0, 8], sizes = [128, 1], strides = [1, 1]} : vector<128x16xf32> to vector<128x1xf32>
      %22 = tpu.reciprocal %21 {approx = true} : vector<128x1xf32> -> vector<128x1xf32>
      %23 = vector.extract_strided_slice %20 {offsets = [0, 0], sizes = [128, 8], strides = [1, 1]} : vector<128x16xf32> to vector<128x8xf32>
      %24 = vector.broadcast %22 : vector<128x1xf32> to vector<128x8xf32>
      %25 = arith.mulf %23, %24 : vector<128x8xf32>
      %c2 = arith.constant 2 : index
      %c0_8 = arith.constant 0 : index
      %c0_9 = arith.constant 0 : index
      %26 = vector.load %arg10[%c2, %c0_8, %c0_9] : memref<4x128x16xf32, #tpu.memory_space<vmem>>, vector<1x128x16xf32>
      %27 = vector.shape_cast %26 : vector<1x128x16xf32> to vector<128x16xf32>
      %28 = vector.extract_strided_slice %27 {offsets = [0, 8], sizes = [128, 1], strides = [1, 1]} : vector<128x16xf32> to vector<128x1xf32>
      %29 = tpu.reciprocal %28 {approx = true} : vector<128x1xf32> -> vector<128x1xf32>
      %30 = vector.extract_strided_slice %27 {offsets = [0, 0], sizes = [128, 8], strides = [1, 1]} : vector<128x16xf32> to vector<128x8xf32>
      %31 = vector.broadcast %29 : vector<128x1xf32> to vector<128x8xf32>
      %32 = arith.mulf %30, %31 : vector<128x8xf32>
      %c3 = arith.constant 3 : index
      %c0_10 = arith.constant 0 : index
      %c0_11 = arith.constant 0 : index
      %33 = vector.load %arg10[%c3, %c0_10, %c0_11] : memref<4x128x16xf32, #tpu.memory_space<vmem>>, vector<1x128x16xf32>
      %34 = vector.shape_cast %33 : vector<1x128x16xf32> to vector<128x16xf32>
      %35 = vector.extract_strided_slice %34 {offsets = [0, 8], sizes = [128, 1], strides = [1, 1]} : vector<128x16xf32> to vector<128x1xf32>
      %36 = tpu.reciprocal %35 {approx = true} : vector<128x1xf32> -> vector<128x1xf32>
      %37 = vector.extract_strided_slice %34 {offsets = [0, 0], sizes = [128, 8], strides = [1, 1]} : vector<128x16xf32> to vector<128x8xf32>
      %38 = vector.broadcast %36 : vector<128x1xf32> to vector<128x8xf32>
      %39 = arith.mulf %37, %38 : vector<128x8xf32>
      %40 = tpu.concatenate %18, %25, %32, %39 in 1 : vector<128x8xf32>, vector<128x8xf32>, vector<128x8xf32>, vector<128x8xf32> -> vector<128x32xf32>
      %c0_12 = arith.constant 0 : index
      %c0_13 = arith.constant 0 : index
      %41 = vector.load %arg7[%c0_12, %c0_13] : memref<1x32xf32, #tpu.memory_space<vmem>>, vector<1x32xf32>
      %42 = vector.broadcast %41 : vector<1x32xf32> to vector<128x32xf32>
      %43 = arith.addf %40, %42 : vector<128x32xf32>
      %cst = arith.constant 0.000000e+00 : f32
      %44 = vector.broadcast %cst : f32 to vector<128x32xf32>
      %45 = arith.cmpf ogt, %43, %44 : vector<128x32xf32>
      %cst_14 = arith.constant 0.000000e+00 : f32
      %46 = vector.broadcast %cst_14 : f32 to vector<128x32xf32>
      %47 = arith.minimumf %43, %46 : vector<128x32xf32>
      %48 = math.exp %47 : vector<128x32xf32>
      %cst_15 = arith.constant 1.000000e+00 : f32
      %49 = vector.broadcast %cst_15 : f32 to vector<128x32xf32>
      %50 = arith.subf %48, %49 : vector<128x32xf32>
      %51 = arith.select %45, %43, %50 : vector<128x32xi1>, vector<128x32xf32>
      %c0_16 = arith.constant 0 : index
      %c0_17 = arith.constant 0 : index
      %52 = vector.load %arg8[%c0_16, %c0_17] : memref<128x32xf32, #tpu.memory_space<vmem>>, vector<128x32xf32>
      tpu.vector_store %arg8[%c0_16, %c0_17], %51 {strides = array<i32>} : memref<128x32xf32, #tpu.memory_space<vmem>>, vector<128x32xf32>,
    } else {
    }
    return
  }
  func.func @transform_0(%arg0: i32, %arg1: i32, %arg2: memref<4x2xi32, #tpu.memory_space<smem>>) -> (i32, i32) {
    %c0_i32 = arith.constant 0 : i32
    %c0_i32_0 = arith.constant 0 : i32
    return %arg0, %c0_i32 : i32, i32
  }
  func.func @transform_1(%arg0: i32, %arg1: i32, %arg2: memref<4x2xi32, #tpu.memory_space<smem>>) -> (i32, i32) {
    %0 = arith.index_cast %arg0 : i32 to index
    %1 = arith.index_cast %arg1 : i32 to index
    %2 = memref.load %arg2[%0, %1] : memref<4x2xi32, #tpu.memory_space<smem>>
    %c0_i32 = arith.constant 0 : i32
    %3 = arith.cmpi sgt, %2, %c0_i32 : i32
    %c0_i32_0 = arith.constant 0 : i32
    %4 = arith.select %3, %arg1, %c0_i32_0 : i32
    %c0_i32_1 = arith.constant 0 : i32
    %c0_i32_2 = arith.constant 0 : i32
    return %c0_i32_1, %4 : i32, i32
  }
  func.func @transform_2(%arg0: i32, %arg1: i32, %arg2: memref<4x2xi32, #tpu.memory_space<smem>>) -> (i32, i32) {
    %0 = arith.index_cast %arg0 : i32 to index
    %1 = arith.index_cast %arg1 : i32 to index
    %2 = memref.load %arg2[%0, %1] : memref<4x2xi32, #tpu.memory_space<smem>>
    %c0_i32 = arith.constant 0 : i32
    %3 = arith.cmpi sgt, %2, %c0_i32 : i32
    %c0_i32_0 = arith.constant 0 : i32
    %4 = arith.select %3, %arg1, %c0_i32_0 : i32
    %c0_i32_1 = arith.constant 0 : i32
    %c0_i32_2 = arith.constant 0 : i32
    return %4, %c0_i32_1 : i32, i32
  }
  func.func @transform_3(%arg0: i32, %arg1: i32, %arg2: memref<4x2xi32, #tpu.memory_space<smem>>) -> (i32, i32) {
    %0 = arith.index_cast %arg0 : i32 to index
    %1 = arith.index_cast %arg1 : i32 to index
    %2 = memref.load %arg2[%0, %1] : memref<4x2xi32, #tpu.memory_space<smem>>
    %c0_i32 = arith.constant 0 : i32
    %3 = arith.cmpi sgt, %2, %c0_i32 : i32
    %c0_i32_0 = arith.constant 0 : i32
    %4 = arith.select %3, %arg1, %c0_i32_0 : i32
    %c0_i32_1 = arith.constant 0 : i32
    return %arg0, %4 : i32, i32
  }
  func.func @transform_4(%arg0: i32, %arg1: i32, %arg2: memref<4x2xi32, #tpu.memory_space<smem>>) -> (i32, i32) {
    %c0_i32 = arith.constant 0 : i32
    %c0_i32_0 = arith.constant 0 : i32
    %c0_i32_1 = arith.constant 0 : i32
    return %c0_i32, %c0_i32_0 : i32, i32
  }
  func.func @transform_5(%arg0: i32, %arg1: i32, %arg2: memref<4x2xi32, #tpu.memory_space<smem>>) -> (i32, i32) {
    %c0_i32 = arith.constant 0 : i32
    %c0_i32_0 = arith.constant 0 : i32
    return %arg0, %c0_i32 : i32, i32
  }
}

</mosaic_0001>

<llo_original>
// kernel: tpu_custom_call.1
$region0: #{tpu_custom_call.1}
  #allocation0 [shape = 'u32[]', space=smem, size = 0x4, offset = 0x4, fixed_abs, tag = 'smem constant byte address 0x4 - core index']
  #allocation1 [shape = 'u32[144,128]{1,0:T(1,128)}', space=vmem, size = 0x12000, scoped, tag = 'internal scratch']
  #allocation2 [shape = 'f32[4,128,1]{2,1,0:T(8,128)}', space=vmem, size = 0x40000, scoped, tag = 'scratch operand']
  #allocation3 [shape = 'f32[4,128,16]{2,1,0:T(8,128)}', space=vmem, size = 0x40000, scoped, tag = 'scratch operand']
  #allocation4 [shape = 's32[1]{0}', space=sflag, size = 0x4, scoped, tag = 'scoped memory for tpu_custom_call.1']
  #allocation5 [shape = 'u8[2048]{0}', space=smem, size = 0x800, scoped, tag = 'prefetched SMEM operand 0']
  %s0 = inlined_call_operand.vmem [shape: s32[4,2], index: 0, kind: input, shape index: {}]
  %s1 = inlined_call_operand.vmem [shape: f32[512,4], index: 1, kind: input, shape index: {}]
  %s2 = inlined_call_operand.vmem [shape: f32[4,512], index: 2, kind: input, shape index: {}]
  %s3 = inlined_call_operand.vmem [shape: bf16[512,64], index: 3, kind: input, shape index: {}]
  %s4 = inlined_call_operand.hbm [shape: bf16[512,512], index: 4, kind: input, shape index: {}]
  %s5 = inlined_call_operand.vmem [shape: f32[1,32], index: 5, kind: input, shape index: {}]
  %s6 = inlined_call_operand.vmem [shape: f32[512,32], index: 6, kind: output, shape index: {}]
  %s7 = sld [smem:[#allocation0]]
  $region69: #{tpu_custom_call.1} parent=0
    _
  %s9 = ssub.s32 1, %s7
  %s10 = scalar_select 0, %s9, %s7
  %s11 = sshll.u32 %s0, 4
  %s12 = int_to_ptr.vmem [resolvable:$true] %s11
  %14 = dma.vmem_to_smem %s12, 64, [#allocation5], [#allocation4]
  %15 = dma.done [#allocation4], 64
  %16 = sfence
  $region1: #{tpu_custom_call.1} parent=0
    #allocation6 [shape = 'u8[131072]{0}', space=vmem, size = 0x20000, scoped, tag = 'input window, operand 4']
    #allocation7 [shape = 's32[2]{0}', space=sflag, size = 0x8, scoped, tag = 'scoped memory for tpu_custom_call.1']
    %17 = vsyncpa [#allocation7], 0
    %s18 = scalar_lea.sflag [#allocation7], 1
    %19 = vsyncpa %s18, 0
    loop: start=0, step=1, limit=10
    $region2: #{tpu_custom_call.1} parent=1 // loop_pre_header
      _
    $region3: #{tpu_custom_call.1} parent=1 // loop_header
      %s21 = sphi 0, %s25
      %p22 = scmp.ge.s32.totalorder %s21, 10
      %s28 = sphi 0, %s40
      %s29 = sphi 0, %s36
      %s30 = sphi 0, %s28
      %s31 = sphi 0, %s29
      %s32 = sphi 0, %s30
      %s33 = sphi 0, %s31
      %s43 = sphi 0, %s45
      %s46 = sphi 0, %s43
      %s47 = sphi 0, %s46
      %s63 = sphi 0, %s47
      %s89 = sphi 0, %s91
      %s92 = sphi 0, %s89
      %s93 = sphi 0, %s92
      %s109 = sphi 0, %s93
      %s135 = sphi 0, %s137
      %s138 = sphi 0, %s135
      %s139 = sphi 0, %s138
      %s155 = sphi 0, %s139
      %s183 = sphi 0, %s185
      %s186 = sphi 0, %s183
      %s187 = sphi 0, %s186
      %s203 = sphi 0, %s187
      %s207 = sphi 0, %s207
      %s209 = sphi 0, %s207
      %s210 = sphi 0, %s209
      %s224 = sphi 0, %s210
      %s230 = sphi 0, %s232
      %s233 = sphi 0, %s230
      %s234 = sphi 0, %s233
      %s250 = sphi 0, %s234
    $region4: #{tpu_custom_call.1} parent=1 // loop_header_branch
      %24 = sbr.rel (%p22) target = $region8
    $region5: #{tpu_custom_call.1} parent=1 // loop_body
      %s26 = ssub.s32 %s21, 1
      %s27 = ssub.s32 %s21, 2
      %s34 = sadd.s32 1, %s29
      %p35 = scmp.ge.s32.totalorder %s34, 2
      %s36 = scalar_select %p35, 0, %s34
      %s37 = sadd.s32 1, %s28
      %s38 = scalar_select %p35, %s37, %s28
      %p39 = scmp.ge.s32.totalorder %s38, 4
      %s40 = scalar_select %p39, 0, %s38
      %s41 = ssub.s32 %s28, %s40
      %p42 = scmp.eq.s32.totalorder %s41, 0
      %s44 = sadd.s32 %s43, 1
      %s45 = scalar_select %p42, %s43, %s44
      %p48 = pneg %p42
      %p49 = scmp.eq.s32.totalorder %s21, 7
      %p50 = por %p48, %p49
      %p51 = scmp.ne.s32.totalorder %s43, %s46
      %p52 = scmp.eq.s32.totalorder %s21, 0
      %p53 = por %p51, %p52
      %p54 = scmp.ne.s32.totalorder %s43, %s46
      %p55 = scmp.eq.s32.totalorder %s26, 7
      %p56 = por %p54, %p55
      %p57 = scmp.ne.s32.totalorder %s46, %s47
      %p58 = scmp.eq.s32.totalorder %s26, 0
      %p59 = por %p57, %p58
      %p60 = scmp.ne.s32.totalorder %s46, %s47
      %p61 = scmp.eq.s32.totalorder %s27, 7
      %p62 = por %p60, %p61
      %p64 = scmp.ne.s32.totalorder %s47, %s63
      %p65 = scmp.eq.s32.totalorder %s27, 0
      %p66 = por %p64, %p65
      %s67 = sshra.s32 %s29, 7
      %s68 = sand.u32 %s29, 127
      %s69 = sadd.s32 %s67, %s28
      %s70 = smul.u32 %s69, 128
      %s71 = sshra.s32 %s29, 7
      %s72 = sand.u32 %s29, 127
      %s73 = sadd.s32 %s70, %s72
      %s74 = sld [smem:[#allocation5 + %s73]]
      %p75 = scmp.gt.s32.totalorder %s74, 0
      %s76 = scalar_select %p75, %s29, 0
      %s77 = sshra.s32 %s36, 7
      %s78 = sand.u32 %s36, 127
      %s79 = sadd.s32 %s77, %s40
      %s80 = smul.u32 %s79, 128
      %s81 = sshra.s32 %s36, 7
      %s82 = sand.u32 %s36, 127
      %s83 = sadd.s32 %s80, %s82
      %s84 = sld [smem:[#allocation5 + %s83]]
      %p85 = scmp.gt.s32.totalorder %s84, 0
      %s86 = scalar_select %p85, %s36, 0
      %s87 = ssub.s32 %s76, %s86
      %p88 = scmp.eq.s32.totalorder %s87, 0
      %s90 = sadd.s32 %s89, 1
      %s91 = scalar_select %p88, %s89, %s90
      %p94 = pneg %p88
      %p95 = scmp.eq.s32.totalorder %s21, 7
      %p96 = por %p94, %p95
      %p97 = scmp.ne.s32.totalorder %s89, %s92
      %p98 = scmp.eq.s32.totalorder %s21, 0
      %p99 = por %p97, %p98
      %p100 = scmp.ne.s32.totalorder %s89, %s92
      %p101 = scmp.eq.s32.totalorder %s26, 7
      %p102 = por %p100, %p101
      %p103 = scmp.ne.s32.totalorder %s92, %s93
      %p104 = scmp.eq.s32.totalorder %s26, 0
      %p105 = por %p103, %p104
      %p106 = scmp.ne.s32.totalorder %s92, %s93
      %p107 = scmp.eq.s32.totalorder %s27, 7
      %p108 = por %p106, %p107
      %p110 = scmp.ne.s32.totalorder %s93, %s109
      %p111 = scmp.eq.s32.totalorder %s27, 0
      %p112 = por %p110, %p111
      %s113 = sshra.s32 %s29, 7
      %s114 = sand.u32 %s29, 127
      %s115 = sadd.s32 %s113, %s28
      %s116 = smul.u32 %s115, 128
      %s117 = sshra.s32 %s29, 7
      %s118 = sand.u32 %s29, 127
      %s119 = sadd.s32 %s116, %s118
      %s120 = sld [smem:[#allocation5 + %s119]]
      %p121 = scmp.gt.s32.totalorder %s120, 0
      %s122 = scalar_select %p121, %s29, 0
      %s123 = sshra.s32 %s36, 7
      %s124 = sand.u32 %s36, 127
      %s125 = sadd.s32 %s123, %s40
      %s126 = smul.u32 %s125, 128
      %s127 = sshra.s32 %s36, 7
      %s128 = sand.u32 %s36, 127
      %s129 = sadd.s32 %s126, %s128
      %s130 = sld [smem:[#allocation5 + %s129]]
      %p131 = scmp.gt.s32.totalorder %s130, 0
      %s132 = scalar_select %p131, %s36, 0
      %s133 = ssub.s32 %s122, %s132
      %p134 = scmp.eq.s32.totalorder %s133, 0
      %s136 = sadd.s32 %s135, 1
      %s137 = scalar_select %p134, %s135, %s136
      %p140 = pneg %p134
      %p141 = scmp.eq.s32.totalorder %s21, 7
      %p142 = por %p140, %p141
      %p143 = scmp.ne.s32.totalorder %s135, %s138
      %p144 = scmp.eq.s32.totalorder %s21, 0
      %p145 = por %p143, %p144
      %p146 = scmp.ne.s32.totalorder %s135, %s138
      %p147 = scmp.eq.s32.totalorder %s26, 7
      %p148 = por %p146, %p147
      %p149 = scmp.ne.s32.totalorder %s138, %s139
      %p150 = scmp.eq.s32.totalorder %s26, 0
      %p151 = por %p149, %p150
      %p152 = scmp.ne.s32.totalorder %s138, %s139
      %p153 = scmp.eq.s32.totalorder %s27, 7
      %p154 = por %p152, %p153
      %p156 = scmp.ne.s32.totalorder %s139, %s155
      %p157 = scmp.eq.s32.totalorder %s27, 0
      %p158 = por %p156, %p157
      %s159 = sshra.s32 %s29, 7
      %s160 = sand.u32 %s29, 127
      %s161 = sadd.s32 %s159, %s28
      %s162 = smul.u32 %s161, 128
      %s163 = sshra.s32 %s29, 7
      %s164 = sand.u32 %s29, 127
      %s165 = sadd.s32 %s162, %s164
      %s166 = sld [smem:[#allocation5 + %s165]]
      %p167 = scmp.gt.s32.totalorder %s166, 0
      %s168 = scalar_select %p167, %s29, 0
      %s169 = sshra.s32 %s36, 7
      %s170 = sand.u32 %s36, 127
      %s171 = sadd.s32 %s169, %s40
      %s172 = smul.u32 %s171, 128
      %s173 = sshra.s32 %s36, 7
      %s174 = sand.u32 %s36, 127
      %s175 = sadd.s32 %s172, %s174
      %s176 = sld [smem:[#allocation5 + %s175]]
      %p177 = scmp.gt.s32.totalorder %s176, 0
      %s178 = scalar_select %p177, %s36, 0
      %s179 = ssub.s32 %s28, %s40
      %s180 = ssub.s32 %s168, %s178
      %s181 = sor.u32 %s179, %s180
      %p182 = scmp.eq.s32.totalorder %s181, 0
      %s184 = sadd.s32 %s183, 1
      %s185 = scalar_select %p182, %s183, %s184
      %p188 = pneg %p182
      %p189 = scmp.eq.s32.totalorder %s21, 7
      %p190 = por %p188, %p189
      %p191 = scmp.ne.s32.totalorder %s183, %s186
      %p192 = scmp.eq.s32.totalorder %s21, 0
      %p193 = por %p191, %p192
      %p194 = scmp.ne.s32.totalorder %s183, %s186
      %p195 = scmp.eq.s32.totalorder %s26, 7
      %p196 = por %p194, %p195
      %p197 = scmp.ne.s32.totalorder %s186, %s187
      %p198 = scmp.eq.s32.totalorder %s26, 0
      %p199 = por %p197, %p198
      %p200 = scmp.ne.s32.totalorder %s186, %s187
      %p201 = scmp.eq.s32.totalorder %s27, 7
      %p202 = por %p200, %p201
      %p204 = scmp.ne.s32.totalorder %s187, %s203
      %p205 = scmp.eq.s32.totalorder %s27, 0
      %p206 = por %p204, %p205
      %s208 = sadd.s32 %s207, 1
      %p211 = scmp.eq.s32.totalorder %s21, 7
      %p212 = scmp.ne.s32.totalorder %s207, %s209
      %p213 = scmp.eq.s32.totalorder %s21, 0
      %p214 = por %p212, %p213
      %p215 = scmp.ne.s32.totalorder %s207, %s209
      %p216 = scmp.eq.s32.totalorder %s26, 7
      %p217 = por %p215, %p216
      %p218 = scmp.ne.s32.totalorder %s209, %s210
      %p219 = scmp.eq.s32.totalorder %s26, 0
      %p220 = por %p218, %p219
      %p221 = scmp.ne.s32.totalorder %s209, %s210
      %p222 = scmp.eq.s32.totalorder %s27, 7
      %p223 = por %p221, %p222
      %p225 = scmp.ne.s32.totalorder %s210, %s224
      %p226 = scmp.eq.s32.totalorder %s27, 0
      %p227 = por %p225, %p226
      %s228 = ssub.s32 %s28, %s40
      %p229 = scmp.eq.s32.totalorder %s228, 0
      %s231 = sadd.s32 %s230, 1
      %s232 = scalar_select %p229, %s230, %s231
      %p235 = pneg %p229
      %p236 = scmp.eq.s32.totalorder %s21, 7
      %p237 = por %p235, %p236
      %p238 = scmp.ne.s32.totalorder %s230, %s233
      %p239 = scmp.eq.s32.totalorder %s21, 0
      %p240 = por %p238, %p239
      %p241 = scmp.ne.s32.totalorder %s230, %s233
      %p242 = scmp.eq.s32.totalorder %s26, 7
      %p243 = por %p241, %p242
      %p244 = scmp.ne.s32.totalorder %s233, %s234
      %p245 = scmp.eq.s32.totalorder %s26, 0
      %p246 = por %p244, %p245
      %p247 = scmp.ne.s32.totalorder %s233, %s234
      %p248 = scmp.eq.s32.totalorder %s27, 7
      %p249 = por %p247, %p248
      %p251 = scmp.ne.s32.totalorder %s234, %s250
      %p252 = scmp.eq.s32.totalorder %s27, 0
      %p253 = por %p251, %p252
      %p254 = scmp.le.s32.totalorder 1, %s21
      %p255 = scmp.lt.s32.totalorder %s21, 9
      %p256 = pnand %p254, %p255
      %p257 = pneg %p256
      // Predicated region
      $region9: #{tpu_custom_call.1} parent=5 // pred_check
        _
      $region10: #{tpu_custom_call.1} parent=5 // pred_check_branch
        %259 = sbr.rel (%p256) target = $region12
      $region11: #{tpu_custom_call.1} parent=5 // pred_region
        %s260 = ssub.s32 %s21, 1
        // Predicated region
        $region13: #{tpu_custom_call.1} parent=11 // pred_check
          %p261 = pneg %p220
        $region14: #{tpu_custom_call.1} parent=11 // pred_check_branch
          %263 = sbr.rel (%p261) target = $region16
        $region15: #{tpu_custom_call.1} parent=11 // pred_region
          _
        $region16: #{tpu_custom_call.1} parent=11 // pred_fallthru
          _
      $region12: #{tpu_custom_call.1} parent=5 // pred_fallthru
        _
      %p264 = scmp.lt.s32.totalorder %s21, 8
      // Predicated region
      $region17: #{tpu_custom_call.1} parent=5 // pred_check
        %p265 = pneg %p264
      $region18: #{tpu_custom_call.1} parent=5 // pred_check_branch
        %267 = sbr.rel (%p265) target = $region20
      $region19: #{tpu_custom_call.1} parent=5 // pred_region
        // Predicated region
        $region21: #{tpu_custom_call.1} parent=19 // pred_check
          %p268 = pneg %p53
        $region22: #{tpu_custom_call.1} parent=19 // pred_check_branch
          %270 = sbr.rel (%p268) target = $region24
        $region23: #{tpu_custom_call.1} parent=19 // pred_region
          %s271 = smul.u32 16, %s28
          %p272 = scmp.lt.s32.totalorder %s271, 63
          %s273 = scalar_select %p272, %s271, 63
          %s274 = smul.addr %s273, 8
          %s275 = scalar_lea.vmem %s1, %s274
          %s276 = smul.u32 16, %s28
        $region24: #{tpu_custom_call.1} parent=19 // pred_fallthru
          _
        // Predicated region
        $region25: #{tpu_custom_call.1} parent=19 // pred_check
          %p277 = pneg %p99
        $region26: #{tpu_custom_call.1} parent=19 // pred_check_branch
          %279 = sbr.rel (%p277) target = $region28
        $region27: #{tpu_custom_call.1} parent=19 // pred_region
          %s280 = sshra.s32 %s29, 7
          %s281 = sand.u32 %s29, 127
          %s282 = sadd.s32 %s280, %s28
          %s283 = smul.u32 %s282, 128
          %s284 = sshra.s32 %s29, 7
          %s285 = sand.u32 %s29, 127
          %s286 = sadd.s32 %s283, %s285
          %s287 = sld [smem:[#allocation5 + %s286]]
          %p288 = scmp.gt.s32.totalorder %s287, 0
          %s289 = scalar_select %p288, %s29, 0
          %s290 = smul.u32 2, %s289
          %p291 = scmp.lt.s32.totalorder %s290, 3
          %s292 = scalar_select %p291, %s290, 3
          %s293 = smul.addr %s292, 4
          %s294 = scalar_lea.vmem %s2, %s293
          %s295 = sshra.s32 %s29, 7
          %s296 = sand.u32 %s29, 127
          %s297 = sadd.s32 %s295, %s28
          %s298 = smul.u32 %s297, 128
          %s299 = sshra.s32 %s29, 7
          %s300 = sand.u32 %s29, 127
          %s301 = sadd.s32 %s298, %s300
          %s302 = sld [smem:[#allocation5 + %s301]]
          %p303 = scmp.gt.s32.totalorder %s302, 0
          %s304 = scalar_select %p303, %s29, 0
          %s305 = smul.u32 2, %s304
        $region28: #{tpu_custom_call.1} parent=19 // pred_fallthru
          _
        // Predicated region
        $region29: #{tpu_custom_call.1} parent=19 // pred_check
          %p306 = pneg %p145
        $region30: #{tpu_custom_call.1} parent=19 // pred_check_branch
          %308 = sbr.rel (%p306) target = $region32
        $region31: #{tpu_custom_call.1} parent=19 // pred_region
          %s309 = sshra.s32 %s29, 7
          %s310 = sand.u32 %s29, 127
          %s311 = sadd.s32 %s309, %s28
          %s312 = smul.u32 %s311, 128
          %s313 = sshra.s32 %s29, 7
          %s314 = sand.u32 %s29, 127
          %s315 = sadd.s32 %s312, %s314
          %s316 = sld [smem:[#allocation5 + %s315]]
          %p317 = scmp.gt.s32.totalorder %s316, 0
          %s318 = scalar_select %p317, %s29, 0
          %s319 = smul.u32 32, %s318
          %p320 = scmp.lt.s32.totalorder %s319, 63
          %s321 = scalar_select %p320, %s319, 63
          %s322 = smul.addr %s321, 4
          %s323 = scalar_lea.vmem %s3, %s322
          %s324 = sshra.s32 %s29, 7
          %s325 = sand.u32 %s29, 127
          %s326 = sadd.s32 %s324, %s28
          %s327 = smul.u32 %s326, 128
          %s328 = sshra.s32 %s29, 7
          %s329 = sand.u32 %s29, 127
          %s330 = sadd.s32 %s327, %s329
          %s331 = sld [smem:[#allocation5 + %s330]]
          %p332 = scmp.gt.s32.totalorder %s331, 0
          %s333 = scalar_select %p332, %s29, 0
          %s334 = smul.u32 32, %s333
        $region32: #{tpu_custom_call.1} parent=19 // pred_fallthru
          _
        // Predicated region
        $region33: #{tpu_custom_call.1} parent=19 // pred_check
          %p335 = pneg %p193
        $region34: #{tpu_custom_call.1} parent=19 // pred_check_branch
          %337 = sbr.rel (%p335) target = $region36
        $region35: #{tpu_custom_call.1} parent=19 // pred_region
          %s338 = sand.u32 %s183, 1
          %s339 = scalar_lea.sflag [#allocation7], %s338
          %s340 = sand.u32 %s183, 1
          %s341 = smul.addr %s340, 128
          %s342 = scalar_lea.vmem [#allocation6], %s341
          %s343 = sshra.s32 %s29, 7
          %s344 = sand.u32 %s29, 127
          %s345 = sadd.s32 %s343, %s28
          %s346 = smul.u32 %s345, 128
          %s347 = sshra.s32 %s29, 7
          %s348 = sand.u32 %s29, 127
          %s349 = sadd.s32 %s346, %s348
          %s350 = sld [smem:[#allocation5 + %s349]]
          %p351 = scmp.gt.s32.totalorder %s350, 0
          %s352 = scalar_select %p351, %s29, 0
          %s353 = smul.u32 16, %s28
          %s354 = smul.u32 2, %s352
          %s356 = ssub.s32 2048, 2048
          %357 = vsyncadd %s339, %s356
          %s358 = smul.addr %s353, 4
          %s359 = sadd.s32 %s354, %s358
          %s360 = smul.addr %s359, 64
          %s361 = scalar_lea.hbm %s4, %s360
          %s362 = sshll.u32 %s342, 4
          %s363 = int_to_ptr.vmem [resolvable:$true] %s362
          %368 = dma.hbm_to_vmem [thread:$0]  %s361, 2048, %s363, %s339, 256, 128, 8
        $region36: #{tpu_custom_call.1} parent=19 // pred_fallthru
          _
      $region20: #{tpu_custom_call.1} parent=5 // pred_fallthru
        _
      %p369 = scmp.le.s32.totalorder 1, %s21
      %p370 = scmp.lt.s32.totalorder %s21, 9
      %p371 = pnand %p369, %p370
      %p372 = pneg %p371
      // Predicated region
      $region37: #{tpu_custom_call.1} parent=5 // pred_check
        _
      $region38: #{tpu_custom_call.1} parent=5 // pred_check_branch
        %374 = sbr.rel (%p371) target = $region40
      $region39: #{tpu_custom_call.1} parent=5 // pred_region
        %s375 = ssub.s32 %s21, 1
        %s376 = sand.u32 %s186, 1
        %s377 = scalar_lea.sflag [#allocation7], %s376
        %s378 = sand.u32 %s186, 1
        %s379 = smul.addr %s378, 128
        %s380 = scalar_lea.vmem [#allocation6], %s379
        // Predicated region
        $region41: #{tpu_custom_call.1} parent=39 // pred_check
          %p381 = pneg %p199
        $region42: #{tpu_custom_call.1} parent=39 // pred_check_branch
          %383 = sbr.rel (%p381) target = $region44
        $region43: #{tpu_custom_call.1} parent=39 // pred_region
          %384 = dma.done %s377, 2048
        $region44: #{tpu_custom_call.1} parent=39 // pred_fallthru
          _
        %s385 = smul.u32 16, %s30
        %p386 = scmp.lt.s32.totalorder %s385, 63
        %s387 = scalar_select %p386, %s385, 63
        %s388 = smul.addr %s387, 8
        %s389 = scalar_lea.vmem %s1, %s388
        %p390 = pneg %p59
        %p391 = pneg %p56
        %s392 = sshra.s32 %s31, 7
        %s393 = sand.u32 %s31, 127
        %s394 = sadd.s32 %s392, %s30
        %s395 = smul.u32 %s394, 128
        %s396 = sshra.s32 %s31, 7
        %s397 = sand.u32 %s31, 127
        %s398 = sadd.s32 %s395, %s397
        %s399 = sld [smem:[#allocation5 + %s398]]
        %p400 = scmp.gt.s32.totalorder %s399, 0
        %s401 = scalar_select %p400, %s31, 0
        %s402 = smul.u32 2, %s401
        %p403 = scmp.lt.s32.totalorder %s402, 3
        %s404 = scalar_select %p403, %s402, 3
        %s405 = smul.addr %s404, 4
        %s406 = scalar_lea.vmem %s2, %s405
        %p407 = pneg %p105
        %p408 = pneg %p102
        %s409 = sshra.s32 %s31, 7
        %s410 = sand.u32 %s31, 127
        %s411 = sadd.s32 %s409, %s30
        %s412 = smul.u32 %s411, 128
        %s413 = sshra.s32 %s31, 7
        %s414 = sand.u32 %s31, 127
        %s415 = sadd.s32 %s412, %s414
        %s416 = sld [smem:[#allocation5 + %s415]]
        %p417 = scmp.gt.s32.totalorder %s416, 0
        %s418 = scalar_select %p417, %s31, 0
        %s419 = smul.u32 32, %s418
        %p420 = scmp.lt.s32.totalorder %s419, 63
        %s421 = scalar_select %p420, %s419, 63
        %s422 = smul.addr %s421, 4
        %s423 = scalar_lea.vmem %s3, %s422
        %p424 = pneg %p151
        %p425 = pneg %p148
        %s426 = sand.u32 %s186, 1
        %s427 = scalar_lea.sflag [#allocation7], %s426
        %s428 = sand.u32 %s186, 1
        %s429 = smul.addr %s428, 128
        %s430 = scalar_lea.vmem [#allocation6], %s429
        %p431 = pneg %p199
        %p432 = pneg %p196
        %p433 = pneg %p220
        %p434 = pneg %p217
        %p435 = pneg %p246
        %p436 = pneg %p243
        %s437 = smul.u32 16, %s30
        %p438 = scmp.lt.s32.totalorder %s437, 63
        %s439 = scalar_select %p438, %s437, 63
        %s440 = smul.addr %s439, 8
        %s441 = scalar_lea.vmem %s6, %s440
        %s442 = smul.u32 16, %s30
        %p443 = scmp.lt.s32.totalorder %s442, 63
        %s444 = scalar_select %p443, %s442, 63
        %s445 = smul.addr %s444, 8
        %s446 = scalar_lea.vmem %s1, %s445
        %s447 = smul.u32 16, %s30
        %s448 = sshra.s32 %s31, 7
        %s449 = sand.u32 %s31, 127
        %s450 = sadd.s32 %s448, %s30
        %s451 = smul.u32 %s450, 128
        %s452 = sshra.s32 %s31, 7
        %s453 = sand.u32 %s31, 127
        %s454 = sadd.s32 %s451, %s453
        %s455 = sld [smem:[#allocation5 + %s454]]
        %p456 = scmp.gt.s32.totalorder %s455, 0
        %s457 = scalar_select %p456, %s31, 0
        %s458 = smul.u32 2, %s457
        %p459 = scmp.lt.s32.totalorder %s458, 3
        %s460 = scalar_select %p459, %s458, 3
        %s461 = smul.addr %s460, 4
        %s462 = scalar_lea.vmem %s2, %s461
        %s463 = sshra.s32 %s31, 7
        %s464 = sand.u32 %s31, 127
        %s465 = sadd.s32 %s463, %s30
        %s466 = smul.u32 %s465, 128
        %s467 = sshra.s32 %s31, 7
        %s468 = sand.u32 %s31, 127
        %s469 = sadd.s32 %s466, %s468
        %s470 = sld [smem:[#allocation5 + %s469]]
        %p471 = scmp.gt.s32.totalorder %s470, 0
        %s472 = scalar_select %p471, %s31, 0
        %s473 = smul.u32 2, %s472
        %s474 = sshra.s32 %s31, 7
        %s475 = sand.u32 %s31, 127
        %s476 = sadd.s32 %s474, %s30
        %s477 = smul.u32 %s476, 128
        %s478 = sshra.s32 %s31, 7
        %s479 = sand.u32 %s31, 127
        %s480 = sadd.s32 %s477, %s479
        %s481 = sld [smem:[#allocation5 + %s480]]
        %p482 = scmp.gt.s32.totalorder %s481, 0
        %s483 = scalar_select %p482, %s31, 0
        %s484 = smul.u32 32, %s483
        %p485 = scmp.lt.s32.totalorder %s484, 63
        %s486 = scalar_select %p485, %s484, 63
        %s487 = smul.addr %s486, 4
        %s488 = scalar_lea.vmem %s3, %s487
        %s489 = sshra.s32 %s31, 7
        %s490 = sand.u32 %s31, 127
        %s491 = sadd.s32 %s489, %s30
        %s492 = smul.u32 %s491, 128
        %s493 = sshra.s32 %s31, 7
        %s494 = sand.u32 %s31, 127
        %s495 = sadd.s32 %s492, %s494
        %s496 = sld [smem:[#allocation5 + %s495]]
        %p497 = scmp.gt.s32.totalorder %s496, 0
        %s498 = scalar_select %p497, %s31, 0
        %s499 = smul.u32 32, %s498
        %s500 = sshra.s32 %s31, 7
        %s501 = sand.u32 %s31, 127
        %s502 = sadd.s32 %s500, %s30
        %s503 = smul.u32 %s502, 128
        %s504 = sshra.s32 %s31, 7
        %s505 = sand.u32 %s31, 127
        %s506 = sadd.s32 %s503, %s505
        %s507 = sld [smem:[#allocation5 + %s506]]
        %p508 = scmp.gt.s32.totalorder %s507, 0
        %s509 = scalar_select %p508, %s31, 0
        %s510 = smul.u32 16, %s30
        %s511 = smul.u32 2, %s509
        %s512 = smul.u32 16, %s30
        %p513 = scmp.lt.s32.totalorder %s512, 63
        %s514 = scalar_select %p513, %s512, 63
        %s515 = smul.addr %s514, 8
        %s516 = scalar_lea.vmem %s6, %s515
        %s517 = smul.u32 16, %s30
        %p519 = scmp.eq.s32.totalorder %s31, 0
        // Predicated region
        $region45: #{tpu_custom_call.1} parent=39 // pred_check
          %p520 = pneg %p519
        $region46: #{tpu_custom_call.1} parent=39 // pred_check_branch
          %522 = sbr.rel (%p520) target = $region48
        $region47: #{tpu_custom_call.1} parent=39 // pred_region
          %vm523 = vcmask 7168
          %524 = vst.msk [vmem:[#allocation2] sm:$0xff] %vm523, -1e+30
          %525 = vst.msk [vmem:[#allocation2 + $0x8] sm:$0xff] %vm523, -1e+30
          %526 = vst.msk [vmem:[#allocation2 + $0x10] sm:$0xff] %vm523, -1e+30
          %527 = vst.msk [vmem:[#allocation2 + $0x18] sm:$0xff] %vm523, -1e+30
          %528 = vst.msk [vmem:[#allocation2 + $0x20] sm:$0xff] %vm523, -1e+30
          %529 = vst.msk [vmem:[#allocation2 + $0x28] sm:$0xff] %vm523, -1e+30
          %530 = vst.msk [vmem:[#allocation2 + $0x30] sm:$0xff] %vm523, -1e+30
          %531 = vst.msk [vmem:[#allocation2 + $0x38] sm:$0xff] %vm523, -1e+30
          %532 = vst.msk [vmem:[#allocation2 + $0x40] sm:$0xff] %vm523, -1e+30
          %533 = vst.msk [vmem:[#allocation2 + $0x48] sm:$0xff] %vm523, -1e+30
          %534 = vst.msk [vmem:[#allocation2 + $0x50] sm:$0xff] %vm523, -1e+30
          %535 = vst.msk [vmem:[#allocation2 + $0x58] sm:$0xff] %vm523, -1e+30
          %536 = vst.msk [vmem:[#allocation2 + $0x60] sm:$0xff] %vm523, -1e+30
          %537 = vst.msk [vmem:[#allocation2 + $0x68] sm:$0xff] %vm523, -1e+30
          %538 = vst.msk [vmem:[#allocation2 + $0x70] sm:$0xff] %vm523, -1e+30
          %539 = vst.msk [vmem:[#allocation2 + $0x78] sm:$0xff] %vm523, -1e+30
          %540 = vst.msk [vmem:[#allocation2 + $0x80] sm:$0xff] %vm523, -1e+30
          %541 = vst.msk [vmem:[#allocation2 + $0x88] sm:$0xff] %vm523, -1e+30
          %542 = vst.msk [vmem:[#allocation2 + $0x90] sm:$0xff] %vm523, -1e+30
          %543 = vst.msk [vmem:[#allocation2 + $0x98] sm:$0xff] %vm523, -1e+30
          %544 = vst.msk [vmem:[#allocation2 + $0xa0] sm:$0xff] %vm523, -1e+30
          %545 = vst.msk [vmem:[#allocation2 + $0xa8] sm:$0xff] %vm523, -1e+30
          %546 = vst.msk [vmem:[#allocation2 + $0xb0] sm:$0xff] %vm523, -1e+30
          %547 = vst.msk [vmem:[#allocation2 + $0xb8] sm:$0xff] %vm523, -1e+30
          %548 = vst.msk [vmem:[#allocation2 + $0xc0] sm:$0xff] %vm523, -1e+30
          %549 = vst.msk [vmem:[#allocation2 + $0xc8] sm:$0xff] %vm523, -1e+30
          %550 = vst.msk [vmem:[#allocation2 + $0xd0] sm:$0xff] %vm523, -1e+30
          %551 = vst.msk [vmem:[#allocation2 + $0xd8] sm:$0xff] %vm523, -1e+30
          %552 = vst.msk [vmem:[#allocation2 + $0xe0] sm:$0xff] %vm523, -1e+30
          %553 = vst.msk [vmem:[#allocation2 + $0xe8] sm:$0xff] %vm523, -1e+30
          %554 = vst.msk [vmem:[#allocation2 + $0xf0] sm:$0xff] %vm523, -1e+30
          %555 = vst.msk [vmem:[#allocation2 + $0xf8] sm:$0xff] %vm523, -1e+30
          %556 = vst.msk [vmem:[#allocation2 + $0x100] sm:$0xff] %vm523, -1e+30
          %557 = vst.msk [vmem:[#allocation2 + $0x108] sm:$0xff] %vm523, -1e+30
          %558 = vst.msk [vmem:[#allocation2 + $0x110] sm:$0xff] %vm523, -1e+30
          %559 = vst.msk [vmem:[#allocation2 + $0x118] sm:$0xff] %vm523, -1e+30
          %560 = vst.msk [vmem:[#allocation2 + $0x120] sm:$0xff] %vm523, -1e+30
          %561 = vst.msk [vmem:[#allocation2 + $0x128] sm:$0xff] %vm523, -1e+30
          %562 = vst.msk [vmem:[#allocation2 + $0x130] sm:$0xff] %vm523, -1e+30
          %563 = vst.msk [vmem:[#allocation2 + $0x138] sm:$0xff] %vm523, -1e+30
          %564 = vst.msk [vmem:[#allocation2 + $0x140] sm:$0xff] %vm523, -1e+30
          %565 = vst.msk [vmem:[#allocation2 + $0x148] sm:$0xff] %vm523, -1e+30
          %566 = vst.msk [vmem:[#allocation2 + $0x150] sm:$0xff] %vm523, -1e+30
          %567 = vst.msk [vmem:[#allocation2 + $0x158] sm:$0xff] %vm523, -1e+30
          %568 = vst.msk [vmem:[#allocation2 + $0x160] sm:$0xff] %vm523, -1e+30
          %569 = vst.msk [vmem:[#allocation2 + $0x168] sm:$0xff] %vm523, -1e+30
          %570 = vst.msk [vmem:[#allocation2 + $0x170] sm:$0xff] %vm523, -1e+30
          %571 = vst.msk [vmem:[#allocation2 + $0x178] sm:$0xff] %vm523, -1e+30
          %572 = vst.msk [vmem:[#allocation2 + $0x180] sm:$0xff] %vm523, -1e+30
          %573 = vst.msk [vmem:[#allocation2 + $0x188] sm:$0xff] %vm523, -1e+30
          %574 = vst.msk [vmem:[#allocation2 + $0x190] sm:$0xff] %vm523, -1e+30
          %575 = vst.msk [vmem:[#allocation2 + $0x198] sm:$0xff] %vm523, -1e+30
          %576 = vst.msk [vmem:[#allocation2 + $0x1a0] sm:$0xff] %vm523, -1e+30
          %577 = vst.msk [vmem:[#allocation2 + $0x1a8] sm:$0xff] %vm523, -1e+30
          %578 = vst.msk [vmem:[#allocation2 + $0x1b0] sm:$0xff] %vm523, -1e+30
          %579 = vst.msk [vmem:[#allocation2 + $0x1b8] sm:$0xff] %vm523, -1e+30
          %580 = vst.msk [vmem:[#allocation2 + $0x1c0] sm:$0xff] %vm523, -1e+30
          %581 = vst.msk [vmem:[#allocation2 + $0x1c8] sm:$0xff] %vm523, -1e+30
          %582 = vst.msk [vmem:[#allocation2 + $0x1d0] sm:$0xff] %vm523, -1e+30
          %583 = vst.msk [vmem:[#allocation2 + $0x1d8] sm:$0xff] %vm523, -1e+30
          %584 = vst.msk [vmem:[#allocation2 + $0x1e0] sm:$0xff] %vm523, -1e+30
          %585 = vst.msk [vmem:[#allocation2 + $0x1e8] sm:$0xff] %vm523, -1e+30
          %586 = vst.msk [vmem:[#allocation2 + $0x1f0] sm:$0xff] %vm523, -1e+30
          %587 = vst.msk [vmem:[#allocation2 + $0x1f8] sm:$0xff] %vm523, -1e+30
          %vm588 = vcmask 130048
          %589 = vst.msk [vmem:[#allocation3] sm:$0xff] %vm588, 0.0
          %590 = vst.msk [vmem:[#allocation3 + $0x8] sm:$0xff] %vm588, 0.0
          %591 = vst.msk [vmem:[#allocation3 + $0x10] sm:$0xff] %vm588, 0.0
          %592 = vst.msk [vmem:[#allocation3 + $0x18] sm:$0xff] %vm588, 0.0
          %593 = vst.msk [vmem:[#allocation3 + $0x20] sm:$0xff] %vm588, 0.0
          %594 = vst.msk [vmem:[#allocation3 + $0x28] sm:$0xff] %vm588, 0.0
          %595 = vst.msk [vmem:[#allocation3 + $0x30] sm:$0xff] %vm588, 0.0
          %596 = vst.msk [vmem:[#allocation3 + $0x38] sm:$0xff] %vm588, 0.0
          %597 = vst.msk [vmem:[#allocation3 + $0x40] sm:$0xff] %vm588, 0.0
          %598 = vst.msk [vmem:[#allocation3 + $0x48] sm:$0xff] %vm588, 0.0
          %599 = vst.msk [vmem:[#allocation3 + $0x50] sm:$0xff] %vm588, 0.0
          %600 = vst.msk [vmem:[#allocation3 + $0x58] sm:$0xff] %vm588, 0.0
          %601 = vst.msk [vmem:[#allocation3 + $0x60] sm:$0xff] %vm588, 0.0
          %602 = vst.msk [vmem:[#allocation3 + $0x68] sm:$0xff] %vm588, 0.0
          %603 = vst.msk [vmem:[#allocation3 + $0x70] sm:$0xff] %vm588, 0.0
          %604 = vst.msk [vmem:[#allocation3 + $0x78] sm:$0xff] %vm588, 0.0
          %605 = vst.msk [vmem:[#allocation3 + $0x80] sm:$0xff] %vm588, 0.0
          %606 = vst.msk [vmem:[#allocation3 + $0x88] sm:$0xff] %vm588, 0.0
          %607 = vst.msk [vmem:[#allocation3 + $0x90] sm:$0xff] %vm588, 0.0
          %608 = vst.msk [vmem:[#allocation3 + $0x98] sm:$0xff] %vm588, 0.0
          %609 = vst.msk [vmem:[#allocation3 + $0xa0] sm:$0xff] %vm588, 0.0
          %610 = vst.msk [vmem:[#allocation3 + $0xa8] sm:$0xff] %vm588, 0.0
          %611 = vst.msk [vmem:[#allocation3 + $0xb0] sm:$0xff] %vm588, 0.0
          %612 = vst.msk [vmem:[#allocation3 + $0xb8] sm:$0xff] %vm588, 0.0
          %613 = vst.msk [vmem:[#allocation3 + $0xc0] sm:$0xff] %vm588, 0.0
          %614 = vst.msk [vmem:[#allocation3 + $0xc8] sm:$0xff] %vm588, 0.0
          %615 = vst.msk [vmem:[#allocation3 + $0xd0] sm:$0xff] %vm588, 0.0
          %616 = vst.msk [vmem:[#allocation3 + $0xd8] sm:$0xff] %vm588, 0.0
          %617 = vst.msk [vmem:[#allocation3 + $0xe0] sm:$0xff] %vm588, 0.0
          %618 = vst.msk [vmem:[#allocation3 + $0xe8] sm:$0xff] %vm588, 0.0
          %619 = vst.msk [vmem:[#allocation3 + $0xf0] sm:$0xff] %vm588, 0.0
          %620 = vst.msk [vmem:[#allocation3 + $0xf8] sm:$0xff] %vm588, 0.0
          %621 = vst.msk [vmem:[#allocation3 + $0x100] sm:$0xff] %vm588, 0.0
          %622 = vst.msk [vmem:[#allocation3 + $0x108] sm:$0xff] %vm588, 0.0
          %623 = vst.msk [vmem:[#allocation3 + $0x110] sm:$0xff] %vm588, 0.0
          %624 = vst.msk [vmem:[#allocation3 + $0x118] sm:$0xff] %vm588, 0.0
          %625 = vst.msk [vmem:[#allocation3 + $0x120] sm:$0xff] %vm588, 0.0
          %626 = vst.msk [vmem:[#allocation3 + $0x128] sm:$0xff] %vm588, 0.0
          %627 = vst.msk [vmem:[#allocation3 + $0x130] sm:$0xff] %vm588, 0.0
          %628 = vst.msk [vmem:[#allocation3 + $0x138] sm:$0xff] %vm588, 0.0
          %629 = vst.msk [vmem:[#allocation3 + $0x140] sm:$0xff] %vm588, 0.0
          %630 = vst.msk [vmem:[#allocation3 + $0x148] sm:$0xff] %vm588, 0.0
          %631 = vst.msk [vmem:[#allocation3 + $0x150] sm:$0xff] %vm588, 0.0
          %632 = vst.msk [vmem:[#allocation3 + $0x158] sm:$0xff] %vm588, 0.0
          %633 = vst.msk [vmem:[#allocation3 + $0x160] sm:$0xff] %vm588, 0.0
          %634 = vst.msk [vmem:[#allocation3 + $0x168] sm:$0xff] %vm588, 0.0
          %635 = vst.msk [vmem:[#allocation3 + $0x170] sm:$0xff] %vm588, 0.0
          %636 = vst.msk [vmem:[#allocation3 + $0x178] sm:$0xff] %vm588, 0.0
          %637 = vst.msk [vmem:[#allocation3 + $0x180] sm:$0xff] %vm588, 0.0
          %638 = vst.msk [vmem:[#allocation3 + $0x188] sm:$0xff] %vm588, 0.0
          %639 = vst.msk [vmem:[#allocation3 + $0x190] sm:$0xff] %vm588, 0.0
          %640 = vst.msk [vmem:[#allocation3 + $0x198] sm:$0xff] %vm588, 0.0
          %641 = vst.msk [vmem:[#allocation3 + $0x1a0] sm:$0xff] %vm588, 0.0
          %642 = vst.msk [vmem:[#allocation3 + $0x1a8] sm:$0xff] %vm588, 0.0
          %643 = vst.msk [vmem:[#allocation3 + $0x1b0] sm:$0xff] %vm588, 0.0
          %644 = vst.msk [vmem:[#allocation3 + $0x1b8] sm:$0xff] %vm588, 0.0
          %645 = vst.msk [vmem:[#allocation3 + $0x1c0] sm:$0xff] %vm588, 0.0
          %646 = vst.msk [vmem:[#allocation3 + $0x1c8] sm:$0xff] %vm588, 0.0
          %647 = vst.msk [vmem:[#allocation3 + $0x1d0] sm:$0xff] %vm588, 0.0
          %648 = vst.msk [vmem:[#allocation3 + $0x1d8] sm:$0xff] %vm588, 0.0
          %649 = vst.msk [vmem:[#allocation3 + $0x1e0] sm:$0xff] %vm588, 0.0
          %650 = vst.msk [vmem:[#allocation3 + $0x1e8] sm:$0xff] %vm588, 0.0
          %651 = vst.msk [vmem:[#allocation3 + $0x1f0] sm:$0xff] %vm588, 0.0
          %652 = vst.msk [vmem:[#allocation3 + $0x1f8] sm:$0xff] %vm588, 0.0
        $region48: #{tpu_custom_call.1} parent=39 // pred_fallthru
          _
        %s653 = sshra.s32 %s31, 7
        %s654 = sand.u32 %s31, 127
        %s655 = sadd.s32 %s653, %s30
        %s656 = smul.u32 %s655, 128
        %s657 = sshra.s32 %s31, 7
        %s658 = sand.u32 %s31, 127
        %s659 = sadd.s32 %s656, %s658
        %s660 = sld [smem:[#allocation5 + %s659]]
        %p661 = scmp.gt.s32.totalorder %s660, 0
        // Predicated region
        $region49: #{tpu_custom_call.1} parent=39 // pred_check
          %p662 = pneg %p661
        $region50: #{tpu_custom_call.1} parent=39 // pred_check_branch
          %664 = sbr.rel (%p662) target = $region52
        $region51: #{tpu_custom_call.1} parent=39 // pred_region
          %v665 = vld [vmem:[%s446] sm:$0xff]
          %v666 = vld [vmem:[%s446 + $0x8] sm:$0xff]
          %v667 = vld [vmem:[%s446 + $0x10] sm:$0xff]
          %v668 = vld [vmem:[%s446 + $0x18] sm:$0xff]
          %v669 = vld [vmem:[%s446 + $0x20] sm:$0xff]
          %v670 = vld [vmem:[%s446 + $0x28] sm:$0xff]
          %v671 = vld [vmem:[%s446 + $0x30] sm:$0xff]
          %v672 = vld [vmem:[%s446 + $0x38] sm:$0xff]
          %v673 = vld [vmem:[%s446 + $0x40] sm:$0xff]
          %v674 = vld [vmem:[%s446 + $0x48] sm:$0xff]
          %v675 = vld [vmem:[%s446 + $0x50] sm:$0xff]
          %v676 = vld [vmem:[%s446 + $0x58] sm:$0xff]
          %v677 = vld [vmem:[%s446 + $0x60] sm:$0xff]
          %v678 = vld [vmem:[%s446 + $0x68] sm:$0xff]
          %v679 = vld [vmem:[%s446 + $0x70] sm:$0xff]
          %v680 = vld [vmem:[%s446 + $0x78] sm:$0xff]
          %v681 = vld [vmem:[%s462] sm:$0xff]
          %v682 = vld [vmem:[%s488] sm:$0xf]
          %v683 = vld [vmem:[%s488 + $0x4] sm:$0xf]
          %v684 = vld [vmem:[%s488 + $0x8] sm:$0xf]
          %v685 = vld [vmem:[%s488 + $0xc] sm:$0xf]
          %v686 = vld [vmem:[%s488 + $0x10] sm:$0xf]
          %v687 = vld [vmem:[%s488 + $0x14] sm:$0xf]
          %v688 = vld [vmem:[%s488 + $0x18] sm:$0xf]
          %v689 = vld [vmem:[%s488 + $0x1c] sm:$0xf]
          %v690 = vld [vmem:[%s488 + $0x20] sm:$0xf]
          %v691 = vld [vmem:[%s488 + $0x24] sm:$0xf]
          %v692 = vld [vmem:[%s488 + $0x28] sm:$0xf]
          %v693 = vld [vmem:[%s488 + $0x2c] sm:$0xf]
          %v694 = vld [vmem:[%s488 + $0x30] sm:$0xf]
          %v695 = vld [vmem:[%s488 + $0x34] sm:$0xf]
          %v696 = vld [vmem:[%s488 + $0x38] sm:$0xf]
          %v697 = vld [vmem:[%s488 + $0x3c] sm:$0xf]
          %v698 = vld [vmem:[%s488 + $0x40] sm:$0xf]
          %v699 = vld [vmem:[%s488 + $0x44] sm:$0xf]
          %v700 = vld [vmem:[%s488 + $0x48] sm:$0xf]
          %v701 = vld [vmem:[%s488 + $0x4c] sm:$0xf]
          %v702 = vld [vmem:[%s488 + $0x50] sm:$0xf]
          %v703 = vld [vmem:[%s488 + $0x54] sm:$0xf]
          %v704 = vld [vmem:[%s488 + $0x58] sm:$0xf]
          %v705 = vld [vmem:[%s488 + $0x5c] sm:$0xf]
          %v706 = vld [vmem:[%s488 + $0x60] sm:$0xf]
          %v707 = vld [vmem:[%s488 + $0x64] sm:$0xf]
          %v708 = vld [vmem:[%s488 + $0x68] sm:$0xf]
          %v709 = vld [vmem:[%s488 + $0x6c] sm:$0xf]
          %v710 = vld [vmem:[%s488 + $0x70] sm:$0xf]
          %v711 = vld [vmem:[%s488 + $0x74] sm:$0xf]
          %v712 = vld [vmem:[%s488 + $0x78] sm:$0xf]
          %v713 = vld [vmem:[%s488 + $0x7c] sm:$0xf]
          %v714 = vld [vmem:[%s380] sm:$0xff]
          %v715 = vld [vmem:[%s380 + $0x8] sm:$0xff]
          %v716 = vld [vmem:[%s380 + $0x10] sm:$0xff]
          %v717 = vld [vmem:[%s380 + $0x18] sm:$0xff]
          %v718 = vld [vmem:[%s380 + $0x20] sm:$0xff]
          %v719 = vld [vmem:[%s380 + $0x28] sm:$0xff]
          %v720 = vld [vmem:[%s380 + $0x30] sm:$0xff]
          %v721 = vld [vmem:[%s380 + $0x38] sm:$0xff]
          %v722 = vld [vmem:[%s380 + $0x40] sm:$0xff]
          %v723 = vld [vmem:[%s380 + $0x48] sm:$0xff]
          %v724 = vld [vmem:[%s380 + $0x50] sm:$0xff]
          %v725 = vld [vmem:[%s380 + $0x58] sm:$0xff]
          %v726 = vld [vmem:[%s380 + $0x60] sm:$0xff]
          %v727 = vld [vmem:[%s380 + $0x68] sm:$0xff]
          %v728 = vld [vmem:[%s380 + $0x70] sm:$0xff]
          %v729 = vld [vmem:[%s380 + $0x78] sm:$0xff]
          %v730 = vunpack.c.l.bf16 %v714
          %v731 = vunpack.c.h.bf16 %v714
          %v732 = vunpack.c.l.bf16 %v715
          %v733 = vunpack.c.h.bf16 %v715
          %v734 = vunpack.c.l.bf16 %v716
          %v735 = vunpack.c.h.bf16 %v716
          %v736 = vunpack.c.l.bf16 %v717
          %v737 = vunpack.c.h.bf16 %v717
          %v738 = vunpack.c.l.bf16 %v718
          %v739 = vunpack.c.h.bf16 %v718
          %v740 = vunpack.c.l.bf16 %v719
          %v741 = vunpack.c.h.bf16 %v719
          %v742 = vunpack.c.l.bf16 %v720
          %v743 = vunpack.c.h.bf16 %v720
          %v744 = vunpack.c.l.bf16 %v721
          %v745 = vunpack.c.h.bf16 %v721
          %v746 = vunpack.c.l.bf16 %v722
          %v747 = vunpack.c.h.bf16 %v722
          %v748 = vunpack.c.l.bf16 %v723
          %v749 = vunpack.c.h.bf16 %v723
          %v750 = vunpack.c.l.bf16 %v724
          %v751 = vunpack.c.h.bf16 %v724
          %v752 = vunpack.c.l.bf16 %v725
          %v753 = vunpack.c.h.bf16 %v725
          %v754 = vunpack.c.l.bf16 %v726
          %v755 = vunpack.c.h.bf16 %v726
          %v756 = vunpack.c.l.bf16 %v727
          %v757 = vunpack.c.h.bf16 %v727
          %v758 = vunpack.c.l.bf16 %v728
          %v759 = vunpack.c.h.bf16 %v728
          %v760 = vunpack.c.l.bf16 %v729
          %v761 = vunpack.c.h.bf16 %v729
          %763 = vset.pattern.permute.xlu0 0
          %764 = vperm.xlu0 %763, %v665
          %v765 = vpop.permute.xlu0 %764
          %768 = vset.pattern.permute.xlu0 0
          %769 = vperm.xlu0 %768, %v666
          %v770 = vpop.permute.xlu0 %769
          %773 = vset.pattern.permute.xlu0 0
          %774 = vperm.xlu0 %773, %v667
          %v775 = vpop.permute.xlu0 %774
          %778 = vset.pattern.permute.xlu0 0
          %779 = vperm.xlu0 %778, %v668
          %v780 = vpop.permute.xlu0 %779
          %783 = vset.pattern.permute.xlu0 0
          %784 = vperm.xlu0 %783, %v669
          %v785 = vpop.permute.xlu0 %784
          %788 = vset.pattern.permute.xlu0 0
          %789 = vperm.xlu0 %788, %v670
          %v790 = vpop.permute.xlu0 %789
          %793 = vset.pattern.permute.xlu0 0
          %794 = vperm.xlu0 %793, %v671
          %v795 = vpop.permute.xlu0 %794
          %798 = vset.pattern.permute.xlu0 0
          %799 = vperm.xlu0 %798, %v672
          %v800 = vpop.permute.xlu0 %799
          %803 = vset.pattern.permute.xlu0 0
          %804 = vperm.xlu0 %803, %v673
          %v805 = vpop.permute.xlu0 %804
          %808 = vset.pattern.permute.xlu0 0
          %809 = vperm.xlu0 %808, %v674
          %v810 = vpop.permute.xlu0 %809
          %813 = vset.pattern.permute.xlu0 0
          %814 = vperm.xlu0 %813, %v675
          %v815 = vpop.permute.xlu0 %814
          %818 = vset.pattern.permute.xlu0 0
          %819 = vperm.xlu0 %818, %v676
          %v820 = vpop.permute.xlu0 %819
          %823 = vset.pattern.permute.xlu0 0
          %824 = vperm.xlu0 %823, %v677
          %v825 = vpop.permute.xlu0 %824
          %828 = vset.pattern.permute.xlu0 0
          %829 = vperm.xlu0 %828, %v678
          %v830 = vpop.permute.xlu0 %829
          %833 = vset.pattern.permute.xlu0 0
          %834 = vperm.xlu0 %833, %v679
          %v835 = vpop.permute.xlu0 %834
          %838 = vset.pattern.permute.xlu0 0
          %839 = vperm.xlu0 %838, %v680
          %v840 = vpop.permute.xlu0 %839
          %v843 = vlaneseq
          %v844 = vshrl.u32 %v843, 7
          %v845 = vsub.s32 0, %v844
          %v846 = vrot.slane %v681, %v845
          %v847 = vlaneseq
          %v848 = vshrl.u32 %v847, 7
          %v849 = vsub.s32 4, %v848
          %v850 = vrot.slane %v681, %v849
          %v853 = vlaneseq
          %v854 = vshrl.u32 %v853, 7
          %v855 = vsub.s32 0, %v854
          %v856 = vrot.slane %v846, %v855
          %v857 = vlaneseq
          %v858 = vshrl.u32 %v857, 7
          %v859 = vsub.s32 0, %v858
          %v860 = vrot.slane %v850, %v859
          %v861 = vadd.f32 %v765, %v856
          %v862 = vadd.f32 %v765, %v860
          %v863 = vadd.f32 %v770, %v856
          %v864 = vadd.f32 %v770, %v860
          %v865 = vadd.f32 %v775, %v856
          %v866 = vadd.f32 %v775, %v860
          %v867 = vadd.f32 %v780, %v856
          %v868 = vadd.f32 %v780, %v860
          %v869 = vadd.f32 %v785, %v856
          %v870 = vadd.f32 %v785, %v860
          %v871 = vadd.f32 %v790, %v856
          %v872 = vadd.f32 %v790, %v860
          %v873 = vadd.f32 %v795, %v856
          %v874 = vadd.f32 %v795, %v860
          %v875 = vadd.f32 %v800, %v856
          %v876 = vadd.f32 %v800, %v860
          %v877 = vadd.f32 %v805, %v856
          %v878 = vadd.f32 %v805, %v860
          %v879 = vadd.f32 %v810, %v856
          %v880 = vadd.f32 %v810, %v860
          %v881 = vadd.f32 %v815, %v856
          %v882 = vadd.f32 %v815, %v860
          %v883 = vadd.f32 %v820, %v856
          %v884 = vadd.f32 %v820, %v860
          %v885 = vadd.f32 %v825, %v856
          %v886 = vadd.f32 %v825, %v860
          %v887 = vadd.f32 %v830, %v856
          %v888 = vadd.f32 %v830, %v860
          %v889 = vadd.f32 %v835, %v856
          %v890 = vadd.f32 %v835, %v860
          %v891 = vadd.f32 %v840, %v856
          %v892 = vadd.f32 %v840, %v860
          %v893 = vmul.f32 %v861, 0.2
          %v894 = vmul.f32 %v862, 0.2
          %v895 = vmul.f32 %v863, 0.2
          %v896 = vmul.f32 %v864, 0.2
          %v897 = vmul.f32 %v865, 0.2
          %v898 = vmul.f32 %v866, 0.2
          %v899 = vmul.f32 %v867, 0.2
          %v900 = vmul.f32 %v868, 0.2
          %v901 = vmul.f32 %v869, 0.2
          %v902 = vmul.f32 %v870, 0.2
          %v903 = vmul.f32 %v871, 0.2
          %v904 = vmul.f32 %v872, 0.2
          %v905 = vmul.f32 %v873, 0.2
          %v906 = vmul.f32 %v874, 0.2
          %v907 = vmul.f32 %v875, 0.2
          %v908 = vmul.f32 %v876, 0.2
          %v909 = vmul.f32 %v877, 0.2
          %v910 = vmul.f32 %v878, 0.2
          %v911 = vmul.f32 %v879, 0.2
          %v912 = vmul.f32 %v880, 0.2
          %v913 = vmul.f32 %v881, 0.2
          %v914 = vmul.f32 %v882, 0.2
          %v915 = vmul.f32 %v883, 0.2
          %v916 = vmul.f32 %v884, 0.2
          %v917 = vmul.f32 %v885, 0.2
          %v918 = vmul.f32 %v886, 0.2
          %v919 = vmul.f32 %v887, 0.2
          %v920 = vmul.f32 %v888, 0.2
          %v921 = vmul.f32 %v889, 0.2
          %v922 = vmul.f32 %v890, 0.2
          %v923 = vmul.f32 %v891, 0.2
          %v924 = vmul.f32 %v892, 0.2
          %v925 = vmax.f32 %v861, %v893
          %v926 = vmax.f32 %v862, %v894
          %v927 = vmax.f32 %v863, %v895
          %v928 = vmax.f32 %v864, %v896
          %v929 = vmax.f32 %v865, %v897
          %v930 = vmax.f32 %v866, %v898
          %v931 = vmax.f32 %v867, %v899
          %v932 = vmax.f32 %v868, %v900
          %v933 = vmax.f32 %v869, %v901
          %v934 = vmax.f32 %v870, %v902
          %v935 = vmax.f32 %v871, %v903
          %v936 = vmax.f32 %v872, %v904
          %v937 = vmax.f32 %v873, %v905
          %v938 = vmax.f32 %v874, %v906
          %v939 = vmax.f32 %v875, %v907
          %v940 = vmax.f32 %v876, %v908
          %v941 = vmax.f32 %v877, %v909
          %v942 = vmax.f32 %v878, %v910
          %v943 = vmax.f32 %v879, %v911
          %v944 = vmax.f32 %v880, %v912
          %v945 = vmax.f32 %v881, %v913
          %v946 = vmax.f32 %v882, %v914
          %v947 = vmax.f32 %v883, %v915
          %v948 = vmax.f32 %v884, %v916
          %v949 = vmax.f32 %v885, %v917
          %v950 = vmax.f32 %v886, %v918
          %v951 = vmax.f32 %v887, %v919
          %v952 = vmax.f32 %v888, %v920
          %v953 = vmax.f32 %v889, %v921
          %v954 = vmax.f32 %v890, %v922
          %v955 = vmax.f32 %v891, %v923
          %v956 = vmax.f32 %v892, %v924
          %v957 = vadd.f32 %v925, %v730
          %v958 = vadd.f32 %v926, %v731
          %v959 = vadd.f32 %v927, %v732
          %v960 = vadd.f32 %v928, %v733
          %v961 = vadd.f32 %v929, %v734
          %v962 = vadd.f32 %v930, %v735
          %v963 = vadd.f32 %v931, %v736
          %v964 = vadd.f32 %v932, %v737
          %v965 = vadd.f32 %v933, %v738
          %v966 = vadd.f32 %v934, %v739
          %v967 = vadd.f32 %v935, %v740
          %v968 = vadd.f32 %v936, %v741
          %v969 = vadd.f32 %v937, %v742
          %v970 = vadd.f32 %v938, %v743
          %v971 = vadd.f32 %v939, %v744
          %v972 = vadd.f32 %v940, %v745
          %v973 = vadd.f32 %v941, %v746
          %v974 = vadd.f32 %v942, %v747
          %v975 = vadd.f32 %v943, %v748
          %v976 = vadd.f32 %v944, %v749
          %v977 = vadd.f32 %v945, %v750
          %v978 = vadd.f32 %v946, %v751
          %v979 = vadd.f32 %v947, %v752
          %v980 = vadd.f32 %v948, %v753
          %v981 = vadd.f32 %v949, %v754
          %v982 = vadd.f32 %v950, %v755
          %v983 = vadd.f32 %v951, %v756
          %v984 = vadd.f32 %v952, %v757
          %v985 = vadd.f32 %v953, %v758
          %v986 = vadd.f32 %v954, %v759
          %v987 = vadd.f32 %v955, %v760
          %v988 = vadd.f32 %v956, %v761
          %v989 = vld [vmem:[#allocation2] sm:$0xff]
          %v990 = vld [vmem:[#allocation2 + $0x8] sm:$0xff]
          %v991 = vld [vmem:[#allocation2 + $0x10] sm:$0xff]
          %v992 = vld [vmem:[#allocation2 + $0x18] sm:$0xff]
          %v993 = vld [vmem:[#allocation2 + $0x20] sm:$0xff]
          %v994 = vld [vmem:[#allocation2 + $0x28] sm:$0xff]
          %v995 = vld [vmem:[#allocation2 + $0x30] sm:$0xff]
          %v996 = vld [vmem:[#allocation2 + $0x38] sm:$0xff]
          %v997 = vld [vmem:[#allocation2 + $0x40] sm:$0xff]
          %v998 = vld [vmem:[#allocation2 + $0x48] sm:$0xff]
          %v999 = vld [vmem:[#allocation2 + $0x50] sm:$0xff]
          %v1000 = vld [vmem:[#allocation2 + $0x58] sm:$0xff]
          %v1001 = vld [vmem:[#allocation2 + $0x60] sm:$0xff]
          %v1002 = vld [vmem:[#allocation2 + $0x68] sm:$0xff]
          %v1003 = vld [vmem:[#allocation2 + $0x70] sm:$0xff]
          %v1004 = vld [vmem:[#allocation2 + $0x78] sm:$0xff]
          %v1005 = vmax.f32 %v957, %v958
          %1006 = vmax.xlane.f32.xlu0 %v1005
          %v1007 = vpop.xlane.xlu0 %1006
          %v1008 = vmax.f32 %v959, %v960
          %1009 = vmax.xlane.f32.xlu0 %v1008
          %v1010 = vpop.xlane.xlu0 %1009
          %v1011 = vmax.f32 %v961, %v962
          %1012 = vmax.xlane.f32.xlu0 %v1011
          %v1013 = vpop.xlane.xlu0 %1012
          %v1014 = vmax.f32 %v963, %v964
          %1015 = vmax.xlane.f32.xlu0 %v1014
          %v1016 = vpop.xlane.xlu0 %1015
          %v1017 = vmax.f32 %v965, %v966
          %1018 = vmax.xlane.f32.xlu0 %v1017
          %v1019 = vpop.xlane.xlu0 %1018
          %v1020 = vmax.f32 %v967, %v968
          %1021 = vmax.xlane.f32.xlu0 %v1020
          %v1022 = vpop.xlane.xlu0 %1021
          %v1023 = vmax.f32 %v969, %v970
          %1024 = vmax.xlane.f32.xlu0 %v1023
          %v1025 = vpop.xlane.xlu0 %1024
          %v1026 = vmax.f32 %v971, %v972
          %1027 = vmax.xlane.f32.xlu0 %v1026
          %v1028 = vpop.xlane.xlu0 %1027
          %v1029 = vmax.f32 %v973, %v974
          %1030 = vmax.xlane.f32.xlu0 %v1029
          %v1031 = vpop.xlane.xlu0 %1030
          %v1032 = vmax.f32 %v975, %v976
          %1033 = vmax.xlane.f32.xlu0 %v1032
          %v1034 = vpop.xlane.xlu0 %1033
          %v1035 = vmax.f32 %v977, %v978
          %1036 = vmax.xlane.f32.xlu0 %v1035
          %v1037 = vpop.xlane.xlu0 %1036
          %v1038 = vmax.f32 %v979, %v980
          %1039 = vmax.xlane.f32.xlu0 %v1038
          %v1040 = vpop.xlane.xlu0 %1039
          %v1041 = vmax.f32 %v981, %v982
          %1042 = vmax.xlane.f32.xlu0 %v1041
          %v1043 = vpop.xlane.xlu0 %1042
          %v1044 = vmax.f32 %v983, %v984
          %1045 = vmax.xlane.f32.xlu0 %v1044
          %v1046 = vpop.xlane.xlu0 %1045
          %v1047 = vmax.f32 %v985, %v986
          %1048 = vmax.xlane.f32.xlu0 %v1047
          %v1049 = vpop.xlane.xlu0 %1048
          %v1050 = vmax.f32 %v987, %v988
          %1051 = vmax.xlane.f32.xlu0 %v1050
          %v1052 = vpop.xlane.xlu0 %1051
          %v1053 = vmax.f32 %v989, %v1007
          %v1054 = vmax.f32 %v990, %v1010
          %v1055 = vmax.f32 %v991, %v1013
          %v1056 = vmax.f32 %v992, %v1016
          %v1057 = vmax.f32 %v993, %v1019
          %v1058 = vmax.f32 %v994, %v1022
          %v1059 = vmax.f32 %v995, %v1025
          %v1060 = vmax.f32 %v996, %v1028
          %v1061 = vmax.f32 %v997, %v1031
          %v1062 = vmax.f32 %v998, %v1034
          %v1063 = vmax.f32 %v999, %v1037
          %v1064 = vmax.f32 %v1000, %v1040
          %v1065 = vmax.f32 %v1001, %v1043
          %v1066 = vmax.f32 %v1002, %v1046
          %v1067 = vmax.f32 %v1003, %v1049
          %v1068 = vmax.f32 %v1004, %v1052
          %v1069 = vsub.f32 %v989, %v1053
          %v1070 = vsub.f32 %v990, %v1054
          %v1071 = vsub.f32 %v991, %v1055
          %v1072 = vsub.f32 %v992, %v1056
          %v1073 = vsub.f32 %v993, %v1057
          %v1074 = vsub.f32 %v994, %v1058
          %v1075 = vsub.f32 %v995, %v1059
          %v1076 = vsub.f32 %v996, %v1060
          %v1077 = vsub.f32 %v997, %v1061
          %v1078 = vsub.f32 %v998, %v1062
          %v1079 = vsub.f32 %v999, %v1063
          %v1080 = vsub.f32 %v1000, %v1064
          %v1081 = vsub.f32 %v1001, %v1065
          %v1082 = vsub.f32 %v1002, %v1066
          %v1083 = vsub.f32 %v1003, %v1067
          %v1084 = vsub.f32 %v1004, %v1068
          %v1085 = vmul.f32 %v1069, 1.442695
          %v1086 = vpow.pop %v1085
          %v1087 = vmul.f32 %v1070, 1.442695
          %v1088 = vpow.pop %v1087
          %v1089 = vmul.f32 %v1071, 1.442695
          %v1090 = vpow.pop %v1089
          %v1091 = vmul.f32 %v1072, 1.442695
          %v1092 = vpow.pop %v1091
          %v1093 = vmul.f32 %v1073, 1.442695
          %v1094 = vpow.pop %v1093
          %v1095 = vmul.f32 %v1074, 1.442695
          %v1096 = vpow.pop %v1095
          %v1097 = vmul.f32 %v1075, 1.442695
          %v1098 = vpow.pop %v1097
          %v1099 = vmul.f32 %v1076, 1.442695
          %v1100 = vpow.pop %v1099
          %v1101 = vmul.f32 %v1077, 1.442695
          %v1102 = vpow.pop %v1101
          %v1103 = vmul.f32 %v1078, 1.442695
          %v1104 = vpow.pop %v1103
          %v1105 = vmul.f32 %v1079, 1.442695
          %v1106 = vpow.pop %v1105
          %v1107 = vmul.f32 %v1080, 1.442695
          %v1108 = vpow.pop %v1107
          %v1109 = vmul.f32 %v1081, 1.442695
          %v1110 = vpow.pop %v1109
          %v1111 = vmul.f32 %v1082, 1.442695
          %v1112 = vpow.pop %v1111
          %v1113 = vmul.f32 %v1083, 1.442695
          %v1114 = vpow.pop %v1113
          %v1115 = vmul.f32 %v1084, 1.442695
          %v1116 = vpow.pop %v1115
          %1118 = vset.pattern.permute.xlu0 0
          %1119 = vperm.xlu0 %1118, %v1053
          %v1120 = vpop.permute.xlu0 %1119
          %1123 = vset.pattern.permute.xlu0 0
          %1124 = vperm.xlu0 %1123, %v1054
          %v1125 = vpop.permute.xlu0 %1124
          %1128 = vset.pattern.permute.xlu0 0
          %1129 = vperm.xlu0 %1128, %v1055
          %v1130 = vpop.permute.xlu0 %1129
          %1133 = vset.pattern.permute.xlu0 0
          %1134 = vperm.xlu0 %1133, %v1056
          %v1135 = vpop.permute.xlu0 %1134
          %1138 = vset.pattern.permute.xlu0 0
          %1139 = vperm.xlu0 %1138, %v1057
          %v1140 = vpop.permute.xlu0 %1139
          %1143 = vset.pattern.permute.xlu0 0
          %1144 = vperm.xlu0 %1143, %v1058
          %v1145 = vpop.permute.xlu0 %1144
          %1148 = vset.pattern.permute.xlu0 0
          %1149 = vperm.xlu0 %1148, %v1059
          %v1150 = vpop.permute.xlu0 %1149
          %1153 = vset.pattern.permute.xlu0 0
          %1154 = vperm.xlu0 %1153, %v1060
          %v1155 = vpop.permute.xlu0 %1154
          %1158 = vset.pattern.permute.xlu0 0
          %1159 = vperm.xlu0 %1158, %v1061
          %v1160 = vpop.permute.xlu0 %1159
          %1163 = vset.pattern.permute.xlu0 0
          %1164 = vperm.xlu0 %1163, %v1062
          %v1165 = vpop.permute.xlu0 %1164
          %1168 = vset.pattern.permute.xlu0 0
          %1169 = vperm.xlu0 %1168, %v1063
          %v1170 = vpop.permute.xlu0 %1169
          %1173 = vset.pattern.permute.xlu0 0
          %1174 = vperm.xlu0 %1173, %v1064
          %v1175 = vpop.permute.xlu0 %1174
          %1178 = vset.pattern.permute.xlu0 0
          %1179 = vperm.xlu0 %1178, %v1065
          %v1180 = vpop.permute.xlu0 %1179
          %1183 = vset.pattern.permute.xlu0 0
          %1184 = vperm.xlu0 %1183, %v1066
          %v1185 = vpop.permute.xlu0 %1184
          %1188 = vset.pattern.permute.xlu0 0
          %1189 = vperm.xlu0 %1188, %v1067
          %v1190 = vpop.permute.xlu0 %1189
          %1193 = vset.pattern.permute.xlu0 0
          %1194 = vperm.xlu0 %1193, %v1068
          %v1195 = vpop.permute.xlu0 %1194
          %v1197 = vsub.f32 %v957, %v1120
          %v1198 = vsub.f32 %v958, %v1120
          %v1199 = vsub.f32 %v959, %v1125
          %v1200 = vsub.f32 %v960, %v1125
          %v1201 = vsub.f32 %v961, %v1130
          %v1202 = vsub.f32 %v962, %v1130
          %v1203 = vsub.f32 %v963, %v1135
          %v1204 = vsub.f32 %v964, %v1135
          %v1205 = vsub.f32 %v965, %v1140
          %v1206 = vsub.f32 %v966, %v1140
          %v1207 = vsub.f32 %v967, %v1145
          %v1208 = vsub.f32 %v968, %v1145
          %v1209 = vsub.f32 %v969, %v1150
          %v1210 = vsub.f32 %v970, %v1150
          %v1211 = vsub.f32 %v971, %v1155
          %v1212 = vsub.f32 %v972, %v1155
          %v1213 = vsub.f32 %v973, %v1160
          %v1214 = vsub.f32 %v974, %v1160
          %v1215 = vsub.f32 %v975, %v1165
          %v1216 = vsub.f32 %v976, %v1165
          %v1217 = vsub.f32 %v977, %v1170
          %v1218 = vsub.f32 %v978, %v1170
          %v1219 = vsub.f32 %v979, %v1175
          %v1220 = vsub.f32 %v980, %v1175
          %v1221 = vsub.f32 %v981, %v1180
          %v1222 = vsub.f32 %v982, %v1180
          %v1223 = vsub.f32 %v983, %v1185
          %v1224 = vsub.f32 %v984, %v1185
          %v1225 = vsub.f32 %v985, %v1190
          %v1226 = vsub.f32 %v986, %v1190
          %v1227 = vsub.f32 %v987, %v1195
          %v1228 = vsub.f32 %v988, %v1195
          %v1229 = vmul.f32 %v1197, 1.442695
          %v1230 = vpow.pop %v1229
          %v1231 = vmul.f32 %v1198, 1.442695
          %v1232 = vpow.pop %v1231
          %v1233 = vmul.f32 %v1199, 1.442695
          %v1234 = vpow.pop %v1233
          %v1235 = vmul.f32 %v1200, 1.442695
          %v1236 = vpow.pop %v1235
          %v1237 = vmul.f32 %v1201, 1.442695
          %v1238 = vpow.pop %v1237
          %v1239 = vmul.f32 %v1202, 1.442695
          %v1240 = vpow.pop %v1239
          %v1241 = vmul.f32 %v1203, 1.442695
          %v1242 = vpow.pop %v1241
          %v1243 = vmul.f32 %v1204, 1.442695
          %v1244 = vpow.pop %v1243
          %v1245 = vmul.f32 %v1205, 1.442695
          %v1246 = vpow.pop %v1245
          %v1247 = vmul.f32 %v1206, 1.442695
          %v1248 = vpow.pop %v1247
          %v1249 = vmul.f32 %v1207, 1.442695
          %v1250 = vpow.pop %v1249
          %v1251 = vmul.f32 %v1208, 1.442695
          %v1252 = vpow.pop %v1251
          %v1253 = vmul.f32 %v1209, 1.442695
          %v1254 = vpow.pop %v1253
          %v1255 = vmul.f32 %v1210, 1.442695
          %v1256 = vpow.pop %v1255
          %v1257 = vmul.f32 %v1211, 1.442695
          %v1258 = vpow.pop %v1257
          %v1259 = vmul.f32 %v1212, 1.442695
          %v1260 = vpow.pop %v1259
          %v1261 = vmul.f32 %v1213, 1.442695
          %v1262 = vpow.pop %v1261
          %v1263 = vmul.f32 %v1214, 1.442695
          %v1264 = vpow.pop %v1263
          %v1265 = vmul.f32 %v1215, 1.442695
          %v1266 = vpow.pop %v1265
          %v1267 = vmul.f32 %v1216, 1.442695
          %v1268 = vpow.pop %v1267
          %v1269 = vmul.f32 %v1217, 1.442695
          %v1270 = vpow.pop %v1269
          %v1271 = vmul.f32 %v1218, 1.442695
          %v1272 = vpow.pop %v1271
          %v1273 = vmul.f32 %v1219, 1.442695
          %v1274 = vpow.pop %v1273
          %v1275 = vmul.f32 %v1220, 1.442695
          %v1276 = vpow.pop %v1275
          %v1277 = vmul.f32 %v1221, 1.442695
          %v1278 = vpow.pop %v1277
          %v1279 = vmul.f32 %v1222, 1.442695
          %v1280 = vpow.pop %v1279
          %v1281 = vmul.f32 %v1223, 1.442695
          %v1282 = vpow.pop %v1281
          %v1283 = vmul.f32 %v1224, 1.442695
          %v1284 = vpow.pop %v1283
          %v1285 = vmul.f32 %v1225, 1.442695
          %v1286 = vpow.pop %v1285
          %v1287 = vmul.f32 %v1226, 1.442695
          %v1288 = vpow.pop %v1287
          %v1289 = vmul.f32 %v1227, 1.442695
          %v1290 = vpow.pop %v1289
          %v1291 = vmul.f32 %v1228, 1.442695
          %v1292 = vpow.pop %v1291
          %v1293 = vpack.c.bf16 %v1234, %v1230
          %v1294 = vpack.c.bf16 %v1236, %v1232
          %v1295 = vpack.c.bf16 %v1242, %v1238
          %v1296 = vpack.c.bf16 %v1244, %v1240
          %v1297 = vpack.c.bf16 %v1250, %v1246
          %v1298 = vpack.c.bf16 %v1252, %v1248
          %v1299 = vpack.c.bf16 %v1258, %v1254
          %v1300 = vpack.c.bf16 %v1260, %v1256
          %v1301 = vpack.c.bf16 %v1266, %v1262
          %v1302 = vpack.c.bf16 %v1268, %v1264
          %v1303 = vpack.c.bf16 %v1274, %v1270
          %v1304 = vpack.c.bf16 %v1276, %v1272
          %v1305 = vpack.c.bf16 %v1282, %v1278
          %v1306 = vpack.c.bf16 %v1284, %v1280
          %v1307 = vpack.c.bf16 %v1290, %v1286
          %v1308 = vpack.c.bf16 %v1292, %v1288
          %v1309 = vld [vmem:[#allocation3] sm:$0xff]
          %v1310 = vld [vmem:[#allocation3 + $0x8] sm:$0xff]
          %v1311 = vld [vmem:[#allocation3 + $0x10] sm:$0xff]
          %v1312 = vld [vmem:[#allocation3 + $0x18] sm:$0xff]
          %v1313 = vld [vmem:[#allocation3 + $0x20] sm:$0xff]
          %v1314 = vld [vmem:[#allocation3 + $0x28] sm:$0xff]
          %v1315 = vld [vmem:[#allocation3 + $0x30] sm:$0xff]
          %v1316 = vld [vmem:[#allocation3 + $0x38] sm:$0xff]
          %v1317 = vld [vmem:[#allocation3 + $0x40] sm:$0xff]
          %v1318 = vld [vmem:[#allocation3 + $0x48] sm:$0xff]
          %v1319 = vld [vmem:[#allocation3 + $0x50] sm:$0xff]
          %v1320 = vld [vmem:[#allocation3 + $0x58] sm:$0xff]
          %v1321 = vld [vmem:[#allocation3 + $0x60] sm:$0xff]
          %v1322 = vld [vmem:[#allocation3 + $0x68] sm:$0xff]
          %v1323 = vld [vmem:[#allocation3 + $0x70] sm:$0xff]
          %v1324 = vld [vmem:[#allocation3 + $0x78] sm:$0xff]
          %1326 = vset.pattern.permute.xlu0 0
          %1327 = vperm.xlu0 %1326, %v1086
          %v1328 = vpop.permute.xlu0 %1327
          %1331 = vset.pattern.permute.xlu0 0
          %1332 = vperm.xlu0 %1331, %v1088
          %v1333 = vpop.permute.xlu0 %1332
          %1336 = vset.pattern.permute.xlu0 0
          %1337 = vperm.xlu0 %1336, %v1090
          %v1338 = vpop.permute.xlu0 %1337
          %1341 = vset.pattern.permute.xlu0 0
          %1342 = vperm.xlu0 %1341, %v1092
          %v1343 = vpop.permute.xlu0 %1342
          %1346 = vset.pattern.permute.xlu0 0
          %1347 = vperm.xlu0 %1346, %v1094
          %v1348 = vpop.permute.xlu0 %1347
          %1351 = vset.pattern.permute.xlu0 0
          %1352 = vperm.xlu0 %1351, %v1096
          %v1353 = vpop.permute.xlu0 %1352
          %1356 = vset.pattern.permute.xlu0 0
          %1357 = vperm.xlu0 %1356, %v1098
          %v1358 = vpop.permute.xlu0 %1357
          %1361 = vset.pattern.permute.xlu0 0
          %1362 = vperm.xlu0 %1361, %v1100
          %v1363 = vpop.permute.xlu0 %1362
          %1366 = vset.pattern.permute.xlu0 0
          %1367 = vperm.xlu0 %1366, %v1102
          %v1368 = vpop.permute.xlu0 %1367
          %1371 = vset.pattern.permute.xlu0 0
          %1372 = vperm.xlu0 %1371, %v1104
          %v1373 = vpop.permute.xlu0 %1372
          %1376 = vset.pattern.permute.xlu0 0
          %1377 = vperm.xlu0 %1376, %v1106
          %v1378 = vpop.permute.xlu0 %1377
          %1381 = vset.pattern.permute.xlu0 0
          %1382 = vperm.xlu0 %1381, %v1108
          %v1383 = vpop.permute.xlu0 %1382
          %1386 = vset.pattern.permute.xlu0 0
          %1387 = vperm.xlu0 %1386, %v1110
          %v1388 = vpop.permute.xlu0 %1387
          %1391 = vset.pattern.permute.xlu0 0
          %1392 = vperm.xlu0 %1391, %v1112
          %v1393 = vpop.permute.xlu0 %1392
          %1396 = vset.pattern.permute.xlu0 0
          %1397 = vperm.xlu0 %1396, %v1114
          %v1398 = vpop.permute.xlu0 %1397
          %1401 = vset.pattern.permute.xlu0 0
          %1402 = vperm.xlu0 %1401, %v1116
          %v1403 = vpop.permute.xlu0 %1402
          %v1405 = vmul.f32 %v1328, %v1309
          %v1406 = vmul.f32 %v1333, %v1310
          %v1407 = vmul.f32 %v1338, %v1311
          %v1408 = vmul.f32 %v1343, %v1312
          %v1409 = vmul.f32 %v1348, %v1313
          %v1410 = vmul.f32 %v1353, %v1314
          %v1411 = vmul.f32 %v1358, %v1315
          %v1412 = vmul.f32 %v1363, %v1316
          %v1413 = vmul.f32 %v1368, %v1317
          %v1414 = vmul.f32 %v1373, %v1318
          %v1415 = vmul.f32 %v1378, %v1319
          %v1416 = vmul.f32 %v1383, %v1320
          %v1417 = vmul.f32 %v1388, %v1321
          %v1418 = vmul.f32 %v1393, %v1322
          %v1419 = vmul.f32 %v1398, %v1323
          %v1420 = vmul.f32 %v1403, %v1324
          %v1453 = vunpack.c.l.b16 %v682
          %v1454 = vunpack.c.l.b16 %v683
          %v1455 = vunpack.c.l.b16 %v684
          %v1456 = vunpack.c.l.b16 %v685
          %v1457 = vunpack.c.l.b16 %v686
          %v1458 = vunpack.c.l.b16 %v687
          %v1459 = vunpack.c.l.b16 %v688
          %v1460 = vunpack.c.l.b16 %v689
          %v1461 = vunpack.c.l.b16 %v690
          %v1462 = vunpack.c.l.b16 %v691
          %v1463 = vunpack.c.l.b16 %v692
          %v1464 = vunpack.c.l.b16 %v693
          %v1465 = vunpack.c.l.b16 %v694
          %v1466 = vunpack.c.l.b16 %v695
          %v1467 = vunpack.c.l.b16 %v696
          %v1468 = vunpack.c.l.b16 %v697
          %v1469 = vunpack.c.l.b16 %v698
          %v1470 = vunpack.c.l.b16 %v699
          %v1471 = vunpack.c.l.b16 %v700
          %v1472 = vunpack.c.l.b16 %v701
          %v1473 = vunpack.c.l.b16 %v702
          %v1474 = vunpack.c.l.b16 %v703
          %v1475 = vunpack.c.l.b16 %v704
          %v1476 = vunpack.c.l.b16 %v705
          %v1477 = vunpack.c.l.b16 %v706
          %v1478 = vunpack.c.l.b16 %v707
          %v1479 = vunpack.c.l.b16 %v708
          %v1480 = vunpack.c.l.b16 %v709
          %v1481 = vunpack.c.l.b16 %v710
          %v1482 = vunpack.c.l.b16 %v711
          %v1483 = vunpack.c.l.b16 %v712
          %v1484 = vunpack.c.l.b16 %v713
          %v1485 = vpack.c.b16 %v1454, %v1453
          %v1486 = vpack.c.b16 %v1456, %v1455
          %v1487 = vpack.c.b16 %v1458, %v1457
          %v1488 = vpack.c.b16 %v1460, %v1459
          %v1489 = vpack.c.b16 %v1462, %v1461
          %v1490 = vpack.c.b16 %v1464, %v1463
          %v1491 = vpack.c.b16 %v1466, %v1465
          %v1492 = vpack.c.b16 %v1468, %v1467
          %v1493 = vpack.c.b16 %v1470, %v1469
          %v1494 = vpack.c.b16 %v1472, %v1471
          %v1495 = vpack.c.b16 %v1474, %v1473
          %v1496 = vpack.c.b16 %v1476, %v1475
          %v1497 = vpack.c.b16 %v1478, %v1477
          %v1498 = vpack.c.b16 %v1480, %v1479
          %v1499 = vpack.c.b16 %v1482, %v1481
          %v1500 = vpack.c.b16 %v1484, %v1483
          %1517 = vmatprep.subr.bf16.mxu0 0
          %1518 = vmatpush1.bf16.msra.mxu0 %v1485
          %1519 = vmatprep.subr.bf16.mxu0 0
          %1520 = vmatpush1.bf16.msra.mxu0 %v1486
          %1521 = vmatprep.subr.bf16.mxu0 0
          %1522 = vmatpush1.bf16.msra.mxu0 %v1487
          %1523 = vmatprep.subr.bf16.mxu0 0
          %1524 = vmatpush1.bf16.msra.mxu0 %v1488
          %1525 = vmatprep.subr.bf16.mxu0 0
          %1526 = vmatpush1.bf16.msra.mxu0 %v1489
          %1527 = vmatprep.subr.bf16.mxu0 0
          %1528 = vmatpush1.bf16.msra.mxu0 %v1490
          %1529 = vmatprep.subr.bf16.mxu0 0
          %1530 = vmatpush1.bf16.msra.mxu0 %v1491
          %1531 = vmatprep.subr.bf16.mxu0 0
          %1532 = vmatpush1.bf16.msra.mxu0 %v1492
          %1533 = vmatprep.subr.bf16.mxu0 0
          %1534 = vmatpush1.bf16.msra.mxu0 %v1493
          %1535 = vmatprep.subr.bf16.mxu0 0
          %1536 = vmatpush1.bf16.msra.mxu0 %v1494
          %1537 = vmatprep.subr.bf16.mxu0 0
          %1538 = vmatpush1.bf16.msra.mxu0 %v1495
          %1539 = vmatprep.subr.bf16.mxu0 0
          %1540 = vmatpush1.bf16.msra.mxu0 %v1496
          %1541 = vmatprep.subr.bf16.mxu0 0
          %1542 = vmatpush1.bf16.msra.mxu0 %v1497
          %1543 = vmatprep.subr.bf16.mxu0 0
          %1544 = vmatpush1.bf16.msra.mxu0 %v1498
          %1545 = vmatprep.subr.bf16.mxu0 0
          %1546 = vmatpush1.bf16.msra.mxu0 %v1499
          %1547 = vmatprep.subr.bf16.mxu0 0
          %1548 = vmatpush1.bf16.msra.mxu0 %v1500
          %1549 = vmatprep.mubr.bf16.mxu0 %v1294
          %1550 = vmatmul.mubr.bf16.gmra.mrb[0].mxu0 %v1293
          %v1551 = vpop.f32.mrb[0].mxu0
          %v1552 = vadd.f32 0.0, %v1551
          %v1553 = vpop.f32.mrb[0].mxu0
          %v1554 = vpop.f32.mrb[0].mxu0
          %v1555 = vadd.f32 0.0, %v1554
          %v1556 = vpop.f32.mrb[0].mxu0
          %1557 = vmatprep.mubr.bf16.mxu0 %v1296
          %1558 = vmatmul.mubr.bf16.gmra.mrb[0].mxu0 %v1295
          %v1559 = vpop.f32.mrb[0].mxu0
          %v1560 = vadd.f32 0.0, %v1559
          %v1561 = vpop.f32.mrb[0].mxu0
          %v1562 = vpop.f32.mrb[0].mxu0
          %v1563 = vadd.f32 0.0, %v1562
          %v1564 = vpop.f32.mrb[0].mxu0
          %1565 = vmatprep.mubr.bf16.mxu0 %v1298
          %1566 = vmatmul.mubr.bf16.gmra.mrb[0].mxu0 %v1297
          %v1567 = vpop.f32.mrb[0].mxu0
          %v1568 = vadd.f32 0.0, %v1567
          %v1569 = vpop.f32.mrb[0].mxu0
          %v1570 = vpop.f32.mrb[0].mxu0
          %v1571 = vadd.f32 0.0, %v1570
          %v1572 = vpop.f32.mrb[0].mxu0
          %1573 = vmatprep.mubr.bf16.mxu0 %v1300
          %1574 = vmatmul.mubr.bf16.gmra.mrb[0].mxu0 %v1299
          %v1575 = vpop.f32.mrb[0].mxu0
          %v1576 = vadd.f32 0.0, %v1575
          %v1577 = vpop.f32.mrb[0].mxu0
          %v1578 = vpop.f32.mrb[0].mxu0
          %v1579 = vadd.f32 0.0, %v1578
          %v1580 = vpop.f32.mrb[0].mxu0
          %1581 = vmatprep.mubr.bf16.mxu0 %v1302
          %1582 = vmatmul.mubr.bf16.gmra.mrb[0].mxu0 %v1301
          %v1583 = vpop.f32.mrb[0].mxu0
          %v1584 = vadd.f32 0.0, %v1583
          %v1585 = vpop.f32.mrb[0].mxu0
          %v1586 = vpop.f32.mrb[0].mxu0
          %v1587 = vadd.f32 0.0, %v1586
          %v1588 = vpop.f32.mrb[0].mxu0
          %1589 = vmatprep.mubr.bf16.mxu0 %v1304
          %1590 = vmatmul.mubr.bf16.gmra.mrb[0].mxu0 %v1303
          %v1591 = vpop.f32.mrb[0].mxu0
          %v1592 = vadd.f32 0.0, %v1591
          %v1593 = vpop.f32.mrb[0].mxu0
          %v1594 = vpop.f32.mrb[0].mxu0
          %v1595 = vadd.f32 0.0, %v1594
          %v1596 = vpop.f32.mrb[0].mxu0
          %1597 = vmatprep.mubr.bf16.mxu0 %v1306
          %1598 = vmatmul.mubr.bf16.gmra.mrb[0].mxu0 %v1305
          %v1599 = vpop.f32.mrb[0].mxu0
          %v1600 = vadd.f32 0.0, %v1599
          %v1601 = vpop.f32.mrb[0].mxu0
          %v1602 = vpop.f32.mrb[0].mxu0
          %v1603 = vadd.f32 0.0, %v1602
          %v1604 = vpop.f32.mrb[0].mxu0
          %1605 = vmatprep.mubr.bf16.mxu0 %v1308
          %1606 = vmatmul.mubr.bf16.gmra.mrb[0].mxu0 %v1307
          %v1607 = vpop.f32.mrb[0].mxu0
          %v1608 = vadd.f32 0.0, %v1607
          %v1609 = vpop.f32.mrb[0].mxu0
          %v1610 = vpop.f32.mrb[0].mxu0
          %v1611 = vadd.f32 0.0, %v1610
          %v1612 = vpop.f32.mrb[0].mxu0
          %1613 = vdwg.mxu0
          %v1614 = vadd.f32 %v1405, %v1552
          %v1615 = vadd.f32 %v1406, %v1555
          %v1616 = vadd.f32 %v1407, %v1560
          %v1617 = vadd.f32 %v1408, %v1563
          %v1618 = vadd.f32 %v1409, %v1568
          %v1619 = vadd.f32 %v1410, %v1571
          %v1620 = vadd.f32 %v1411, %v1576
          %v1621 = vadd.f32 %v1412, %v1579
          %v1622 = vadd.f32 %v1413, %v1584
          %v1623 = vadd.f32 %v1414, %v1587
          %v1624 = vadd.f32 %v1415, %v1592
          %v1625 = vadd.f32 %v1416, %v1595
          %v1626 = vadd.f32 %v1417, %v1600
          %v1627 = vadd.f32 %v1418, %v1603
          %v1628 = vadd.f32 %v1419, %v1608
          %v1629 = vadd.f32 %v1420, %v1611
          %vm1630 = vcmask 130048
          %1631 = vst.msk [vmem:[#allocation3] sm:$0xff] %vm1630, %v1614
          %1632 = vst.msk [vmem:[#allocation3 + $0x8] sm:$0xff] %vm1630, %v1615
          %1633 = vst.msk [vmem:[#allocation3 + $0x10] sm:$0xff] %vm1630, %v1616
          %1634 = vst.msk [vmem:[#allocation3 + $0x18] sm:$0xff] %vm1630, %v1617
          %1635 = vst.msk [vmem:[#allocation3 + $0x20] sm:$0xff] %vm1630, %v1618
          %1636 = vst.msk [vmem:[#allocation3 + $0x28] sm:$0xff] %vm1630, %v1619
          %1637 = vst.msk [vmem:[#allocation3 + $0x30] sm:$0xff] %vm1630, %v1620
          %1638 = vst.msk [vmem:[#allocation3 + $0x38] sm:$0xff] %vm1630, %v1621
          %1639 = vst.msk [vmem:[#allocation3 + $0x40] sm:$0xff] %vm1630, %v1622
          %1640 = vst.msk [vmem:[#allocation3 + $0x48] sm:$0xff] %vm1630, %v1623
          %1641 = vst.msk [vmem:[#allocation3 + $0x50] sm:$0xff] %vm1630, %v1624
          %1642 = vst.msk [vmem:[#allocation3 + $0x58] sm:$0xff] %vm1630, %v1625
          %1643 = vst.msk [vmem:[#allocation3 + $0x60] sm:$0xff] %vm1630, %v1626
          %1644 = vst.msk [vmem:[#allocation3 + $0x68] sm:$0xff] %vm1630, %v1627
          %1645 = vst.msk [vmem:[#allocation3 + $0x70] sm:$0xff] %vm1630, %v1628
          %1646 = vst.msk [vmem:[#allocation3 + $0x78] sm:$0xff] %vm1630, %v1629
          %vm1647 = vcmask 7168
          %1648 = vst.msk [vmem:[#allocation2] sm:$0xff] %vm1647, %v1053
          %1649 = vst.msk [vmem:[#allocation2 + $0x8] sm:$0xff] %vm1647, %v1054
          %1650 = vst.msk [vmem:[#allocation2 + $0x10] sm:$0xff] %vm1647, %v1055
          %1651 = vst.msk [vmem:[#allocation2 + $0x18] sm:$0xff] %vm1647, %v1056
          %1652 = vst.msk [vmem:[#allocation2 + $0x20] sm:$0xff] %vm1647, %v1057
          %1653 = vst.msk [vmem:[#allocation2 + $0x28] sm:$0xff] %vm1647, %v1058
          %1654 = vst.msk [vmem:[#allocation2 + $0x30] sm:$0xff] %vm1647, %v1059
          %1655 = vst.msk [vmem:[#allocation2 + $0x38] sm:$0xff] %vm1647, %v1060
          %1656 = vst.msk [vmem:[#allocation2 + $0x40] sm:$0xff] %vm1647, %v1061
          %1657 = vst.msk [vmem:[#allocation2 + $0x48] sm:$0xff] %vm1647, %v1062
          %1658 = vst.msk [vmem:[#allocation2 + $0x50] sm:$0xff] %vm1647, %v1063
          %1659 = vst.msk [vmem:[#allocation2 + $0x58] sm:$0xff] %vm1647, %v1064
          %1660 = vst.msk [vmem:[#allocation2 + $0x60] sm:$0xff] %vm1647, %v1065
          %1661 = vst.msk [vmem:[#allocation2 + $0x68] sm:$0xff] %vm1647, %v1066
          %1662 = vst.msk [vmem:[#allocation2 + $0x70] sm:$0xff] %vm1647, %v1067
          %1663 = vst.msk [vmem:[#allocation2 + $0x78] sm:$0xff] %vm1647, %v1068
          %1664 = vset.pattern.permute.xlu0 1
          %1665 = vperm.xlu0 %1664, %v665
          %v1666 = vpop.permute.xlu0 %1665
          %1668 = vset.pattern.permute.xlu0 1
          %1669 = vperm.xlu0 %1668, %v666
          %v1670 = vpop.permute.xlu0 %1669
          %1672 = vset.pattern.permute.xlu0 1
          %1673 = vperm.xlu0 %1672, %v667
          %v1674 = vpop.permute.xlu0 %1673
          %1676 = vset.pattern.permute.xlu0 1
          %1677 = vperm.xlu0 %1676, %v668
          %v1678 = vpop.permute.xlu0 %1677
          %1680 = vset.pattern.permute.xlu0 1
          %1681 = vperm.xlu0 %1680, %v669
          %v1682 = vpop.permute.xlu0 %1681
          %1684 = vset.pattern.permute.xlu0 1
          %1685 = vperm.xlu0 %1684, %v670
          %v1686 = vpop.permute.xlu0 %1685
          %1688 = vset.pattern.permute.xlu0 1
          %1689 = vperm.xlu0 %1688, %v671
          %v1690 = vpop.permute.xlu0 %1689
          %1692 = vset.pattern.permute.xlu0 1
          %1693 = vperm.xlu0 %1692, %v672
          %v1694 = vpop.permute.xlu0 %1693
          %1696 = vset.pattern.permute.xlu0 1
          %1697 = vperm.xlu0 %1696, %v673
          %v1698 = vpop.permute.xlu0 %1697
          %1700 = vset.pattern.permute.xlu0 1
          %1701 = vperm.xlu0 %1700, %v674
          %v1702 = vpop.permute.xlu0 %1701
          %1704 = vset.pattern.permute.xlu0 1
          %1705 = vperm.xlu0 %1704, %v675
          %v1706 = vpop.permute.xlu0 %1705
          %1708 = vset.pattern.permute.xlu0 1
          %1709 = vperm.xlu0 %1708, %v676
          %v1710 = vpop.permute.xlu0 %1709
          %1712 = vset.pattern.permute.xlu0 1
          %1713 = vperm.xlu0 %1712, %v677
          %v1714 = vpop.permute.xlu0 %1713
          %1716 = vset.pattern.permute.xlu0 1
          %1717 = vperm.xlu0 %1716, %v678
          %v1718 = vpop.permute.xlu0 %1717
          %1720 = vset.pattern.permute.xlu0 1
          %1721 = vperm.xlu0 %1720, %v679
          %v1722 = vpop.permute.xlu0 %1721
          %1724 = vset.pattern.permute.xlu0 1
          %1725 = vperm.xlu0 %1724, %v680
          %v1726 = vpop.permute.xlu0 %1725
          %v1728 = vlaneseq
          %v1729 = vshrl.u32 %v1728, 7
          %v1730 = vsub.s32 1, %v1729
          %v1731 = vrot.slane %v681, %v1730
          %v1732 = vlaneseq
          %v1733 = vshrl.u32 %v1732, 7
          %v1734 = vsub.s32 5, %v1733
          %v1735 = vrot.slane %v681, %v1734
          %v1738 = vlaneseq
          %v1739 = vshrl.u32 %v1738, 7
          %v1740 = vsub.s32 1, %v1739
          %v1741 = vrot.slane %v1731, %v1740
          %v1742 = vlaneseq
          %v1743 = vshrl.u32 %v1742, 7
          %v1744 = vsub.s32 1, %v1743
          %v1745 = vrot.slane %v1735, %v1744
          %v1746 = vadd.f32 %v1666, %v1741
          %v1747 = vadd.f32 %v1666, %v1745
          %v1748 = vadd.f32 %v1670, %v1741
          %v1749 = vadd.f32 %v1670, %v1745
          %v1750 = vadd.f32 %v1674, %v1741
          %v1751 = vadd.f32 %v1674, %v1745
          %v1752 = vadd.f32 %v1678, %v1741
          %v1753 = vadd.f32 %v1678, %v1745
          %v1754 = vadd.f32 %v1682, %v1741
          %v1755 = vadd.f32 %v1682, %v1745
          %v1756 = vadd.f32 %v1686, %v1741
          %v1757 = vadd.f32 %v1686, %v1745
          %v1758 = vadd.f32 %v1690, %v1741
          %v1759 = vadd.f32 %v1690, %v1745
          %v1760 = vadd.f32 %v1694, %v1741
          %v1761 = vadd.f32 %v1694, %v1745
          %v1762 = vadd.f32 %v1698, %v1741
          %v1763 = vadd.f32 %v1698, %v1745
          %v1764 = vadd.f32 %v1702, %v1741
          %v1765 = vadd.f32 %v1702, %v1745
          %v1766 = vadd.f32 %v1706, %v1741
          %v1767 = vadd.f32 %v1706, %v1745
          %v1768 = vadd.f32 %v1710, %v1741
          %v1769 = vadd.f32 %v1710, %v1745
          %v1770 = vadd.f32 %v1714, %v1741
          %v1771 = vadd.f32 %v1714, %v1745
          %v1772 = vadd.f32 %v1718, %v1741
          %v1773 = vadd.f32 %v1718, %v1745
          %v1774 = vadd.f32 %v1722, %v1741
          %v1775 = vadd.f32 %v1722, %v1745
          %v1776 = vadd.f32 %v1726, %v1741
          %v1777 = vadd.f32 %v1726, %v1745
          %v1778 = vmul.f32 %v1746, 0.2
          %v1779 = vmul.f32 %v1747, 0.2
          %v1780 = vmul.f32 %v1748, 0.2
          %v1781 = vmul.f32 %v1749, 0.2
          %v1782 = vmul.f32 %v1750, 0.2
          %v1783 = vmul.f32 %v1751, 0.2
          %v1784 = vmul.f32 %v1752, 0.2
          %v1785 = vmul.f32 %v1753, 0.2
          %v1786 = vmul.f32 %v1754, 0.2
          %v1787 = vmul.f32 %v1755, 0.2
          %v1788 = vmul.f32 %v1756, 0.2
          %v1789 = vmul.f32 %v1757, 0.2
          %v1790 = vmul.f32 %v1758, 0.2
          %v1791 = vmul.f32 %v1759, 0.2
          %v1792 = vmul.f32 %v1760, 0.2
          %v1793 = vmul.f32 %v1761, 0.2
          %v1794 = vmul.f32 %v1762, 0.2
          %v1795 = vmul.f32 %v1763, 0.2
          %v1796 = vmul.f32 %v1764, 0.2
          %v1797 = vmul.f32 %v1765, 0.2
          %v1798 = vmul.f32 %v1766, 0.2
          %v1799 = vmul.f32 %v1767, 0.2
          %v1800 = vmul.f32 %v1768, 0.2
          %v1801 = vmul.f32 %v1769, 0.2
          %v1802 = vmul.f32 %v1770, 0.2
          %v1803 = vmul.f32 %v1771, 0.2
          %v1804 = vmul.f32 %v1772, 0.2
          %v1805 = vmul.f32 %v1773, 0.2
          %v1806 = vmul.f32 %v1774, 0.2
          %v1807 = vmul.f32 %v1775, 0.2
          %v1808 = vmul.f32 %v1776, 0.2
          %v1809 = vmul.f32 %v1777, 0.2
          %v1810 = vmax.f32 %v1746, %v1778
          %v1811 = vmax.f32 %v1747, %v1779
          %v1812 = vmax.f32 %v1748, %v1780
          %v1813 = vmax.f32 %v1749, %v1781
          %v1814 = vmax.f32 %v1750, %v1782
          %v1815 = vmax.f32 %v1751, %v1783
          %v1816 = vmax.f32 %v1752, %v1784
          %v1817 = vmax.f32 %v1753, %v1785
          %v1818 = vmax.f32 %v1754, %v1786
          %v1819 = vmax.f32 %v1755, %v1787
          %v1820 = vmax.f32 %v1756, %v1788
          %v1821 = vmax.f32 %v1757, %v1789
          %v1822 = vmax.f32 %v1758, %v1790
          %v1823 = vmax.f32 %v1759, %v1791
          %v1824 = vmax.f32 %v1760, %v1792
          %v1825 = vmax.f32 %v1761, %v1793
          %v1826 = vmax.f32 %v1762, %v1794
          %v1827 = vmax.f32 %v1763, %v1795
          %v1828 = vmax.f32 %v1764, %v1796
          %v1829 = vmax.f32 %v1765, %v1797
          %v1830 = vmax.f32 %v1766, %v1798
          %v1831 = vmax.f32 %v1767, %v1799
          %v1832 = vmax.f32 %v1768, %v1800
          %v1833 = vmax.f32 %v1769, %v1801
          %v1834 = vmax.f32 %v1770, %v1802
          %v1835 = vmax.f32 %v1771, %v1803
          %v1836 = vmax.f32 %v1772, %v1804
          %v1837 = vmax.f32 %v1773, %v1805
          %v1838 = vmax.f32 %v1774, %v1806
          %v1839 = vmax.f32 %v1775, %v1807
          %v1840 = vmax.f32 %v1776, %v1808
          %v1841 = vmax.f32 %v1777, %v1809
          %v1842 = vadd.f32 %v1810, %v730
          %v1843 = vadd.f32 %v1811, %v731
          %v1844 = vadd.f32 %v1812, %v732
          %v1845 = vadd.f32 %v1813, %v733
          %v1846 = vadd.f32 %v1814, %v734
          %v1847 = vadd.f32 %v1815, %v735
          %v1848 = vadd.f32 %v1816, %v736
          %v1849 = vadd.f32 %v1817, %v737
          %v1850 = vadd.f32 %v1818, %v738
          %v1851 = vadd.f32 %v1819, %v739
          %v1852 = vadd.f32 %v1820, %v740
          %v1853 = vadd.f32 %v1821, %v741
          %v1854 = vadd.f32 %v1822, %v742
          %v1855 = vadd.f32 %v1823, %v743
          %v1856 = vadd.f32 %v1824, %v744
          %v1857 = vadd.f32 %v1825, %v745
          %v1858 = vadd.f32 %v1826, %v746
          %v1859 = vadd.f32 %v1827, %v747
          %v1860 = vadd.f32 %v1828, %v748
          %v1861 = vadd.f32 %v1829, %v749
          %v1862 = vadd.f32 %v1830, %v750
          %v1863 = vadd.f32 %v1831, %v751
          %v1864 = vadd.f32 %v1832, %v752
          %v1865 = vadd.f32 %v1833, %v753
          %v1866 = vadd.f32 %v1834, %v754
          %v1867 = vadd.f32 %v1835, %v755
          %v1868 = vadd.f32 %v1836, %v756
          %v1869 = vadd.f32 %v1837, %v757
          %v1870 = vadd.f32 %v1838, %v758
          %v1871 = vadd.f32 %v1839, %v759
          %v1872 = vadd.f32 %v1840, %v760
          %v1873 = vadd.f32 %v1841, %v761
          %s1874 = scalar_lea.vmem [#allocation2], 128
          %v1875 = vld [vmem:[%s1874] sm:$0xff]
          %v1876 = vld [vmem:[%s1874 + $0x8] sm:$0xff]
          %v1877 = vld [vmem:[%s1874 + $0x10] sm:$0xff]
          %v1878 = vld [vmem:[%s1874 + $0x18] sm:$0xff]
          %v1879 = vld [vmem:[%s1874 + $0x20] sm:$0xff]
          %v1880 = vld [vmem:[%s1874 + $0x28] sm:$0xff]
          %v1881 = vld [vmem:[%s1874 + $0x30] sm:$0xff]
          %v1882 = vld [vmem:[%s1874 + $0x38] sm:$0xff]
          %v1883 = vld [vmem:[%s1874 + $0x40] sm:$0xff]
          %v1884 = vld [vmem:[%s1874 + $0x48] sm:$0xff]
          %v1885 = vld [vmem:[%s1874 + $0x50] sm:$0xff]
          %v1886 = vld [vmem:[%s1874 + $0x58] sm:$0xff]
          %v1887 = vld [vmem:[%s1874 + $0x60] sm:$0xff]
          %v1888 = vld [vmem:[%s1874 + $0x68] sm:$0xff]
          %v1889 = vld [vmem:[%s1874 + $0x70] sm:$0xff]
          %v1890 = vld [vmem:[%s1874 + $0x78] sm:$0xff]
          %v1891 = vmax.f32 %v1842, %v1843
          %1892 = vmax.xlane.f32.xlu0 %v1891
          %v1893 = vpop.xlane.xlu0 %1892
          %v1894 = vmax.f32 %v1844, %v1845
          %1895 = vmax.xlane.f32.xlu0 %v1894
          %v1896 = vpop.xlane.xlu0 %1895
          %v1897 = vmax.f32 %v1846, %v1847
          %1898 = vmax.xlane.f32.xlu0 %v1897
          %v1899 = vpop.xlane.xlu0 %1898
          %v1900 = vmax.f32 %v1848, %v1849
          %1901 = vmax.xlane.f32.xlu0 %v1900
          %v1902 = vpop.xlane.xlu0 %1901
          %v1903 = vmax.f32 %v1850, %v1851
          %1904 = vmax.xlane.f32.xlu0 %v1903
          %v1905 = vpop.xlane.xlu0 %1904
          %v1906 = vmax.f32 %v1852, %v1853
          %1907 = vmax.xlane.f32.xlu0 %v1906
          %v1908 = vpop.xlane.xlu0 %1907
          %v1909 = vmax.f32 %v1854, %v1855
          %1910 = vmax.xlane.f32.xlu0 %v1909
          %v1911 = vpop.xlane.xlu0 %1910
          %v1912 = vmax.f32 %v1856, %v1857
          %1913 = vmax.xlane.f32.xlu0 %v1912
          %v1914 = vpop.xlane.xlu0 %1913
          %v1915 = vmax.f32 %v1858, %v1859
          %1916 = vmax.xlane.f32.xlu0 %v1915
          %v1917 = vpop.xlane.xlu0 %1916
          %v1918 = vmax.f32 %v1860, %v1861
          %1919 = vmax.xlane.f32.xlu0 %v1918
          %v1920 = vpop.xlane.xlu0 %1919
          %v1921 = vmax.f32 %v1862, %v1863
          %1922 = vmax.xlane.f32.xlu0 %v1921
          %v1923 = vpop.xlane.xlu0 %1922
          %v1924 = vmax.f32 %v1864, %v1865
          %1925 = vmax.xlane.f32.xlu0 %v1924
          %v1926 = vpop.xlane.xlu0 %1925
          %v1927 = vmax.f32 %v1866, %v1867
          %1928 = vmax.xlane.f32.xlu0 %v1927
          %v1929 = vpop.xlane.xlu0 %1928
          %v1930 = vmax.f32 %v1868, %v1869
          %1931 = vmax.xlane.f32.xlu0 %v1930
          %v1932 = vpop.xlane.xlu0 %1931
          %v1933 = vmax.f32 %v1870, %v1871
          %1934 = vmax.xlane.f32.xlu0 %v1933
          %v1935 = vpop.xlane.xlu0 %1934
          %v1936 = vmax.f32 %v1872, %v1873
          %1937 = vmax.xlane.f32.xlu0 %v1936
          %v1938 = vpop.xlane.xlu0 %1937
          %v1939 = vmax.f32 %v1875, %v1893
          %v1940 = vmax.f32 %v1876, %v1896
          %v1941 = vmax.f32 %v1877, %v1899
          %v1942 = vmax.f32 %v1878, %v1902
          %v1943 = vmax.f32 %v1879, %v1905
          %v1944 = vmax.f32 %v1880, %v1908
          %v1945 = vmax.f32 %v1881, %v1911
          %v1946 = vmax.f32 %v1882, %v1914
          %v1947 = vmax.f32 %v1883, %v1917
          %v1948 = vmax.f32 %v1884, %v1920
          %v1949 = vmax.f32 %v1885, %v1923
          %v1950 = vmax.f32 %v1886, %v1926
          %v1951 = vmax.f32 %v1887, %v1929
          %v1952 = vmax.f32 %v1888, %v1932
          %v1953 = vmax.f32 %v1889, %v1935
          %v1954 = vmax.f32 %v1890, %v1938
          %v1955 = vsub.f32 %v1875, %v1939
          %v1956 = vsub.f32 %v1876, %v1940
          %v1957 = vsub.f32 %v1877, %v1941
          %v1958 = vsub.f32 %v1878, %v1942
          %v1959 = vsub.f32 %v1879, %v1943
          %v1960 = vsub.f32 %v1880, %v1944
          %v1961 = vsub.f32 %v1881, %v1945
          %v1962 = vsub.f32 %v1882, %v1946
          %v1963 = vsub.f32 %v1883, %v1947
          %v1964 = vsub.f32 %v1884, %v1948
          %v1965 = vsub.f32 %v1885, %v1949
          %v1966 = vsub.f32 %v1886, %v1950
          %v1967 = vsub.f32 %v1887, %v1951
          %v1968 = vsub.f32 %v1888, %v1952
          %v1969 = vsub.f32 %v1889, %v1953
          %v1970 = vsub.f32 %v1890, %v1954
          %v1971 = vmul.f32 %v1955, 1.442695
          %v1972 = vpow.pop %v1971
          %v1973 = vmul.f32 %v1956, 1.442695
          %v1974 = vpow.pop %v1973
          %v1975 = vmul.f32 %v1957, 1.442695
          %v1976 = vpow.pop %v1975
          %v1977 = vmul.f32 %v1958, 1.442695
          %v1978 = vpow.pop %v1977
          %v1979 = vmul.f32 %v1959, 1.442695
          %v1980 = vpow.pop %v1979
          %v1981 = vmul.f32 %v1960, 1.442695
          %v1982 = vpow.pop %v1981
          %v1983 = vmul.f32 %v1961, 1.442695
          %v1984 = vpow.pop %v1983
          %v1985 = vmul.f32 %v1962, 1.442695
          %v1986 = vpow.pop %v1985
          %v1987 = vmul.f32 %v1963, 1.442695
          %v1988 = vpow.pop %v1987
          %v1989 = vmul.f32 %v1964, 1.442695
          %v1990 = vpow.pop %v1989
          %v1991 = vmul.f32 %v1965, 1.442695
          %v1992 = vpow.pop %v1991
          %v1993 = vmul.f32 %v1966, 1.442695
          %v1994 = vpow.pop %v1993
          %v1995 = vmul.f32 %v1967, 1.442695
          %v1996 = vpow.pop %v1995
          %v1997 = vmul.f32 %v1968, 1.442695
          %v1998 = vpow.pop %v1997
          %v1999 = vmul.f32 %v1969, 1.442695
          %v2000 = vpow.pop %v1999
          %v2001 = vmul.f32 %v1970, 1.442695
          %v2002 = vpow.pop %v2001
          %2004 = vset.pattern.permute.xlu0 0
          %2005 = vperm.xlu0 %2004, %v1939
          %v2006 = vpop.permute.xlu0 %2005
          %2009 = vset.pattern.permute.xlu0 0
          %2010 = vperm.xlu0 %2009, %v1940
          %v2011 = vpop.permute.xlu0 %2010
          %2014 = vset.pattern.permute.xlu0 0
          %2015 = vperm.xlu0 %2014, %v1941
          %v2016 = vpop.permute.xlu0 %2015
          %2019 = vset.pattern.permute.xlu0 0
          %2020 = vperm.xlu0 %2019, %v1942
          %v2021 = vpop.permute.xlu0 %2020
          %2024 = vset.pattern.permute.xlu0 0
          %2025 = vperm.xlu0 %2024, %v1943
          %v2026 = vpop.permute.xlu0 %2025
          %2029 = vset.pattern.permute.xlu0 0
          %2030 = vperm.xlu0 %2029, %v1944
          %v2031 = vpop.permute.xlu0 %2030
          %2034 = vset.pattern.permute.xlu0 0
          %2035 = vperm.xlu0 %2034, %v1945
          %v2036 = vpop.permute.xlu0 %2035
          %2039 = vset.pattern.permute.xlu0 0
          %2040 = vperm.xlu0 %2039, %v1946
          %v2041 = vpop.permute.xlu0 %2040
          %2044 = vset.pattern.permute.xlu0 0
          %2045 = vperm.xlu0 %2044, %v1947
          %v2046 = vpop.permute.xlu0 %2045
          %2049 = vset.pattern.permute.xlu0 0
          %2050 = vperm.xlu0 %2049, %v1948
          %v2051 = vpop.permute.xlu0 %2050
          %2054 = vset.pattern.permute.xlu0 0
          %2055 = vperm.xlu0 %2054, %v1949
          %v2056 = vpop.permute.xlu0 %2055
          %2059 = vset.pattern.permute.xlu0 0
          %2060 = vperm.xlu0 %2059, %v1950
          %v2061 = vpop.permute.xlu0 %2060
          %2064 = vset.pattern.permute.xlu0 0
          %2065 = vperm.xlu0 %2064, %v1951
          %v2066 = vpop.permute.xlu0 %2065
          %2069 = vset.pattern.permute.xlu0 0
          %2070 = vperm.xlu0 %2069, %v1952
          %v2071 = vpop.permute.xlu0 %2070
          %2074 = vset.pattern.permute.xlu0 0
          %2075 = vperm.xlu0 %2074, %v1953
          %v2076 = vpop.permute.xlu0 %2075
          %2079 = vset.pattern.permute.xlu0 0
          %2080 = vperm.xlu0 %2079, %v1954
          %v2081 = vpop.permute.xlu0 %2080
          %v2083 = vsub.f32 %v1842, %v2006
          %v2084 = vsub.f32 %v1843, %v2006
          %v2085 = vsub.f32 %v1844, %v2011
          %v2086 = vsub.f32 %v1845, %v2011
          %v2087 = vsub.f32 %v1846, %v2016
          %v2088 = vsub.f32 %v1847, %v2016
          %v2089 = vsub.f32 %v1848, %v2021
          %v2090 = vsub.f32 %v1849, %v2021
          %v2091 = vsub.f32 %v1850, %v2026
          %v2092 = vsub.f32 %v1851, %v2026
          %v2093 = vsub.f32 %v1852, %v2031
          %v2094 = vsub.f32 %v1853, %v2031
          %v2095 = vsub.f32 %v1854, %v2036
          %v2096 = vsub.f32 %v1855, %v2036
          %v2097 = vsub.f32 %v1856, %v2041
          %v2098 = vsub.f32 %v1857, %v2041
          %v2099 = vsub.f32 %v1858, %v2046
          %v2100 = vsub.f32 %v1859, %v2046
          %v2101 = vsub.f32 %v1860, %v2051
          %v2102 = vsub.f32 %v1861, %v2051
          %v2103 = vsub.f32 %v1862, %v2056
          %v2104 = vsub.f32 %v1863, %v2056
          %v2105 = vsub.f32 %v1864, %v2061
          %v2106 = vsub.f32 %v1865, %v2061
          %v2107 = vsub.f32 %v1866, %v2066
          %v2108 = vsub.f32 %v1867, %v2066
          %v2109 = vsub.f32 %v1868, %v2071
          %v2110 = vsub.f32 %v1869, %v2071
          %v2111 = vsub.f32 %v1870, %v2076
          %v2112 = vsub.f32 %v1871, %v2076
          %v2113 = vsub.f32 %v1872, %v2081
          %v2114 = vsub.f32 %v1873, %v2081
          %v2115 = vmul.f32 %v2083, 1.442695
          %v2116 = vpow.pop %v2115
          %v2117 = vmul.f32 %v2084, 1.442695
          %v2118 = vpow.pop %v2117
          %v2119 = vmul.f32 %v2085, 1.442695
          %v2120 = vpow.pop %v2119
          %v2121 = vmul.f32 %v2086, 1.442695
          %v2122 = vpow.pop %v2121
          %v2123 = vmul.f32 %v2087, 1.442695
          %v2124 = vpow.pop %v2123
          %v2125 = vmul.f32 %v2088, 1.442695
          %v2126 = vpow.pop %v2125
          %v2127 = vmul.f32 %v2089, 1.442695
          %v2128 = vpow.pop %v2127
          %v2129 = vmul.f32 %v2090, 1.442695
          %v2130 = vpow.pop %v2129
          %v2131 = vmul.f32 %v2091, 1.442695
          %v2132 = vpow.pop %v2131
          %v2133 = vmul.f32 %v2092, 1.442695
          %v2134 = vpow.pop %v2133
          %v2135 = vmul.f32 %v2093, 1.442695
          %v2136 = vpow.pop %v2135
          %v2137 = vmul.f32 %v2094, 1.442695
          %v2138 = vpow.pop %v2137
          %v2139 = vmul.f32 %v2095, 1.442695
          %v2140 = vpow.pop %v2139
          %v2141 = vmul.f32 %v2096, 1.442695
          %v2142 = vpow.pop %v2141
          %v2143 = vmul.f32 %v2097, 1.442695
          %v2144 = vpow.pop %v2143
          %v2145 = vmul.f32 %v2098, 1.442695
          %v2146 = vpow.pop %v2145
          %v2147 = vmul.f32 %v2099, 1.442695
          %v2148 = vpow.pop %v2147
          %v2149 = vmul.f32 %v2100, 1.442695
          %v2150 = vpow.pop %v2149
          %v2151 = vmul.f32 %v2101, 1.442695
          %v2152 = vpow.pop %v2151
          %v2153 = vmul.f32 %v2102, 1.442695
          %v2154 = vpow.pop %v2153
          %v2155 = vmul.f32 %v2103, 1.442695
          %v2156 = vpow.pop %v2155
          %v2157 = vmul.f32 %v2104, 1.442695
          %v2158 = vpow.pop %v2157
          %v2159 = vmul.f32 %v2105, 1.442695
          %v2160 = vpow.pop %v2159
          %v2161 = vmul.f32 %v2106, 1.442695
          %v2162 = vpow.pop %v2161
          %v2163 = vmul.f32 %v2107, 1.442695
          %v2164 = vpow.pop %v2163
          %v2165 = vmul.f32 %v2108, 1.442695
          %v2166 = vpow.pop %v2165
          %v2167 = vmul.f32 %v2109, 1.442695
          %v2168 = vpow.pop %v2167
          %v2169 = vmul.f32 %v2110, 1.442695
          %v2170 = vpow.pop %v2169
          %v2171 = vmul.f32 %v2111, 1.442695
          %v2172 = vpow.pop %v2171
          %v2173 = vmul.f32 %v2112, 1.442695
          %v2174 = vpow.pop %v2173
          %v2175 = vmul.f32 %v2113, 1.442695
          %v2176 = vpow.pop %v2175
          %v2177 = vmul.f32 %v2114, 1.442695
          %v2178 = vpow.pop %v2177
          %v2179 = vpack.c.bf16 %v2120, %v2116
          %v2180 = vpack.c.bf16 %v2122, %v2118
          %v2181 = vpack.c.bf16 %v2128, %v2124
          %v2182 = vpack.c.bf16 %v2130, %v2126
          %v2183 = vpack.c.bf16 %v2136, %v2132
          %v2184 = vpack.c.bf16 %v2138, %v2134
          %v2185 = vpack.c.bf16 %v2144, %v2140
          %v2186 = vpack.c.bf16 %v2146, %v2142
          %v2187 = vpack.c.bf16 %v2152, %v2148
          %v2188 = vpack.c.bf16 %v2154, %v2150
          %v2189 = vpack.c.bf16 %v2160, %v2156
          %v2190 = vpack.c.bf16 %v2162, %v2158
          %v2191 = vpack.c.bf16 %v2168, %v2164
          %v2192 = vpack.c.bf16 %v2170, %v2166
          %v2193 = vpack.c.bf16 %v2176, %v2172
          %v2194 = vpack.c.bf16 %v2178, %v2174
          %s2195 = scalar_lea.vmem [#allocation3], 128
          %v2196 = vld [vmem:[%s2195] sm:$0xff]
          %v2197 = vld [vmem:[%s2195 + $0x8] sm:$0xff]
          %v2198 = vld [vmem:[%s2195 + $0x10] sm:$0xff]
          %v2199 = vld [vmem:[%s2195 + $0x18] sm:$0xff]
          %v2200 = vld [vmem:[%s2195 + $0x20] sm:$0xff]
          %v2201 = vld [vmem:[%s2195 + $0x28] sm:$0xff]
          %v2202 = vld [vmem:[%s2195 + $0x30] sm:$0xff]
          %v2203 = vld [vmem:[%s2195 + $0x38] sm:$0xff]
          %v2204 = vld [vmem:[%s2195 + $0x40] sm:$0xff]
          %v2205 = vld [vmem:[%s2195 + $0x48] sm:$0xff]
          %v2206 = vld [vmem:[%s2195 + $0x50] sm:$0xff]
          %v2207 = vld [vmem:[%s2195 + $0x58] sm:$0xff]
          %v2208 = vld [vmem:[%s2195 + $0x60] sm:$0xff]
          %v2209 = vld [vmem:[%s2195 + $0x68] sm:$0xff]
          %v2210 = vld [vmem:[%s2195 + $0x70] sm:$0xff]
          %v2211 = vld [vmem:[%s2195 + $0x78] sm:$0xff]
          %2213 = vset.pattern.permute.xlu0 0
          %2214 = vperm.xlu0 %2213, %v1972
          %v2215 = vpop.permute.xlu0 %2214
          %2218 = vset.pattern.permute.xlu0 0
          %2219 = vperm.xlu0 %2218, %v1974
          %v2220 = vpop.permute.xlu0 %2219
          %2223 = vset.pattern.permute.xlu0 0
          %2224 = vperm.xlu0 %2223, %v1976
          %v2225 = vpop.permute.xlu0 %2224
          %2228 = vset.pattern.permute.xlu0 0
          %2229 = vperm.xlu0 %2228, %v1978
          %v2230 = vpop.permute.xlu0 %2229
          %2233 = vset.pattern.permute.xlu0 0
          %2234 = vperm.xlu0 %2233, %v1980
          %v2235 = vpop.permute.xlu0 %2234
          %2238 = vset.pattern.permute.xlu0 0
          %2239 = vperm.xlu0 %2238, %v1982
          %v2240 = vpop.permute.xlu0 %2239
          %2243 = vset.pattern.permute.xlu0 0
          %2244 = vperm.xlu0 %2243, %v1984
          %v2245 = vpop.permute.xlu0 %2244
          %2248 = vset.pattern.permute.xlu0 0
          %2249 = vperm.xlu0 %2248, %v1986
          %v2250 = vpop.permute.xlu0 %2249
          %2253 = vset.pattern.permute.xlu0 0
          %2254 = vperm.xlu0 %2253, %v1988
          %v2255 = vpop.permute.xlu0 %2254
          %2258 = vset.pattern.permute.xlu0 0
          %2259 = vperm.xlu0 %2258, %v1990
          %v2260 = vpop.permute.xlu0 %2259
          %2263 = vset.pattern.permute.xlu0 0
          %2264 = vperm.xlu0 %2263, %v1992
          %v2265 = vpop.permute.xlu0 %2264
          %2268 = vset.pattern.permute.xlu0 0
          %2269 = vperm.xlu0 %2268, %v1994
          %v2270 = vpop.permute.xlu0 %2269
          %2273 = vset.pattern.permute.xlu0 0
          %2274 = vperm.xlu0 %2273, %v1996
          %v2275 = vpop.permute.xlu0 %2274
          %2278 = vset.pattern.permute.xlu0 0
          %2279 = vperm.xlu0 %2278, %v1998
          %v2280 = vpop.permute.xlu0 %2279
          %2283 = vset.pattern.permute.xlu0 0
          %2284 = vperm.xlu0 %2283, %v2000
          %v2285 = vpop.permute.xlu0 %2284
          %2288 = vset.pattern.permute.xlu0 0
          %2289 = vperm.xlu0 %2288, %v2002
          %v2290 = vpop.permute.xlu0 %2289
          %v2292 = vmul.f32 %v2215, %v2196
          %v2293 = vmul.f32 %v2220, %v2197
          %v2294 = vmul.f32 %v2225, %v2198
          %v2295 = vmul.f32 %v2230, %v2199
          %v2296 = vmul.f32 %v2235, %v2200
          %v2297 = vmul.f32 %v2240, %v2201
          %v2298 = vmul.f32 %v2245, %v2202
          %v2299 = vmul.f32 %v2250, %v2203
          %v2300 = vmul.f32 %v2255, %v2204
          %v2301 = vmul.f32 %v2260, %v2205
          %v2302 = vmul.f32 %v2265, %v2206
          %v2303 = vmul.f32 %v2270, %v2207
          %v2304 = vmul.f32 %v2275, %v2208
          %v2305 = vmul.f32 %v2280, %v2209
          %v2306 = vmul.f32 %v2285, %v2210
          %v2307 = vmul.f32 %v2290, %v2211
          %2308 = vrot.lane.b32.xlu0 %v1485, 112
          %v2309 = vpop.permute.xlu0 %2308
          %2310 = vrot.lane.b32.xlu0 %v1486, 112
          %v2311 = vpop.permute.xlu0 %2310
          %2312 = vrot.lane.b32.xlu0 %v1487, 112
          %v2313 = vpop.permute.xlu0 %2312
          %2314 = vrot.lane.b32.xlu0 %v1488, 112
          %v2315 = vpop.permute.xlu0 %2314
          %2316 = vrot.lane.b32.xlu0 %v1489, 112
          %v2317 = vpop.permute.xlu0 %2316
          %2318 = vrot.lane.b32.xlu0 %v1490, 112
          %v2319 = vpop.permute.xlu0 %2318
          %2320 = vrot.lane.b32.xlu0 %v1491, 112
          %v2321 = vpop.permute.xlu0 %2320
          %2322 = vrot.lane.b32.xlu0 %v1492, 112
          %v2323 = vpop.permute.xlu0 %2322
          %2324 = vrot.lane.b32.xlu0 %v1493, 112
          %v2325 = vpop.permute.xlu0 %2324
          %2326 = vrot.lane.b32.xlu0 %v1494, 112
          %v2327 = vpop.permute.xlu0 %2326
          %2328 = vrot.lane.b32.xlu0 %v1495, 112
          %v2329 = vpop.permute.xlu0 %2328
          %2330 = vrot.lane.b32.xlu0 %v1496, 112
          %v2331 = vpop.permute.xlu0 %2330
          %2332 = vrot.lane.b32.xlu0 %v1497, 112
          %v2333 = vpop.permute.xlu0 %2332
          %2334 = vrot.lane.b32.xlu0 %v1498, 112
          %v2335 = vpop.permute.xlu0 %2334
          %2336 = vrot.lane.b32.xlu0 %v1499, 112
          %v2337 = vpop.permute.xlu0 %2336
          %2338 = vrot.lane.b32.xlu0 %v1500, 112
          %v2339 = vpop.permute.xlu0 %2338
          %2356 = vmatprep.subr.bf16.mxu0 0
          %2357 = vmatpush1.bf16.msra.mxu0 %v2309
          %2358 = vmatprep.subr.bf16.mxu0 0
          %2359 = vmatpush1.bf16.msra.mxu0 %v2311
          %2360 = vmatprep.subr.bf16.mxu0 0
          %2361 = vmatpush1.bf16.msra.mxu0 %v2313
          %2362 = vmatprep.subr.bf16.mxu0 0
          %2363 = vmatpush1.bf16.msra.mxu0 %v2315
          %2364 = vmatprep.subr.bf16.mxu0 0
          %2365 = vmatpush1.bf16.msra.mxu0 %v2317
          %2366 = vmatprep.subr.bf16.mxu0 0
          %2367 = vmatpush1.bf16.msra.mxu0 %v2319
          %2368 = vmatprep.subr.bf16.mxu0 0
          %2369 = vmatpush1.bf16.msra.mxu0 %v2321
          %2370 = vmatprep.subr.bf16.mxu0 0
          %2371 = vmatpush1.bf16.msra.mxu0 %v2323
          %2372 = vmatprep.subr.bf16.mxu0 0
          %2373 = vmatpush1.bf16.msra.mxu0 %v2325
          %2374 = vmatprep.subr.bf16.mxu0 0
          %2375 = vmatpush1.bf16.msra.mxu0 %v2327
          %2376 = vmatprep.subr.bf16.mxu0 0
          %2377 = vmatpush1.bf16.msra.mxu0 %v2329
          %2378 = vmatprep.subr.bf16.mxu0 0
          %2379 = vmatpush1.bf16.msra.mxu0 %v2331
          %2380 = vmatprep.subr.bf16.mxu0 0
          %2381 = vmatpush1.bf16.msra.mxu0 %v2333
          %2382 = vmatprep.subr.bf16.mxu0 0
          %2383 = vmatpush1.bf16.msra.mxu0 %v2335
          %2384 = vmatprep.subr.bf16.mxu0 0
          %2385 = vmatpush1.bf16.msra.mxu0 %v2337
          %2386 = vmatprep.subr.bf16.mxu0 0
          %2387 = vmatpush1.bf16.msra.mxu0 %v2339
          %2388 = vmatprep.mubr.bf16.mxu0 %v2180
          %2389 = vmatmul.mubr.bf16.gmra.mrb[0].mxu0 %v2179
          %v2390 = vpop.f32.mrb[0].mxu0
          %v2391 = vadd.f32 0.0, %v2390
          %v2392 = vpop.f32.mrb[0].mxu0
          %v2393 = vpop.f32.mrb[0].mxu0
          %v2394 = vadd.f32 0.0, %v2393
          %v2395 = vpop.f32.mrb[0].mxu0
          %2396 = vmatprep.mubr.bf16.mxu0 %v2182
          %2397 = vmatmul.mubr.bf16.gmra.mrb[0].mxu0 %v2181
          %v2398 = vpop.f32.mrb[0].mxu0
          %v2399 = vadd.f32 0.0, %v2398
          %v2400 = vpop.f32.mrb[0].mxu0
          %v2401 = vpop.f32.mrb[0].mxu0
          %v2402 = vadd.f32 0.0, %v2401
          %v2403 = vpop.f32.mrb[0].mxu0
          %2404 = vmatprep.mubr.bf16.mxu0 %v2184
          %2405 = vmatmul.mubr.bf16.gmra.mrb[0].mxu0 %v2183
          %v2406 = vpop.f32.mrb[0].mxu0
          %v2407 = vadd.f32 0.0, %v2406
          %v2408 = vpop.f32.mrb[0].mxu0
          %v2409 = vpop.f32.mrb[0].mxu0
          %v2410 = vadd.f32 0.0, %v2409
          %v2411 = vpop.f32.mrb[0].mxu0
          %2412 = vmatprep.mubr.bf16.mxu0 %v2186
          %2413 = vmatmul.mubr.bf16.gmra.mrb[0].mxu0 %v2185
          %v2414 = vpop.f32.mrb[0].mxu0
          %v2415 = vadd.f32 0.0, %v2414
          %v2416 = vpop.f32.mrb[0].mxu0
          %v2417 = vpop.f32.mrb[0].mxu0
          %v2418 = vadd.f32 0.0, %v2417
          %v2419 = vpop.f32.mrb[0].mxu0
          %2420 = vmatprep.mubr.bf16.mxu0 %v2188
          %2421 = vmatmul.mubr.bf16.gmra.mrb[0].mxu0 %v2187
          %v2422 = vpop.f32.mrb[0].mxu0
          %v2423 = vadd.f32 0.0, %v2422
          %v2424 = vpop.f32.mrb[0].mxu0
          %v2425 = vpop.f32.mrb[0].mxu0
          %v2426 = vadd.f32 0.0, %v2425
          %v2427 = vpop.f32.mrb[0].mxu0
          %2428 = vmatprep.mubr.bf16.mxu0 %v2190
          %2429 = vmatmul.mubr.bf16.gmra.mrb[0].mxu0 %v2189
          %v2430 = vpop.f32.mrb[0].mxu0
          %v2431 = vadd.f32 0.0, %v2430
          %v2432 = vpop.f32.mrb[0].mxu0
          %v2433 = vpop.f32.mrb[0].mxu0
          %v2434 = vadd.f32 0.0, %v2433
          %v2435 = vpop.f32.mrb[0].mxu0
          %2436 = vmatprep.mubr.bf16.mxu0 %v2192
          %2437 = vmatmul.mubr.bf16.gmra.mrb[0].mxu0 %v2191
          %v2438 = vpop.f32.mrb[0].mxu0
          %v2439 = vadd.f32 0.0, %v2438
          %v2440 = vpop.f32.mrb[0].mxu0
          %v2441 = vpop.f32.mrb[0].mxu0
          %v2442 = vadd.f32 0.0, %v2441
          %v2443 = vpop.f32.mrb[0].mxu0
          %2444 = vmatprep.mubr.bf16.mxu0 %v2194
          %2445 = vmatmul.mubr.bf16.gmra.mrb[0].mxu0 %v2193
          %v2446 = vpop.f32.mrb[0].mxu0
          %v2447 = vadd.f32 0.0, %v2446
          %v2448 = vpop.f32.mrb[0].mxu0
          %v2449 = vpop.f32.mrb[0].mxu0
          %v2450 = vadd.f32 0.0, %v2449
          %v2451 = vpop.f32.mrb[0].mxu0
          %2452 = vdwg.mxu0
          %v2453 = vadd.f32 %v2292, %v2391
          %v2454 = vadd.f32 %v2293, %v2394
          %v2455 = vadd.f32 %v2294, %v2399
          %v2456 = vadd.f32 %v2295, %v2402
          %v2457 = vadd.f32 %v2296, %v2407
          %v2458 = vadd.f32 %v2297, %v2410
          %v2459 = vadd.f32 %v2298, %v2415
          %v2460 = vadd.f32 %v2299, %v2418
          %v2461 = vadd.f32 %v2300, %v2423
          %v2462 = vadd.f32 %v2301, %v2426
          %v2463 = vadd.f32 %v2302, %v2431
          %v2464 = vadd.f32 %v2303, %v2434
          %v2465 = vadd.f32 %v2304, %v2439
          %v2466 = vadd.f32 %v2305, %v2442
          %v2467 = vadd.f32 %v2306, %v2447
          %v2468 = vadd.f32 %v2307, %v2450
          %2469 = vst.msk [vmem:[%s2195] sm:$0xff] %vm1630, %v2453
          %2470 = vst.msk [vmem:[%s2195 + $0x8] sm:$0xff] %vm1630, %v2454
          %2471 = vst.msk [vmem:[%s2195 + $0x10] sm:$0xff] %vm1630, %v2455
          %2472 = vst.msk [vmem:[%s2195 + $0x18] sm:$0xff] %vm1630, %v2456
          %2473 = vst.msk [vmem:[%s2195 + $0x20] sm:$0xff] %vm1630, %v2457
          %2474 = vst.msk [vmem:[%s2195 + $0x28] sm:$0xff] %vm1630, %v2458
          %2475 = vst.msk [vmem:[%s2195 + $0x30] sm:$0xff] %vm1630, %v2459
          %2476 = vst.msk [vmem:[%s2195 + $0x38] sm:$0xff] %vm1630, %v2460
          %2477 = vst.msk [vmem:[%s2195 + $0x40] sm:$0xff] %vm1630, %v2461
          %2478 = vst.msk [vmem:[%s2195 + $0x48] sm:$0xff] %vm1630, %v2462
          %2479 = vst.msk [vmem:[%s2195 + $0x50] sm:$0xff] %vm1630, %v2463
          %2480 = vst.msk [vmem:[%s2195 + $0x58] sm:$0xff] %vm1630, %v2464
          %2481 = vst.msk [vmem:[%s2195 + $0x60] sm:$0xff] %vm1630, %v2465
          %2482 = vst.msk [vmem:[%s2195 + $0x68] sm:$0xff] %vm1630, %v2466
          %2483 = vst.msk [vmem:[%s2195 + $0x70] sm:$0xff] %vm1630, %v2467
          %2484 = vst.msk [vmem:[%s2195 + $0x78] sm:$0xff] %vm1630, %v2468
          %2485 = vst.msk [vmem:[%s1874] sm:$0xff] %vm1647, %v1939
          %2486 = vst.msk [vmem:[%s1874 + $0x8] sm:$0xff] %vm1647, %v1940
          %2487 = vst.msk [vmem:[%s1874 + $0x10] sm:$0xff] %vm1647, %v1941
          %2488 = vst.msk [vmem:[%s1874 + $0x18] sm:$0xff] %vm1647, %v1942
          %2489 = vst.msk [vmem:[%s1874 + $0x20] sm:$0xff] %vm1647, %v1943
          %2490 = vst.msk [vmem:[%s1874 + $0x28] sm:$0xff] %vm1647, %v1944
          %2491 = vst.msk [vmem:[%s1874 + $0x30] sm:$0xff] %vm1647, %v1945
          %2492 = vst.msk [vmem:[%s1874 + $0x38] sm:$0xff] %vm1647, %v1946
          %2493 = vst.msk [vmem:[%s1874 + $0x40] sm:$0xff] %vm1647, %v1947
          %2494 = vst.msk [vmem:[%s1874 + $0x48] sm:$0xff] %vm1647, %v1948
          %2495 = vst.msk [vmem:[%s1874 + $0x50] sm:$0xff] %vm1647, %v1949
          %2496 = vst.msk [vmem:[%s1874 + $0x58] sm:$0xff] %vm1647, %v1950
          %2497 = vst.msk [vmem:[%s1874 + $0x60] sm:$0xff] %vm1647, %v1951
          %2498 = vst.msk [vmem:[%s1874 + $0x68] sm:$0xff] %vm1647, %v1952
          %2499 = vst.msk [vmem:[%s1874 + $0x70] sm:$0xff] %vm1647, %v1953
          %2500 = vst.msk [vmem:[%s1874 + $0x78] sm:$0xff] %vm1647, %v1954
          %2501 = vset.pattern.permute.xlu0 2
          %2502 = vperm.xlu0 %2501, %v665
          %v2503 = vpop.permute.xlu0 %2502
          %2505 = vset.pattern.permute.xlu0 2
          %2506 = vperm.xlu0 %2505, %v666
          %v2507 = vpop.permute.xlu0 %2506
          %2509 = vset.pattern.permute.xlu0 2
          %2510 = vperm.xlu0 %2509, %v667
          %v2511 = vpop.permute.xlu0 %2510
          %2513 = vset.pattern.permute.xlu0 2
          %2514 = vperm.xlu0 %2513, %v668
          %v2515 = vpop.permute.xlu0 %2514
          %2517 = vset.pattern.permute.xlu0 2
          %2518 = vperm.xlu0 %2517, %v669
          %v2519 = vpop.permute.xlu0 %2518
          %2521 = vset.pattern.permute.xlu0 2
          %2522 = vperm.xlu0 %2521, %v670
          %v2523 = vpop.permute.xlu0 %2522
          %2525 = vset.pattern.permute.xlu0 2
          %2526 = vperm.xlu0 %2525, %v671
          %v2527 = vpop.permute.xlu0 %2526
          %2529 = vset.pattern.permute.xlu0 2
          %2530 = vperm.xlu0 %2529, %v672
          %v2531 = vpop.permute.xlu0 %2530
          %2533 = vset.pattern.permute.xlu0 2
          %2534 = vperm.xlu0 %2533, %v673
          %v2535 = vpop.permute.xlu0 %2534
          %2537 = vset.pattern.permute.xlu0 2
          %2538 = vperm.xlu0 %2537, %v674
          %v2539 = vpop.permute.xlu0 %2538
          %2541 = vset.pattern.permute.xlu0 2
          %2542 = vperm.xlu0 %2541, %v675
          %v2543 = vpop.permute.xlu0 %2542
          %2545 = vset.pattern.permute.xlu0 2
          %2546 = vperm.xlu0 %2545, %v676
          %v2547 = vpop.permute.xlu0 %2546
          %2549 = vset.pattern.permute.xlu0 2
          %2550 = vperm.xlu0 %2549, %v677
          %v2551 = vpop.permute.xlu0 %2550
          %2553 = vset.pattern.permute.xlu0 2
          %2554 = vperm.xlu0 %2553, %v678
          %v2555 = vpop.permute.xlu0 %2554
          %2557 = vset.pattern.permute.xlu0 2
          %2558 = vperm.xlu0 %2557, %v679
          %v2559 = vpop.permute.xlu0 %2558
          %2561 = vset.pattern.permute.xlu0 2
          %2562 = vperm.xlu0 %2561, %v680
          %v2563 = vpop.permute.xlu0 %2562
          %v2565 = vlaneseq
          %v2566 = vshrl.u32 %v2565, 7
          %v2567 = vsub.s32 2, %v2566
          %v2568 = vrot.slane %v681, %v2567
          %v2569 = vlaneseq
          %v2570 = vshrl.u32 %v2569, 7
          %v2571 = vsub.s32 6, %v2570
          %v2572 = vrot.slane %v681, %v2571
          %v2575 = vlaneseq
          %v2576 = vshrl.u32 %v2575, 7
          %v2577 = vsub.s32 2, %v2576
          %v2578 = vrot.slane %v2568, %v2577
          %v2579 = vlaneseq
          %v2580 = vshrl.u32 %v2579, 7
          %v2581 = vsub.s32 2, %v2580
          %v2582 = vrot.slane %v2572, %v2581
          %v2583 = vadd.f32 %v2503, %v2578
          %v2584 = vadd.f32 %v2503, %v2582
          %v2585 = vadd.f32 %v2507, %v2578
          %v2586 = vadd.f32 %v2507, %v2582
          %v2587 = vadd.f32 %v2511, %v2578
          %v2588 = vadd.f32 %v2511, %v2582
          %v2589 = vadd.f32 %v2515, %v2578
          %v2590 = vadd.f32 %v2515, %v2582
          %v2591 = vadd.f32 %v2519, %v2578
          %v2592 = vadd.f32 %v2519, %v2582
          %v2593 = vadd.f32 %v2523, %v2578
          %v2594 = vadd.f32 %v2523, %v2582
          %v2595 = vadd.f32 %v2527, %v2578
          %v2596 = vadd.f32 %v2527, %v2582
          %v2597 = vadd.f32 %v2531, %v2578
          %v2598 = vadd.f32 %v2531, %v2582
          %v2599 = vadd.f32 %v2535, %v2578
          %v2600 = vadd.f32 %v2535, %v2582
          %v2601 = vadd.f32 %v2539, %v2578
          %v2602 = vadd.f32 %v2539, %v2582
          %v2603 = vadd.f32 %v2543, %v2578
          %v2604 = vadd.f32 %v2543, %v2582
          %v2605 = vadd.f32 %v2547, %v2578
          %v2606 = vadd.f32 %v2547, %v2582
          %v2607 = vadd.f32 %v2551, %v2578
          %v2608 = vadd.f32 %v2551, %v2582
          %v2609 = vadd.f32 %v2555, %v2578
          %v2610 = vadd.f32 %v2555, %v2582
          %v2611 = vadd.f32 %v2559, %v2578
          %v2612 = vadd.f32 %v2559, %v2582
          %v2613 = vadd.f32 %v2563, %v2578
          %v2614 = vadd.f32 %v2563, %v2582
          %v2615 = vmul.f32 %v2583, 0.2
          %v2616 = vmul.f32 %v2584, 0.2
          %v2617 = vmul.f32 %v2585, 0.2
          %v2618 = vmul.f32 %v2586, 0.2
          %v2619 = vmul.f32 %v2587, 0.2
          %v2620 = vmul.f32 %v2588, 0.2
          %v2621 = vmul.f32 %v2589, 0.2
          %v2622 = vmul.f32 %v2590, 0.2
          %v2623 = vmul.f32 %v2591, 0.2
          %v2624 = vmul.f32 %v2592, 0.2
          %v2625 = vmul.f32 %v2593, 0.2
          %v2626 = vmul.f32 %v2594, 0.2
          %v2627 = vmul.f32 %v2595, 0.2
          %v2628 = vmul.f32 %v2596, 0.2
          %v2629 = vmul.f32 %v2597, 0.2
          %v2630 = vmul.f32 %v2598, 0.2
          %v2631 = vmul.f32 %v2599, 0.2
          %v2632 = vmul.f32 %v2600, 0.2
          %v2633 = vmul.f32 %v2601, 0.2
          %v2634 = vmul.f32 %v2602, 0.2
          %v2635 = vmul.f32 %v2603, 0.2
          %v2636 = vmul.f32 %v2604, 0.2
          %v2637 = vmul.f32 %v2605, 0.2
          %v2638 = vmul.f32 %v2606, 0.2
          %v2639 = vmul.f32 %v2607, 0.2
          %v2640 = vmul.f32 %v2608, 0.2
          %v2641 = vmul.f32 %v2609, 0.2
          %v2642 = vmul.f32 %v2610, 0.2
          %v2643 = vmul.f32 %v2611, 0.2
          %v2644 = vmul.f32 %v2612, 0.2
          %v2645 = vmul.f32 %v2613, 0.2
          %v2646 = vmul.f32 %v2614, 0.2
          %v2647 = vmax.f32 %v2583, %v2615
          %v2648 = vmax.f32 %v2584, %v2616
          %v2649 = vmax.f32 %v2585, %v2617
          %v2650 = vmax.f32 %v2586, %v2618
          %v2651 = vmax.f32 %v2587, %v2619
          %v2652 = vmax.f32 %v2588, %v2620
          %v2653 = vmax.f32 %v2589, %v2621
          %v2654 = vmax.f32 %v2590, %v2622
          %v2655 = vmax.f32 %v2591, %v2623
          %v2656 = vmax.f32 %v2592, %v2624
          %v2657 = vmax.f32 %v2593, %v2625
          %v2658 = vmax.f32 %v2594, %v2626
          %v2659 = vmax.f32 %v2595, %v2627
          %v2660 = vmax.f32 %v2596, %v2628
          %v2661 = vmax.f32 %v2597, %v2629
          %v2662 = vmax.f32 %v2598, %v2630
          %v2663 = vmax.f32 %v2599, %v2631
          %v2664 = vmax.f32 %v2600, %v2632
          %v2665 = vmax.f32 %v2601, %v2633
          %v2666 = vmax.f32 %v2602, %v2634
          %v2667 = vmax.f32 %v2603, %v2635
          %v2668 = vmax.f32 %v2604, %v2636
          %v2669 = vmax.f32 %v2605, %v2637
          %v2670 = vmax.f32 %v2606, %v2638
          %v2671 = vmax.f32 %v2607, %v2639
          %v2672 = vmax.f32 %v2608, %v2640
          %v2673 = vmax.f32 %v2609, %v2641
          %v2674 = vmax.f32 %v2610, %v2642
          %v2675 = vmax.f32 %v2611, %v2643
          %v2676 = vmax.f32 %v2612, %v2644
          %v2677 = vmax.f32 %v2613, %v2645
          %v2678 = vmax.f32 %v2614, %v2646
          %v2679 = vadd.f32 %v2647, %v730
          %v2680 = vadd.f32 %v2648, %v731
          %v2681 = vadd.f32 %v2649, %v732
          %v2682 = vadd.f32 %v2650, %v733
          %v2683 = vadd.f32 %v2651, %v734
          %v2684 = vadd.f32 %v2652, %v735
          %v2685 = vadd.f32 %v2653, %v736
          %v2686 = vadd.f32 %v2654, %v737
          %v2687 = vadd.f32 %v2655, %v738
          %v2688 = vadd.f32 %v2656, %v739
          %v2689 = vadd.f32 %v2657, %v740
          %v2690 = vadd.f32 %v2658, %v741
          %v2691 = vadd.f32 %v2659, %v742
          %v2692 = vadd.f32 %v2660, %v743
          %v2693 = vadd.f32 %v2661, %v744
          %v2694 = vadd.f32 %v2662, %v745
          %v2695 = vadd.f32 %v2663, %v746
          %v2696 = vadd.f32 %v2664, %v747
          %v2697 = vadd.f32 %v2665, %v748
          %v2698 = vadd.f32 %v2666, %v749
          %v2699 = vadd.f32 %v2667, %v750
          %v2700 = vadd.f32 %v2668, %v751
          %v2701 = vadd.f32 %v2669, %v752
          %v2702 = vadd.f32 %v2670, %v753
          %v2703 = vadd.f32 %v2671, %v754
          %v2704 = vadd.f32 %v2672, %v755
          %v2705 = vadd.f32 %v2673, %v756
          %v2706 = vadd.f32 %v2674, %v757
          %v2707 = vadd.f32 %v2675, %v758
          %v2708 = vadd.f32 %v2676, %v759
          %v2709 = vadd.f32 %v2677, %v760
          %v2710 = vadd.f32 %v2678, %v761
          %s2711 = scalar_lea.vmem [#allocation2], 256
          %v2712 = vld [vmem:[%s2711] sm:$0xff]
          %v2713 = vld [vmem:[%s2711 + $0x8] sm:$0xff]
          %v2714 = vld [vmem:[%s2711 + $0x10] sm:$0xff]
          %v2715 = vld [vmem:[%s2711 + $0x18] sm:$0xff]
          %v2716 = vld [vmem:[%s2711 + $0x20] sm:$0xff]
          %v2717 = vld [vmem:[%s2711 + $0x28] sm:$0xff]
          %v2718 = vld [vmem:[%s2711 + $0x30] sm:$0xff]
          %v2719 = vld [vmem:[%s2711 + $0x38] sm:$0xff]
          %v2720 = vld [vmem:[%s2711 + $0x40] sm:$0xff]
          %v2721 = vld [vmem:[%s2711 + $0x48] sm:$0xff]
          %v2722 = vld [vmem:[%s2711 + $0x50] sm:$0xff]
          %v2723 = vld [vmem:[%s2711 + $0x58] sm:$0xff]
          %v2724 = vld [vmem:[%s2711 + $0x60] sm:$0xff]
          %v2725 = vld [vmem:[%s2711 + $0x68] sm:$0xff]
          %v2726 = vld [vmem:[%s2711 + $0x70] sm:$0xff]
          %v2727 = vld [vmem:[%s2711 + $0x78] sm:$0xff]
          %v2728 = vmax.f32 %v2679, %v2680
          %2729 = vmax.xlane.f32.xlu0 %v2728
          %v2730 = vpop.xlane.xlu0 %2729
          %v2731 = vmax.f32 %v2681, %v2682
          %2732 = vmax.xlane.f32.xlu0 %v2731
          %v2733 = vpop.xlane.xlu0 %2732
          %v2734 = vmax.f32 %v2683, %v2684
          %2735 = vmax.xlane.f32.xlu0 %v2734
          %v2736 = vpop.xlane.xlu0 %2735
          %v2737 = vmax.f32 %v2685, %v2686
          %2738 = vmax.xlane.f32.xlu0 %v2737
          %v2739 = vpop.xlane.xlu0 %2738
          %v2740 = vmax.f32 %v2687, %v2688
          %2741 = vmax.xlane.f32.xlu0 %v2740
          %v2742 = vpop.xlane.xlu0 %2741
          %v2743 = vmax.f32 %v2689, %v2690
          %2744 = vmax.xlane.f32.xlu0 %v2743
          %v2745 = vpop.xlane.xlu0 %2744
          %v2746 = vmax.f32 %v2691, %v2692
          %2747 = vmax.xlane.f32.xlu0 %v2746
          %v2748 = vpop.xlane.xlu0 %2747
          %v2749 = vmax.f32 %v2693, %v2694
          %2750 = vmax.xlane.f32.xlu0 %v2749
          %v2751 = vpop.xlane.xlu0 %2750
          %v2752 = vmax.f32 %v2695, %v2696
          %2753 = vmax.xlane.f32.xlu0 %v2752
          %v2754 = vpop.xlane.xlu0 %2753
          %v2755 = vmax.f32 %v2697, %v2698
          %2756 = vmax.xlane.f32.xlu0 %v2755
          %v2757 = vpop.xlane.xlu0 %2756
          %v2758 = vmax.f32 %v2699, %v2700
          %2759 = vmax.xlane.f32.xlu0 %v2758
          %v2760 = vpop.xlane.xlu0 %2759
          %v2761 = vmax.f32 %v2701, %v2702
          %2762 = vmax.xlane.f32.xlu0 %v2761
          %v2763 = vpop.xlane.xlu0 %2762
          %v2764 = vmax.f32 %v2703, %v2704
          %2765 = vmax.xlane.f32.xlu0 %v2764
          %v2766 = vpop.xlane.xlu0 %2765
          %v2767 = vmax.f32 %v2705, %v2706
          %2768 = vmax.xlane.f32.xlu0 %v2767
          %v2769 = vpop.xlane.xlu0 %2768
          %v2770 = vmax.f32 %v2707, %v2708
          %2771 = vmax.xlane.f32.xlu0 %v2770
          %v2772 = vpop.xlane.xlu0 %2771
          %v2773 = vmax.f32 %v2709, %v2710
          %2774 = vmax.xlane.f32.xlu0 %v2773
          %v2775 = vpop.xlane.xlu0 %2774
          %v2776 = vmax.f32 %v2712, %v2730
          %v2777 = vmax.f32 %v2713, %v2733
          %v2778 = vmax.f32 %v2714, %v2736
          %v2779 = vmax.f32 %v2715, %v2739
          %v2780 = vmax.f32 %v2716, %v2742
          %v2781 = vmax.f32 %v2717, %v2745
          %v2782 = vmax.f32 %v2718, %v2748
          %v2783 = vmax.f32 %v2719, %v2751
          %v2784 = vmax.f32 %v2720, %v2754
          %v2785 = vmax.f32 %v2721, %v2757
          %v2786 = vmax.f32 %v2722, %v2760
          %v2787 = vmax.f32 %v2723, %v2763
          %v2788 = vmax.f32 %v2724, %v2766
          %v2789 = vmax.f32 %v2725, %v2769
          %v2790 = vmax.f32 %v2726, %v2772
          %v2791 = vmax.f32 %v2727, %v2775
          %v2792 = vsub.f32 %v2712, %v2776
          %v2793 = vsub.f32 %v2713, %v2777
          %v2794 = vsub.f32 %v2714, %v2778
          %v2795 = vsub.f32 %v2715, %v2779
          %v2796 = vsub.f32 %v2716, %v2780
          %v2797 = vsub.f32 %v2717, %v2781
          %v2798 = vsub.f32 %v2718, %v2782
          %v2799 = vsub.f32 %v2719, %v2783
          %v2800 = vsub.f32 %v2720, %v2784
          %v2801 = vsub.f32 %v2721, %v2785
          %v2802 = vsub.f32 %v2722, %v2786
          %v2803 = vsub.f32 %v2723, %v2787
          %v2804 = vsub.f32 %v2724, %v2788
          %v2805 = vsub.f32 %v2725, %v2789
          %v2806 = vsub.f32 %v2726, %v2790
          %v2807 = vsub.f32 %v2727, %v2791
          %v2808 = vmul.f32 %v2792, 1.442695
          %v2809 = vpow.pop %v2808
          %v2810 = vmul.f32 %v2793, 1.442695
          %v2811 = vpow.pop %v2810
          %v2812 = vmul.f32 %v2794, 1.442695
          %v2813 = vpow.pop %v2812
          %v2814 = vmul.f32 %v2795, 1.442695
          %v2815 = vpow.pop %v2814
          %v2816 = vmul.f32 %v2796, 1.442695
          %v2817 = vpow.pop %v2816
          %v2818 = vmul.f32 %v2797, 1.442695
          %v2819 = vpow.pop %v2818
          %v2820 = vmul.f32 %v2798, 1.442695
          %v2821 = vpow.pop %v2820
          %v2822 = vmul.f32 %v2799, 1.442695
          %v2823 = vpow.pop %v2822
          %v2824 = vmul.f32 %v2800, 1.442695
          %v2825 = vpow.pop %v2824
          %v2826 = vmul.f32 %v2801, 1.442695
          %v2827 = vpow.pop %v2826
          %v2828 = vmul.f32 %v2802, 1.442695
          %v2829 = vpow.pop %v2828
          %v2830 = vmul.f32 %v2803, 1.442695
          %v2831 = vpow.pop %v2830
          %v2832 = vmul.f32 %v2804, 1.442695
          %v2833 = vpow.pop %v2832
          %v2834 = vmul.f32 %v2805, 1.442695
          %v2835 = vpow.pop %v2834
          %v2836 = vmul.f32 %v2806, 1.442695
          %v2837 = vpow.pop %v2836
          %v2838 = vmul.f32 %v2807, 1.442695
          %v2839 = vpow.pop %v2838
          %2841 = vset.pattern.permute.xlu0 0
          %2842 = vperm.xlu0 %2841, %v2776
          %v2843 = vpop.permute.xlu0 %2842
          %2846 = vset.pattern.permute.xlu0 0
          %2847 = vperm.xlu0 %2846, %v2777
          %v2848 = vpop.permute.xlu0 %2847
          %2851 = vset.pattern.permute.xlu0 0
          %2852 = vperm.xlu0 %2851, %v2778
          %v2853 = vpop.permute.xlu0 %2852
          %2856 = vset.pattern.permute.xlu0 0
          %2857 = vperm.xlu0 %2856, %v2779
          %v2858 = vpop.permute.xlu0 %2857
          %2861 = vset.pattern.permute.xlu0 0
          %2862 = vperm.xlu0 %2861, %v2780
          %v2863 = vpop.permute.xlu0 %2862
          %2866 = vset.pattern.permute.xlu0 0
          %2867 = vperm.xlu0 %2866, %v2781
          %v2868 = vpop.permute.xlu0 %2867
          %2871 = vset.pattern.permute.xlu0 0
          %2872 = vperm.xlu0 %2871, %v2782
          %v2873 = vpop.permute.xlu0 %2872
          %2876 = vset.pattern.permute.xlu0 0
          %2877 = vperm.xlu0 %2876, %v2783
          %v2878 = vpop.permute.xlu0 %2877
          %2881 = vset.pattern.permute.xlu0 0
          %2882 = vperm.xlu0 %2881, %v2784
          %v2883 = vpop.permute.xlu0 %2882
          %2886 = vset.pattern.permute.xlu0 0
          %2887 = vperm.xlu0 %2886, %v2785
          %v2888 = vpop.permute.xlu0 %2887
          %2891 = vset.pattern.permute.xlu0 0
          %2892 = vperm.xlu0 %2891, %v2786
          %v2893 = vpop.permute.xlu0 %2892
          %2896 = vset.pattern.permute.xlu0 0
          %2897 = vperm.xlu0 %2896, %v2787
          %v2898 = vpop.permute.xlu0 %2897
          %2901 = vset.pattern.permute.xlu0 0
          %2902 = vperm.xlu0 %2901, %v2788
          %v2903 = vpop.permute.xlu0 %2902
          %2906 = vset.pattern.permute.xlu0 0
          %2907 = vperm.xlu0 %2906, %v2789
          %v2908 = vpop.permute.xlu0 %2907
          %2911 = vset.pattern.permute.xlu0 0
          %2912 = vperm.xlu0 %2911, %v2790
          %v2913 = vpop.permute.xlu0 %2912
          %2916 = vset.pattern.permute.xlu0 0
          %2917 = vperm.xlu0 %2916, %v2791
          %v2918 = vpop.permute.xlu0 %2917
          %v2920 = vsub.f32 %v2679, %v2843
          %v2921 = vsub.f32 %v2680, %v2843
          %v2922 = vsub.f32 %v2681, %v2848
          %v2923 = vsub.f32 %v2682, %v2848
          %v2924 = vsub.f32 %v2683, %v2853
          %v2925 = vsub.f32 %v2684, %v2853
          %v2926 = vsub.f32 %v2685, %v2858
          %v2927 = vsub.f32 %v2686, %v2858
          %v2928 = vsub.f32 %v2687, %v2863
          %v2929 = vsub.f32 %v2688, %v2863
          %v2930 = vsub.f32 %v2689, %v2868
          %v2931 = vsub.f32 %v2690, %v2868
          %v2932 = vsub.f32 %v2691, %v2873
          %v2933 = vsub.f32 %v2692, %v2873
          %v2934 = vsub.f32 %v2693, %v2878
          %v2935 = vsub.f32 %v2694, %v2878
          %v2936 = vsub.f32 %v2695, %v2883
          %v2937 = vsub.f32 %v2696, %v2883
          %v2938 = vsub.f32 %v2697, %v2888
          %v2939 = vsub.f32 %v2698, %v2888
          %v2940 = vsub.f32 %v2699, %v2893
          %v2941 = vsub.f32 %v2700, %v2893
          %v2942 = vsub.f32 %v2701, %v2898
          %v2943 = vsub.f32 %v2702, %v2898
          %v2944 = vsub.f32 %v2703, %v2903
          %v2945 = vsub.f32 %v2704, %v2903
          %v2946 = vsub.f32 %v2705, %v2908
          %v2947 = vsub.f32 %v2706, %v2908
          %v2948 = vsub.f32 %v2707, %v2913
          %v2949 = vsub.f32 %v2708, %v2913
          %v2950 = vsub.f32 %v2709, %v2918
          %v2951 = vsub.f32 %v2710, %v2918
          %v2952 = vmul.f32 %v2920, 1.442695
          %v2953 = vpow.pop %v2952
          %v2954 = vmul.f32 %v2921, 1.442695
          %v2955 = vpow.pop %v2954
          %v2956 = vmul.f32 %v2922, 1.442695
          %v2957 = vpow.pop %v2956
          %v2958 = vmul.f32 %v2923, 1.442695
          %v2959 = vpow.pop %v2958
          %v2960 = vmul.f32 %v2924, 1.442695
          %v2961 = vpow.pop %v2960
          %v2962 = vmul.f32 %v2925, 1.442695
          %v2963 = vpow.pop %v2962
          %v2964 = vmul.f32 %v2926, 1.442695
          %v2965 = vpow.pop %v2964
          %v2966 = vmul.f32 %v2927, 1.442695
          %v2967 = vpow.pop %v2966
          %v2968 = vmul.f32 %v2928, 1.442695
          %v2969 = vpow.pop %v2968
          %v2970 = vmul.f32 %v2929, 1.442695
          %v2971 = vpow.pop %v2970
          %v2972 = vmul.f32 %v2930, 1.442695
          %v2973 = vpow.pop %v2972
          %v2974 = vmul.f32 %v2931, 1.442695
          %v2975 = vpow.pop %v2974
          %v2976 = vmul.f32 %v2932, 1.442695
          %v2977 = vpow.pop %v2976
          %v2978 = vmul.f32 %v2933, 1.442695
          %v2979 = vpow.pop %v2978
          %v2980 = vmul.f32 %v2934, 1.442695
          %v2981 = vpow.pop %v2980
          %v2982 = vmul.f32 %v2935, 1.442695
          %v2983 = vpow.pop %v2982
          %v2984 = vmul.f32 %v2936, 1.442695
          %v2985 = vpow.pop %v2984
          %v2986 = vmul.f32 %v2937, 1.442695
          %v2987 = vpow.pop %v2986
          %v2988 = vmul.f32 %v2938, 1.442695
          %v2989 = vpow.pop %v2988
          %v2990 = vmul.f32 %v2939, 1.442695
          %v2991 = vpow.pop %v2990
          %v2992 = vmul.f32 %v2940, 1.442695
          %v2993 = vpow.pop %v2992
          %v2994 = vmul.f32 %v2941, 1.442695
          %v2995 = vpow.pop %v2994
          %v2996 = vmul.f32 %v2942, 1.442695
          %v2997 = vpow.pop %v2996
          %v2998 = vmul.f32 %v2943, 1.442695
          %v2999 = vpow.pop %v2998
          %v3000 = vmul.f32 %v2944, 1.442695
          %v3001 = vpow.pop %v3000
          %v3002 = vmul.f32 %v2945, 1.442695
          %v3003 = vpow.pop %v3002
          %v3004 = vmul.f32 %v2946, 1.442695
          %v3005 = vpow.pop %v3004
          %v3006 = vmul.f32 %v2947, 1.442695
          %v3007 = vpow.pop %v3006
          %v3008 = vmul.f32 %v2948, 1.442695
          %v3009 = vpow.pop %v3008
          %v3010 = vmul.f32 %v2949, 1.442695
          %v3011 = vpow.pop %v3010
          %v3012 = vmul.f32 %v2950, 1.442695
          %v3013 = vpow.pop %v3012
          %v3014 = vmul.f32 %v2951, 1.442695
          %v3015 = vpow.pop %v3014
          %v3016 = vpack.c.bf16 %v2957, %v2953
          %v3017 = vpack.c.bf16 %v2959, %v2955
          %v3018 = vpack.c.bf16 %v2965, %v2961
          %v3019 = vpack.c.bf16 %v2967, %v2963
          %v3020 = vpack.c.bf16 %v2973, %v2969
          %v3021 = vpack.c.bf16 %v2975, %v2971
          %v3022 = vpack.c.bf16 %v2981, %v2977
          %v3023 = vpack.c.bf16 %v2983, %v2979
          %v3024 = vpack.c.bf16 %v2989, %v2985
          %v3025 = vpack.c.bf16 %v2991, %v2987
          %v3026 = vpack.c.bf16 %v2997, %v2993
          %v3027 = vpack.c.bf16 %v2999, %v2995
          %v3028 = vpack.c.bf16 %v3005, %v3001
          %v3029 = vpack.c.bf16 %v3007, %v3003
          %v3030 = vpack.c.bf16 %v3013, %v3009
          %v3031 = vpack.c.bf16 %v3015, %v3011
          %s3032 = scalar_lea.vmem [#allocation3], 256
          %v3033 = vld [vmem:[%s3032] sm:$0xff]
          %v3034 = vld [vmem:[%s3032 + $0x8] sm:$0xff]
          %v3035 = vld [vmem:[%s3032 + $0x10] sm:$0xff]
          %v3036 = vld [vmem:[%s3032 + $0x18] sm:$0xff]
          %v3037 = vld [vmem:[%s3032 + $0x20] sm:$0xff]
          %v3038 = vld [vmem:[%s3032 + $0x28] sm:$0xff]
          %v3039 = vld [vmem:[%s3032 + $0x30] sm:$0xff]
          %v3040 = vld [vmem:[%s3032 + $0x38] sm:$0xff]
          %v3041 = vld [vmem:[%s3032 + $0x40] sm:$0xff]
          %v3042 = vld [vmem:[%s3032 + $0x48] sm:$0xff]
          %v3043 = vld [vmem:[%s3032 + $0x50] sm:$0xff]
          %v3044 = vld [vmem:[%s3032 + $0x58] sm:$0xff]
          %v3045 = vld [vmem:[%s3032 + $0x60] sm:$0xff]
          %v3046 = vld [vmem:[%s3032 + $0x68] sm:$0xff]
          %v3047 = vld [vmem:[%s3032 + $0x70] sm:$0xff]
          %v3048 = vld [vmem:[%s3032 + $0x78] sm:$0xff]
          %3050 = vset.pattern.permute.xlu0 0
          %3051 = vperm.xlu0 %3050, %v2809
          %v3052 = vpop.permute.xlu0 %3051
          %3055 = vset.pattern.permute.xlu0 0
          %3056 = vperm.xlu0 %3055, %v2811
          %v3057 = vpop.permute.xlu0 %3056
          %3060 = vset.pattern.permute.xlu0 0
          %3061 = vperm.xlu0 %3060, %v2813
          %v3062 = vpop.permute.xlu0 %3061
          %3065 = vset.pattern.permute.xlu0 0
          %3066 = vperm.xlu0 %3065, %v2815
          %v3067 = vpop.permute.xlu0 %3066
          %3070 = vset.pattern.permute.xlu0 0
          %3071 = vperm.xlu0 %3070, %v2817
          %v3072 = vpop.permute.xlu0 %3071
          %3075 = vset.pattern.permute.xlu0 0
          %3076 = vperm.xlu0 %3075, %v2819
          %v3077 = vpop.permute.xlu0 %3076
          %3080 = vset.pattern.permute.xlu0 0
          %3081 = vperm.xlu0 %3080, %v2821
          %v3082 = vpop.permute.xlu0 %3081
          %3085 = vset.pattern.permute.xlu0 0
          %3086 = vperm.xlu0 %3085, %v2823
          %v3087 = vpop.permute.xlu0 %3086
          %3090 = vset.pattern.permute.xlu0 0
          %3091 = vperm.xlu0 %3090, %v2825
          %v3092 = vpop.permute.xlu0 %3091
          %3095 = vset.pattern.permute.xlu0 0
          %3096 = vperm.xlu0 %3095, %v2827
          %v3097 = vpop.permute.xlu0 %3096
          %3100 = vset.pattern.permute.xlu0 0
          %3101 = vperm.xlu0 %3100, %v2829
          %v3102 = vpop.permute.xlu0 %3101
          %3105 = vset.pattern.permute.xlu0 0
          %3106 = vperm.xlu0 %3105, %v2831
          %v3107 = vpop.permute.xlu0 %3106
          %3110 = vset.pattern.permute.xlu0 0
          %3111 = vperm.xlu0 %3110, %v2833
          %v3112 = vpop.permute.xlu0 %3111
          %3115 = vset.pattern.permute.xlu0 0
          %3116 = vperm.xlu0 %3115, %v2835
          %v3117 = vpop.permute.xlu0 %3116
          %3120 = vset.pattern.permute.xlu0 0
          %3121 = vperm.xlu0 %3120, %v2837
          %v3122 = vpop.permute.xlu0 %3121
          %3125 = vset.pattern.permute.xlu0 0
          %3126 = vperm.xlu0 %3125, %v2839
          %v3127 = vpop.permute.xlu0 %3126
          %v3129 = vmul.f32 %v3052, %v3033
          %v3130 = vmul.f32 %v3057, %v3034
          %v3131 = vmul.f32 %v3062, %v3035
          %v3132 = vmul.f32 %v3067, %v3036
          %v3133 = vmul.f32 %v3072, %v3037
          %v3134 = vmul.f32 %v3077, %v3038
          %v3135 = vmul.f32 %v3082, %v3039
          %v3136 = vmul.f32 %v3087, %v3040
          %v3137 = vmul.f32 %v3092, %v3041
          %v3138 = vmul.f32 %v3097, %v3042
          %v3139 = vmul.f32 %v3102, %v3043
          %v3140 = vmul.f32 %v3107, %v3044
          %v3141 = vmul.f32 %v3112, %v3045
          %v3142 = vmul.f32 %v3117, %v3046
          %v3143 = vmul.f32 %v3122, %v3047
          %v3144 = vmul.f32 %v3127, %v3048
          %3145 = vrot.lane.b32.xlu0 %v1485, 96
          %v3146 = vpop.permute.xlu0 %3145
          %3147 = vrot.lane.b32.xlu0 %v1486, 96
          %v3148 = vpop.permute.xlu0 %3147
          %3149 = vrot.lane.b32.xlu0 %v1487, 96
          %v3150 = vpop.permute.xlu0 %3149
          %3151 = vrot.lane.b32.xlu0 %v1488, 96
          %v3152 = vpop.permute.xlu0 %3151
          %3153 = vrot.lane.b32.xlu0 %v1489, 96
          %v3154 = vpop.permute.xlu0 %3153
          %3155 = vrot.lane.b32.xlu0 %v1490, 96
          %v3156 = vpop.permute.xlu0 %3155
          %3157 = vrot.lane.b32.xlu0 %v1491, 96
          %v3158 = vpop.permute.xlu0 %3157
          %3159 = vrot.lane.b32.xlu0 %v1492, 96
          %v3160 = vpop.permute.xlu0 %3159
          %3161 = vrot.lane.b32.xlu0 %v1493, 96
          %v3162 = vpop.permute.xlu0 %3161
          %3163 = vrot.lane.b32.xlu0 %v1494, 96
          %v3164 = vpop.permute.xlu0 %3163
          %3165 = vrot.lane.b32.xlu0 %v1495, 96
          %v3166 = vpop.permute.xlu0 %3165
          %3167 = vrot.lane.b32.xlu0 %v1496, 96
          %v3168 = vpop.permute.xlu0 %3167
          %3169 = vrot.lane.b32.xlu0 %v1497, 96
          %v3170 = vpop.permute.xlu0 %3169
          %3171 = vrot.lane.b32.xlu0 %v1498, 96
          %v3172 = vpop.permute.xlu0 %3171
          %3173 = vrot.lane.b32.xlu0 %v1499, 96
          %v3174 = vpop.permute.xlu0 %3173
          %3175 = vrot.lane.b32.xlu0 %v1500, 96
          %v3176 = vpop.permute.xlu0 %3175
          %3193 = vmatprep.subr.bf16.mxu0 0
          %3194 = vmatpush1.bf16.msra.mxu0 %v3146
          %3195 = vmatprep.subr.bf16.mxu0 0
          %3196 = vmatpush1.bf16.msra.mxu0 %v3148
          %3197 = vmatprep.subr.bf16.mxu0 0
          %3198 = vmatpush1.bf16.msra.mxu0 %v3150
          %3199 = vmatprep.subr.bf16.mxu0 0
          %3200 = vmatpush1.bf16.msra.mxu0 %v3152
          %3201 = vmatprep.subr.bf16.mxu0 0
          %3202 = vmatpush1.bf16.msra.mxu0 %v3154
          %3203 = vmatprep.subr.bf16.mxu0 0
          %3204 = vmatpush1.bf16.msra.mxu0 %v3156
          %3205 = vmatprep.subr.bf16.mxu0 0
          %3206 = vmatpush1.bf16.msra.mxu0 %v3158
          %3207 = vmatprep.subr.bf16.mxu0 0
          %3208 = vmatpush1.bf16.msra.mxu0 %v3160
          %3209 = vmatprep.subr.bf16.mxu0 0
          %3210 = vmatpush1.bf16.msra.mxu0 %v3162
          %3211 = vmatprep.subr.bf16.mxu0 0
          %3212 = vmatpush1.bf16.msra.mxu0 %v3164
          %3213 = vmatprep.subr.bf16.mxu0 0
          %3214 = vmatpush1.bf16.msra.mxu0 %v3166
          %3215 = vmatprep.subr.bf16.mxu0 0
          %3216 = vmatpush1.bf16.msra.mxu0 %v3168
          %3217 = vmatprep.subr.bf16.mxu0 0
          %3218 = vmatpush1.bf16.msra.mxu0 %v3170
          %3219 = vmatprep.subr.bf16.mxu0 0
          %3220 = vmatpush1.bf16.msra.mxu0 %v3172
          %3221 = vmatprep.subr.bf16.mxu0 0
          %3222 = vmatpush1.bf16.msra.mxu0 %v3174
          %3223 = vmatprep.subr.bf16.mxu0 0
          %3224 = vmatpush1.bf16.msra.mxu0 %v3176
          %3225 = vmatprep.mubr.bf16.mxu0 %v3017
          %3226 = vmatmul.mubr.bf16.gmra.mrb[0].mxu0 %v3016
          %v3227 = vpop.f32.mrb[0].mxu0
          %v3228 = vadd.f32 0.0, %v3227
          %v3229 = vpop.f32.mrb[0].mxu0
          %v3230 = vpop.f32.mrb[0].mxu0
          %v3231 = vadd.f32 0.0, %v3230
          %v3232 = vpop.f32.mrb[0].mxu0
          %3233 = vmatprep.mubr.bf16.mxu0 %v3019
          %3234 = vmatmul.mubr.bf16.gmra.mrb[0].mxu0 %v3018
          %v3235 = vpop.f32.mrb[0].mxu0
          %v3236 = vadd.f32 0.0, %v3235
          %v3237 = vpop.f32.mrb[0].mxu0
          %v3238 = vpop.f32.mrb[0].mxu0
          %v3239 = vadd.f32 0.0, %v3238
          %v3240 = vpop.f32.mrb[0].mxu0
          %3241 = vmatprep.mubr.bf16.mxu0 %v3021
          %3242 = vmatmul.mubr.bf16.gmra.mrb[0].mxu0 %v3020
          %v3243 = vpop.f32.mrb[0].mxu0
          %v3244 = vadd.f32 0.0, %v3243
          %v3245 = vpop.f32.mrb[0].mxu0
          %v3246 = vpop.f32.mrb[0].mxu0
          %v3247 = vadd.f32 0.0, %v3246
          %v3248 = vpop.f32.mrb[0].mxu0
          %3249 = vmatprep.mubr.bf16.mxu0 %v3023
          %3250 = vmatmul.mubr.bf16.gmra.mrb[0].mxu0 %v3022
          %v3251 = vpop.f32.mrb[0].mxu0
          %v3252 = vadd.f32 0.0, %v3251
          %v3253 = vpop.f32.mrb[0].mxu0
          %v3254 = vpop.f32.mrb[0].mxu0
          %v3255 = vadd.f32 0.0, %v3254
          %v3256 = vpop.f32.mrb[0].mxu0
          %3257 = vmatprep.mubr.bf16.mxu0 %v3025
          %3258 = vmatmul.mubr.bf16.gmra.mrb[0].mxu0 %v3024
          %v3259 = vpop.f32.mrb[0].mxu0
          %v3260 = vadd.f32 0.0, %v3259
          %v3261 = vpop.f32.mrb[0].mxu0
          %v3262 = vpop.f32.mrb[0].mxu0
          %v3263 = vadd.f32 0.0, %v3262
          %v3264 = vpop.f32.mrb[0].mxu0
          %3265 = vmatprep.mubr.bf16.mxu0 %v3027
          %3266 = vmatmul.mubr.bf16.gmra.mrb[0].mxu0 %v3026
          %v3267 = vpop.f32.mrb[0].mxu0
          %v3268 = vadd.f32 0.0, %v3267
          %v3269 = vpop.f32.mrb[0].mxu0
          %v3270 = vpop.f32.mrb[0].mxu0
          %v3271 = vadd.f32 0.0, %v3270
          %v3272 = vpop.f32.mrb[0].mxu0
          %3273 = vmatprep.mubr.bf16.mxu0 %v3029
          %3274 = vmatmul.mubr.bf16.gmra.mrb[0].mxu0 %v3028
          %v3275 = vpop.f32.mrb[0].mxu0
          %v3276 = vadd.f32 0.0, %v3275
          %v3277 = vpop.f32.mrb[0].mxu0
          %v3278 = vpop.f32.mrb[0].mxu0
          %v3279 = vadd.f32 0.0, %v3278
          %v3280 = vpop.f32.mrb[0].mxu0
          %3281 = vmatprep.mubr.bf16.mxu0 %v3031
          %3282 = vmatmul.mubr.bf16.gmra.mrb[0].mxu0 %v3030
          %v3283 = vpop.f32.mrb[0].mxu0
          %v3284 = vadd.f32 0.0, %v3283
          %v3285 = vpop.f32.mrb[0].mxu0
          %v3286 = vpop.f32.mrb[0].mxu0
          %v3287 = vadd.f32 0.0, %v3286
          %v3288 = vpop.f32.mrb[0].mxu0
          %3289 = vdwg.mxu0
          %v3290 = vadd.f32 %v3129, %v3228
          %v3291 = vadd.f32 %v3130, %v3231
          %v3292 = vadd.f32 %v3131, %v3236
          %v3293 = vadd.f32 %v3132, %v3239
          %v3294 = vadd.f32 %v3133, %v3244
          %v3295 = vadd.f32 %v3134, %v3247
          %v3296 = vadd.f32 %v3135, %v3252
          %v3297 = vadd.f32 %v3136, %v3255
          %v3298 = vadd.f32 %v3137, %v3260
          %v3299 = vadd.f32 %v3138, %v3263
          %v3300 = vadd.f32 %v3139, %v3268
          %v3301 = vadd.f32 %v3140, %v3271
          %v3302 = vadd.f32 %v3141, %v3276
          %v3303 = vadd.f32 %v3142, %v3279
          %v3304 = vadd.f32 %v3143, %v3284
          %v3305 = vadd.f32 %v3144, %v3287
          %3306 = vst.msk [vmem:[%s3032] sm:$0xff] %vm1630, %v3290
          %3307 = vst.msk [vmem:[%s3032 + $0x8] sm:$0xff] %vm1630, %v3291
          %3308 = vst.msk [vmem:[%s3032 + $0x10] sm:$0xff] %vm1630, %v3292
          %3309 = vst.msk [vmem:[%s3032 + $0x18] sm:$0xff] %vm1630, %v3293
          %3310 = vst.msk [vmem:[%s3032 + $0x20] sm:$0xff] %vm1630, %v3294
          %3311 = vst.msk [vmem:[%s3032 + $0x28] sm:$0xff] %vm1630, %v3295
          %3312 = vst.msk [vmem:[%s3032 + $0x30] sm:$0xff] %vm1630, %v3296
          %3313 = vst.msk [vmem:[%s3032 + $0x38] sm:$0xff] %vm1630, %v3297
          %3314 = vst.msk [vmem:[%s3032 + $0x40] sm:$0xff] %vm1630, %v3298
          %3315 = vst.msk [vmem:[%s3032 + $0x48] sm:$0xff] %vm1630, %v3299
          %3316 = vst.msk [vmem:[%s3032 + $0x50] sm:$0xff] %vm1630, %v3300
          %3317 = vst.msk [vmem:[%s3032 + $0x58] sm:$0xff] %vm1630, %v3301
          %3318 = vst.msk [vmem:[%s3032 + $0x60] sm:$0xff] %vm1630, %v3302
          %3319 = vst.msk [vmem:[%s3032 + $0x68] sm:$0xff] %vm1630, %v3303
          %3320 = vst.msk [vmem:[%s3032 + $0x70] sm:$0xff] %vm1630, %v3304
          %3321 = vst.msk [vmem:[%s3032 + $0x78] sm:$0xff] %vm1630, %v3305
          %3322 = vst.msk [vmem:[%s2711] sm:$0xff] %vm1647, %v2776
          %3323 = vst.msk [vmem:[%s2711 + $0x8] sm:$0xff] %vm1647, %v2777
          %3324 = vst.msk [vmem:[%s2711 + $0x10] sm:$0xff] %vm1647, %v2778
          %3325 = vst.msk [vmem:[%s2711 + $0x18] sm:$0xff] %vm1647, %v2779
          %3326 = vst.msk [vmem:[%s2711 + $0x20] sm:$0xff] %vm1647, %v2780
          %3327 = vst.msk [vmem:[%s2711 + $0x28] sm:$0xff] %vm1647, %v2781
          %3328 = vst.msk [vmem:[%s2711 + $0x30] sm:$0xff] %vm1647, %v2782
          %3329 = vst.msk [vmem:[%s2711 + $0x38] sm:$0xff] %vm1647, %v2783
          %3330 = vst.msk [vmem:[%s2711 + $0x40] sm:$0xff] %vm1647, %v2784
          %3331 = vst.msk [vmem:[%s2711 + $0x48] sm:$0xff] %vm1647, %v2785
          %3332 = vst.msk [vmem:[%s2711 + $0x50] sm:$0xff] %vm1647, %v2786
          %3333 = vst.msk [vmem:[%s2711 + $0x58] sm:$0xff] %vm1647, %v2787
          %3334 = vst.msk [vmem:[%s2711 + $0x60] sm:$0xff] %vm1647, %v2788
          %3335 = vst.msk [vmem:[%s2711 + $0x68] sm:$0xff] %vm1647, %v2789
          %3336 = vst.msk [vmem:[%s2711 + $0x70] sm:$0xff] %vm1647, %v2790
          %3337 = vst.msk [vmem:[%s2711 + $0x78] sm:$0xff] %vm1647, %v2791
          %3338 = vset.pattern.permute.xlu0 3
          %3339 = vperm.xlu0 %3338, %v665
          %v3340 = vpop.permute.xlu0 %3339
          %3342 = vset.pattern.permute.xlu0 3
          %3343 = vperm.xlu0 %3342, %v666
          %v3344 = vpop.permute.xlu0 %3343
          %3346 = vset.pattern.permute.xlu0 3
          %3347 = vperm.xlu0 %3346, %v667
          %v3348 = vpop.permute.xlu0 %3347
          %3350 = vset.pattern.permute.xlu0 3
          %3351 = vperm.xlu0 %3350, %v668
          %v3352 = vpop.permute.xlu0 %3351
          %3354 = vset.pattern.permute.xlu0 3
          %3355 = vperm.xlu0 %3354, %v669
          %v3356 = vpop.permute.xlu0 %3355
          %3358 = vset.pattern.permute.xlu0 3
          %3359 = vperm.xlu0 %3358, %v670
          %v3360 = vpop.permute.xlu0 %3359
          %3362 = vset.pattern.permute.xlu0 3
          %3363 = vperm.xlu0 %3362, %v671
          %v3364 = vpop.permute.xlu0 %3363
          %3366 = vset.pattern.permute.xlu0 3
          %3367 = vperm.xlu0 %3366, %v672
          %v3368 = vpop.permute.xlu0 %3367
          %3370 = vset.pattern.permute.xlu0 3
          %3371 = vperm.xlu0 %3370, %v673
          %v3372 = vpop.permute.xlu0 %3371
          %3374 = vset.pattern.permute.xlu0 3
          %3375 = vperm.xlu0 %3374, %v674
          %v3376 = vpop.permute.xlu0 %3375
          %3378 = vset.pattern.permute.xlu0 3
          %3379 = vperm.xlu0 %3378, %v675
          %v3380 = vpop.permute.xlu0 %3379
          %3382 = vset.pattern.permute.xlu0 3
          %3383 = vperm.xlu0 %3382, %v676
          %v3384 = vpop.permute.xlu0 %3383
          %3386 = vset.pattern.permute.xlu0 3
          %3387 = vperm.xlu0 %3386, %v677
          %v3388 = vpop.permute.xlu0 %3387
          %3390 = vset.pattern.permute.xlu0 3
          %3391 = vperm.xlu0 %3390, %v678
          %v3392 = vpop.permute.xlu0 %3391
          %3394 = vset.pattern.permute.xlu0 3
          %3395 = vperm.xlu0 %3394, %v679
          %v3396 = vpop.permute.xlu0 %3395
          %3398 = vset.pattern.permute.xlu0 3
          %3399 = vperm.xlu0 %3398, %v680
          %v3400 = vpop.permute.xlu0 %3399
          %v3402 = vlaneseq
          %v3403 = vshrl.u32 %v3402, 7
          %v3404 = vsub.s32 3, %v3403
          %v3405 = vrot.slane %v681, %v3404
          %v3406 = vlaneseq
          %v3407 = vshrl.u32 %v3406, 7
          %v3408 = vsub.s32 7, %v3407
          %v3409 = vrot.slane %v681, %v3408
          %v3412 = vlaneseq
          %v3413 = vshrl.u32 %v3412, 7
          %v3414 = vsub.s32 3, %v3413
          %v3415 = vrot.slane %v3405, %v3414
          %v3416 = vlaneseq
          %v3417 = vshrl.u32 %v3416, 7
          %v3418 = vsub.s32 3, %v3417
          %v3419 = vrot.slane %v3409, %v3418
          %v3420 = vadd.f32 %v3340, %v3415
          %v3421 = vadd.f32 %v3340, %v3419
          %v3422 = vadd.f32 %v3344, %v3415
          %v3423 = vadd.f32 %v3344, %v3419
          %v3424 = vadd.f32 %v3348, %v3415
          %v3425 = vadd.f32 %v3348, %v3419
          %v3426 = vadd.f32 %v3352, %v3415
          %v3427 = vadd.f32 %v3352, %v3419
          %v3428 = vadd.f32 %v3356, %v3415
          %v3429 = vadd.f32 %v3356, %v3419
          %v3430 = vadd.f32 %v3360, %v3415
          %v3431 = vadd.f32 %v3360, %v3419
          %v3432 = vadd.f32 %v3364, %v3415
          %v3433 = vadd.f32 %v3364, %v3419
          %v3434 = vadd.f32 %v3368, %v3415
          %v3435 = vadd.f32 %v3368, %v3419
          %v3436 = vadd.f32 %v3372, %v3415
          %v3437 = vadd.f32 %v3372, %v3419
          %v3438 = vadd.f32 %v3376, %v3415
          %v3439 = vadd.f32 %v3376, %v3419
          %v3440 = vadd.f32 %v3380, %v3415
          %v3441 = vadd.f32 %v3380, %v3419
          %v3442 = vadd.f32 %v3384, %v3415
          %v3443 = vadd.f32 %v3384, %v3419
          %v3444 = vadd.f32 %v3388, %v3415
          %v3445 = vadd.f32 %v3388, %v3419
          %v3446 = vadd.f32 %v3392, %v3415
          %v3447 = vadd.f32 %v3392, %v3419
          %v3448 = vadd.f32 %v3396, %v3415
          %v3449 = vadd.f32 %v3396, %v3419
          %v3450 = vadd.f32 %v3400, %v3415
          %v3451 = vadd.f32 %v3400, %v3419
          %v3452 = vmul.f32 %v3420, 0.2
          %v3453 = vmul.f32 %v3421, 0.2
          %v3454 = vmul.f32 %v3422, 0.2
          %v3455 = vmul.f32 %v3423, 0.2
          %v3456 = vmul.f32 %v3424, 0.2
          %v3457 = vmul.f32 %v3425, 0.2
          %v3458 = vmul.f32 %v3426, 0.2
          %v3459 = vmul.f32 %v3427, 0.2
          %v3460 = vmul.f32 %v3428, 0.2
          %v3461 = vmul.f32 %v3429, 0.2
          %v3462 = vmul.f32 %v3430, 0.2
          %v3463 = vmul.f32 %v3431, 0.2
          %v3464 = vmul.f32 %v3432, 0.2
          %v3465 = vmul.f32 %v3433, 0.2
          %v3466 = vmul.f32 %v3434, 0.2
          %v3467 = vmul.f32 %v3435, 0.2
          %v3468 = vmul.f32 %v3436, 0.2
          %v3469 = vmul.f32 %v3437, 0.2
          %v3470 = vmul.f32 %v3438, 0.2
          %v3471 = vmul.f32 %v3439, 0.2
          %v3472 = vmul.f32 %v3440, 0.2
          %v3473 = vmul.f32 %v3441, 0.2
          %v3474 = vmul.f32 %v3442, 0.2
          %v3475 = vmul.f32 %v3443, 0.2
          %v3476 = vmul.f32 %v3444, 0.2
          %v3477 = vmul.f32 %v3445, 0.2
          %v3478 = vmul.f32 %v3446, 0.2
          %v3479 = vmul.f32 %v3447, 0.2
          %v3480 = vmul.f32 %v3448, 0.2
          %v3481 = vmul.f32 %v3449, 0.2
          %v3482 = vmul.f32 %v3450, 0.2
          %v3483 = vmul.f32 %v3451, 0.2
          %v3484 = vmax.f32 %v3420, %v3452
          %v3485 = vmax.f32 %v3421, %v3453
          %v3486 = vmax.f32 %v3422, %v3454
          %v3487 = vmax.f32 %v3423, %v3455
          %v3488 = vmax.f32 %v3424, %v3456
          %v3489 = vmax.f32 %v3425, %v3457
          %v3490 = vmax.f32 %v3426, %v3458
          %v3491 = vmax.f32 %v3427, %v3459
          %v3492 = vmax.f32 %v3428, %v3460
          %v3493 = vmax.f32 %v3429, %v3461
          %v3494 = vmax.f32 %v3430, %v3462
          %v3495 = vmax.f32 %v3431, %v3463
          %v3496 = vmax.f32 %v3432, %v3464
          %v3497 = vmax.f32 %v3433, %v3465
          %v3498 = vmax.f32 %v3434, %v3466
          %v3499 = vmax.f32 %v3435, %v3467
          %v3500 = vmax.f32 %v3436, %v3468
          %v3501 = vmax.f32 %v3437, %v3469
          %v3502 = vmax.f32 %v3438, %v3470
          %v3503 = vmax.f32 %v3439, %v3471
          %v3504 = vmax.f32 %v3440, %v3472
          %v3505 = vmax.f32 %v3441, %v3473
          %v3506 = vmax.f32 %v3442, %v3474
          %v3507 = vmax.f32 %v3443, %v3475
          %v3508 = vmax.f32 %v3444, %v3476
          %v3509 = vmax.f32 %v3445, %v3477
          %v3510 = vmax.f32 %v3446, %v3478
          %v3511 = vmax.f32 %v3447, %v3479
          %v3512 = vmax.f32 %v3448, %v3480
          %v3513 = vmax.f32 %v3449, %v3481
          %v3514 = vmax.f32 %v3450, %v3482
          %v3515 = vmax.f32 %v3451, %v3483
          %v3516 = vadd.f32 %v3484, %v730
          %v3517 = vadd.f32 %v3485, %v731
          %v3518 = vadd.f32 %v3486, %v732
          %v3519 = vadd.f32 %v3487, %v733
          %v3520 = vadd.f32 %v3488, %v734
          %v3521 = vadd.f32 %v3489, %v735
          %v3522 = vadd.f32 %v3490, %v736
          %v3523 = vadd.f32 %v3491, %v737
          %v3524 = vadd.f32 %v3492, %v738
          %v3525 = vadd.f32 %v3493, %v739
          %v3526 = vadd.f32 %v3494, %v740
          %v3527 = vadd.f32 %v3495, %v741
          %v3528 = vadd.f32 %v3496, %v742
          %v3529 = vadd.f32 %v3497, %v743
          %v3530 = vadd.f32 %v3498, %v744
          %v3531 = vadd.f32 %v3499, %v745
          %v3532 = vadd.f32 %v3500, %v746
          %v3533 = vadd.f32 %v3501, %v747
          %v3534 = vadd.f32 %v3502, %v748
          %v3535 = vadd.f32 %v3503, %v749
          %v3536 = vadd.f32 %v3504, %v750
          %v3537 = vadd.f32 %v3505, %v751
          %v3538 = vadd.f32 %v3506, %v752
          %v3539 = vadd.f32 %v3507, %v753
          %v3540 = vadd.f32 %v3508, %v754
          %v3541 = vadd.f32 %v3509, %v755
          %v3542 = vadd.f32 %v3510, %v756
          %v3543 = vadd.f32 %v3511, %v757
          %v3544 = vadd.f32 %v3512, %v758
          %v3545 = vadd.f32 %v3513, %v759
          %v3546 = vadd.f32 %v3514, %v760
          %v3547 = vadd.f32 %v3515, %v761
          %s3548 = scalar_lea.vmem [#allocation2], 384
          %v3549 = vld [vmem:[%s3548] sm:$0xff]
          %v3550 = vld [vmem:[%s3548 + $0x8] sm:$0xff]
          %v3551 = vld [vmem:[%s3548 + $0x10] sm:$0xff]
          %v3552 = vld [vmem:[%s3548 + $0x18] sm:$0xff]
          %v3553 = vld [vmem:[%s3548 + $0x20] sm:$0xff]
          %v3554 = vld [vmem:[%s3548 + $0x28] sm:$0xff]
          %v3555 = vld [vmem:[%s3548 + $0x30] sm:$0xff]
          %v3556 = vld [vmem:[%s3548 + $0x38] sm:$0xff]
          %v3557 = vld [vmem:[%s3548 + $0x40] sm:$0xff]
          %v3558 = vld [vmem:[%s3548 + $0x48] sm:$0xff]
          %v3559 = vld [vmem:[%s3548 + $0x50] sm:$0xff]
          %v3560 = vld [vmem:[%s3548 + $0x58] sm:$0xff]
          %v3561 = vld [vmem:[%s3548 + $0x60] sm:$0xff]
          %v3562 = vld [vmem:[%s3548 + $0x68] sm:$0xff]
          %v3563 = vld [vmem:[%s3548 + $0x70] sm:$0xff]
          %v3564 = vld [vmem:[%s3548 + $0x78] sm:$0xff]
          %v3565 = vmax.f32 %v3516, %v3517
          %3566 = vmax.xlane.f32.xlu0 %v3565
          %v3567 = vpop.xlane.xlu0 %3566
          %v3568 = vmax.f32 %v3518, %v3519
          %3569 = vmax.xlane.f32.xlu0 %v3568
          %v3570 = vpop.xlane.xlu0 %3569
          %v3571 = vmax.f32 %v3520, %v3521
          %3572 = vmax.xlane.f32.xlu0 %v3571
          %v3573 = vpop.xlane.xlu0 %3572
          %v3574 = vmax.f32 %v3522, %v3523
          %3575 = vmax.xlane.f32.xlu0 %v3574
          %v3576 = vpop.xlane.xlu0 %3575
          %v3577 = vmax.f32 %v3524, %v3525
          %3578 = vmax.xlane.f32.xlu0 %v3577
          %v3579 = vpop.xlane.xlu0 %3578
          %v3580 = vmax.f32 %v3526, %v3527
          %3581 = vmax.xlane.f32.xlu0 %v3580
          %v3582 = vpop.xlane.xlu0 %3581
          %v3583 = vmax.f32 %v3528, %v3529
          %3584 = vmax.xlane.f32.xlu0 %v3583
          %v3585 = vpop.xlane.xlu0 %3584
          %v3586 = vmax.f32 %v3530, %v3531
          %3587 = vmax.xlane.f32.xlu0 %v3586
          %v3588 = vpop.xlane.xlu0 %3587
          %v3589 = vmax.f32 %v3532, %v3533
          %3590 = vmax.xlane.f32.xlu0 %v3589
          %v3591 = vpop.xlane.xlu0 %3590
          %v3592 = vmax.f32 %v3534, %v3535
          %3593 = vmax.xlane.f32.xlu0 %v3592
          %v3594 = vpop.xlane.xlu0 %3593
          %v3595 = vmax.f32 %v3536, %v3537
          %3596 = vmax.xlane.f32.xlu0 %v3595
          %v3597 = vpop.xlane.xlu0 %3596
          %v3598 = vmax.f32 %v3538, %v3539
          %3599 = vmax.xlane.f32.xlu0 %v3598
          %v3600 = vpop.xlane.xlu0 %3599
          %v3601 = vmax.f32 %v3540, %v3541
          %3602 = vmax.xlane.f32.xlu0 %v3601
          %v3603 = vpop.xlane.xlu0 %3602
          %v3604 = vmax.f32 %v3542, %v3543
          %3605 = vmax.xlane.f32.xlu0 %v3604
          %v3606 = vpop.xlane.xlu0 %3605
          %v3607 = vmax.f32 %v3544, %v3545
          %3608 = vmax.xlane.f32.xlu0 %v3607
          %v3609 = vpop.xlane.xlu0 %3608
          %v3610 = vmax.f32 %v3546, %v3547
          %3611 = vmax.xlane.f32.xlu0 %v3610
          %v3612 = vpop.xlane.xlu0 %3611
          %v3613 = vmax.f32 %v3549, %v3567
          %v3614 = vmax.f32 %v3550, %v3570
          %v3615 = vmax.f32 %v3551, %v3573
          %v3616 = vmax.f32 %v3552, %v3576
          %v3617 = vmax.f32 %v3553, %v3579
          %v3618 = vmax.f32 %v3554, %v3582
          %v3619 = vmax.f32 %v3555, %v3585
          %v3620 = vmax.f32 %v3556, %v3588
          %v3621 = vmax.f32 %v3557, %v3591
          %v3622 = vmax.f32 %v3558, %v3594
          %v3623 = vmax.f32 %v3559, %v3597
          %v3624 = vmax.f32 %v3560, %v3600
          %v3625 = vmax.f32 %v3561, %v3603
          %v3626 = vmax.f32 %v3562, %v3606
          %v3627 = vmax.f32 %v3563, %v3609
          %v3628 = vmax.f32 %v3564, %v3612
          %v3629 = vsub.f32 %v3549, %v3613
          %v3630 = vsub.f32 %v3550, %v3614
          %v3631 = vsub.f32 %v3551, %v3615
          %v3632 = vsub.f32 %v3552, %v3616
          %v3633 = vsub.f32 %v3553, %v3617
          %v3634 = vsub.f32 %v3554, %v3618
          %v3635 = vsub.f32 %v3555, %v3619
          %v3636 = vsub.f32 %v3556, %v3620
          %v3637 = vsub.f32 %v3557, %v3621
          %v3638 = vsub.f32 %v3558, %v3622
          %v3639 = vsub.f32 %v3559, %v3623
          %v3640 = vsub.f32 %v3560, %v3624
          %v3641 = vsub.f32 %v3561, %v3625
          %v3642 = vsub.f32 %v3562, %v3626
          %v3643 = vsub.f32 %v3563, %v3627
          %v3644 = vsub.f32 %v3564, %v3628
          %v3645 = vmul.f32 %v3629, 1.442695
          %v3646 = vpow.pop %v3645
          %v3647 = vmul.f32 %v3630, 1.442695
          %v3648 = vpow.pop %v3647
          %v3649 = vmul.f32 %v3631, 1.442695
          %v3650 = vpow.pop %v3649
          %v3651 = vmul.f32 %v3632, 1.442695
          %v3652 = vpow.pop %v3651
          %v3653 = vmul.f32 %v3633, 1.442695
          %v3654 = vpow.pop %v3653
          %v3655 = vmul.f32 %v3634, 1.442695
          %v3656 = vpow.pop %v3655
          %v3657 = vmul.f32 %v3635, 1.442695
          %v3658 = vpow.pop %v3657
          %v3659 = vmul.f32 %v3636, 1.442695
          %v3660 = vpow.pop %v3659
          %v3661 = vmul.f32 %v3637, 1.442695
          %v3662 = vpow.pop %v3661
          %v3663 = vmul.f32 %v3638, 1.442695
          %v3664 = vpow.pop %v3663
          %v3665 = vmul.f32 %v3639, 1.442695
          %v3666 = vpow.pop %v3665
          %v3667 = vmul.f32 %v3640, 1.442695
          %v3668 = vpow.pop %v3667
          %v3669 = vmul.f32 %v3641, 1.442695
          %v3670 = vpow.pop %v3669
          %v3671 = vmul.f32 %v3642, 1.442695
          %v3672 = vpow.pop %v3671
          %v3673 = vmul.f32 %v3643, 1.442695
          %v3674 = vpow.pop %v3673
          %v3675 = vmul.f32 %v3644, 1.442695
          %v3676 = vpow.pop %v3675
          %3678 = vset.pattern.permute.xlu0 0
          %3679 = vperm.xlu0 %3678, %v3613
          %v3680 = vpop.permute.xlu0 %3679
          %3683 = vset.pattern.permute.xlu0 0
          %3684 = vperm.xlu0 %3683, %v3614
          %v3685 = vpop.permute.xlu0 %3684
          %3688 = vset.pattern.permute.xlu0 0
          %3689 = vperm.xlu0 %3688, %v3615
          %v3690 = vpop.permute.xlu0 %3689
          %3693 = vset.pattern.permute.xlu0 0
          %3694 = vperm.xlu0 %3693, %v3616
          %v3695 = vpop.permute.xlu0 %3694
          %3698 = vset.pattern.permute.xlu0 0
          %3699 = vperm.xlu0 %3698, %v3617
          %v3700 = vpop.permute.xlu0 %3699
          %3703 = vset.pattern.permute.xlu0 0
          %3704 = vperm.xlu0 %3703, %v3618
          %v3705 = vpop.permute.xlu0 %3704
          %3708 = vset.pattern.permute.xlu0 0
          %3709 = vperm.xlu0 %3708, %v3619
          %v3710 = vpop.permute.xlu0 %3709
          %3713 = vset.pattern.permute.xlu0 0
          %3714 = vperm.xlu0 %3713, %v3620
          %v3715 = vpop.permute.xlu0 %3714
          %3718 = vset.pattern.permute.xlu0 0
          %3719 = vperm.xlu0 %3718, %v3621
          %v3720 = vpop.permute.xlu0 %3719
          %3723 = vset.pattern.permute.xlu0 0
          %3724 = vperm.xlu0 %3723, %v3622
          %v3725 = vpop.permute.xlu0 %3724
          %3728 = vset.pattern.permute.xlu0 0
          %3729 = vperm.xlu0 %3728, %v3623
          %v3730 = vpop.permute.xlu0 %3729
          %3733 = vset.pattern.permute.xlu0 0
          %3734 = vperm.xlu0 %3733, %v3624
          %v3735 = vpop.permute.xlu0 %3734
          %3738 = vset.pattern.permute.xlu0 0
          %3739 = vperm.xlu0 %3738, %v3625
          %v3740 = vpop.permute.xlu0 %3739
          %3743 = vset.pattern.permute.xlu0 0
          %3744 = vperm.xlu0 %3743, %v3626
          %v3745 = vpop.permute.xlu0 %3744
          %3748 = vset.pattern.permute.xlu0 0
          %3749 = vperm.xlu0 %3748, %v3627
          %v3750 = vpop.permute.xlu0 %3749
          %3753 = vset.pattern.permute.xlu0 0
          %3754 = vperm.xlu0 %3753, %v3628
          %v3755 = vpop.permute.xlu0 %3754
          %v3757 = vsub.f32 %v3516, %v3680
          %v3758 = vsub.f32 %v3517, %v3680
          %v3759 = vsub.f32 %v3518, %v3685
          %v3760 = vsub.f32 %v3519, %v3685
          %v3761 = vsub.f32 %v3520, %v3690
          %v3762 = vsub.f32 %v3521, %v3690
          %v3763 = vsub.f32 %v3522, %v3695
          %v3764 = vsub.f32 %v3523, %v3695
          %v3765 = vsub.f32 %v3524, %v3700
          %v3766 = vsub.f32 %v3525, %v3700
          %v3767 = vsub.f32 %v3526, %v3705
          %v3768 = vsub.f32 %v3527, %v3705
          %v3769 = vsub.f32 %v3528, %v3710
          %v3770 = vsub.f32 %v3529, %v3710
          %v3771 = vsub.f32 %v3530, %v3715
          %v3772 = vsub.f32 %v3531, %v3715
          %v3773 = vsub.f32 %v3532, %v3720
          %v3774 = vsub.f32 %v3533, %v3720
          %v3775 = vsub.f32 %v3534, %v3725
          %v3776 = vsub.f32 %v3535, %v3725
          %v3777 = vsub.f32 %v3536, %v3730
          %v3778 = vsub.f32 %v3537, %v3730
          %v3779 = vsub.f32 %v3538, %v3735
          %v3780 = vsub.f32 %v3539, %v3735
          %v3781 = vsub.f32 %v3540, %v3740
          %v3782 = vsub.f32 %v3541, %v3740
          %v3783 = vsub.f32 %v3542, %v3745
          %v3784 = vsub.f32 %v3543, %v3745
          %v3785 = vsub.f32 %v3544, %v3750
          %v3786 = vsub.f32 %v3545, %v3750
          %v3787 = vsub.f32 %v3546, %v3755
          %v3788 = vsub.f32 %v3547, %v3755
          %v3789 = vmul.f32 %v3757, 1.442695
          %v3790 = vpow.pop %v3789
          %v3791 = vmul.f32 %v3758, 1.442695
          %v3792 = vpow.pop %v3791
          %v3793 = vmul.f32 %v3759, 1.442695
          %v3794 = vpow.pop %v3793
          %v3795 = vmul.f32 %v3760, 1.442695
          %v3796 = vpow.pop %v3795
          %v3797 = vmul.f32 %v3761, 1.442695
          %v3798 = vpow.pop %v3797
          %v3799 = vmul.f32 %v3762, 1.442695
          %v3800 = vpow.pop %v3799
          %v3801 = vmul.f32 %v3763, 1.442695
          %v3802 = vpow.pop %v3801
          %v3803 = vmul.f32 %v3764, 1.442695
          %v3804 = vpow.pop %v3803
          %v3805 = vmul.f32 %v3765, 1.442695
          %v3806 = vpow.pop %v3805
          %v3807 = vmul.f32 %v3766, 1.442695
          %v3808 = vpow.pop %v3807
          %v3809 = vmul.f32 %v3767, 1.442695
          %v3810 = vpow.pop %v3809
          %v3811 = vmul.f32 %v3768, 1.442695
          %v3812 = vpow.pop %v3811
          %v3813 = vmul.f32 %v3769, 1.442695
          %v3814 = vpow.pop %v3813
          %v3815 = vmul.f32 %v3770, 1.442695
          %v3816 = vpow.pop %v3815
          %v3817 = vmul.f32 %v3771, 1.442695
          %v3818 = vpow.pop %v3817
          %v3819 = vmul.f32 %v3772, 1.442695
          %v3820 = vpow.pop %v3819
          %v3821 = vmul.f32 %v3773, 1.442695
          %v3822 = vpow.pop %v3821
          %v3823 = vmul.f32 %v3774, 1.442695
          %v3824 = vpow.pop %v3823
          %v3825 = vmul.f32 %v3775, 1.442695
          %v3826 = vpow.pop %v3825
          %v3827 = vmul.f32 %v3776, 1.442695
          %v3828 = vpow.pop %v3827
          %v3829 = vmul.f32 %v3777, 1.442695
          %v3830 = vpow.pop %v3829
          %v3831 = vmul.f32 %v3778, 1.442695
          %v3832 = vpow.pop %v3831
          %v3833 = vmul.f32 %v3779, 1.442695
          %v3834 = vpow.pop %v3833
          %v3835 = vmul.f32 %v3780, 1.442695
          %v3836 = vpow.pop %v3835
          %v3837 = vmul.f32 %v3781, 1.442695
          %v3838 = vpow.pop %v3837
          %v3839 = vmul.f32 %v3782, 1.442695
          %v3840 = vpow.pop %v3839
          %v3841 = vmul.f32 %v3783, 1.442695
          %v3842 = vpow.pop %v3841
          %v3843 = vmul.f32 %v3784, 1.442695
          %v3844 = vpow.pop %v3843
          %v3845 = vmul.f32 %v3785, 1.442695
          %v3846 = vpow.pop %v3845
          %v3847 = vmul.f32 %v3786, 1.442695
          %v3848 = vpow.pop %v3847
          %v3849 = vmul.f32 %v3787, 1.442695
          %v3850 = vpow.pop %v3849
          %v3851 = vmul.f32 %v3788, 1.442695
          %v3852 = vpow.pop %v3851
          %v3853 = vpack.c.bf16 %v3794, %v3790
          %v3854 = vpack.c.bf16 %v3796, %v3792
          %v3855 = vpack.c.bf16 %v3802, %v3798
          %v3856 = vpack.c.bf16 %v3804, %v3800
          %v3857 = vpack.c.bf16 %v3810, %v3806
          %v3858 = vpack.c.bf16 %v3812, %v3808
          %v3859 = vpack.c.bf16 %v3818, %v3814
          %v3860 = vpack.c.bf16 %v3820, %v3816
          %v3861 = vpack.c.bf16 %v3826, %v3822
          %v3862 = vpack.c.bf16 %v3828, %v3824
          %v3863 = vpack.c.bf16 %v3834, %v3830
          %v3864 = vpack.c.bf16 %v3836, %v3832
          %v3865 = vpack.c.bf16 %v3842, %v3838
          %v3866 = vpack.c.bf16 %v3844, %v3840
          %v3867 = vpack.c.bf16 %v3850, %v3846
          %v3868 = vpack.c.bf16 %v3852, %v3848
          %s3869 = scalar_lea.vmem [#allocation3], 384
          %v3870 = vld [vmem:[%s3869] sm:$0xff]
          %v3871 = vld [vmem:[%s3869 + $0x8] sm:$0xff]
          %v3872 = vld [vmem:[%s3869 + $0x10] sm:$0xff]
          %v3873 = vld [vmem:[%s3869 + $0x18] sm:$0xff]
          %v3874 = vld [vmem:[%s3869 + $0x20] sm:$0xff]
          %v3875 = vld [vmem:[%s3869 + $0x28] sm:$0xff]
          %v3876 = vld [vmem:[%s3869 + $0x30] sm:$0xff]
          %v3877 = vld [vmem:[%s3869 + $0x38] sm:$0xff]
          %v3878 = vld [vmem:[%s3869 + $0x40] sm:$0xff]
          %v3879 = vld [vmem:[%s3869 + $0x48] sm:$0xff]
          %v3880 = vld [vmem:[%s3869 + $0x50] sm:$0xff]
          %v3881 = vld [vmem:[%s3869 + $0x58] sm:$0xff]
          %v3882 = vld [vmem:[%s3869 + $0x60] sm:$0xff]
          %v3883 = vld [vmem:[%s3869 + $0x68] sm:$0xff]
          %v3884 = vld [vmem:[%s3869 + $0x70] sm:$0xff]
          %v3885 = vld [vmem:[%s3869 + $0x78] sm:$0xff]
          %3887 = vset.pattern.permute.xlu0 0
          %3888 = vperm.xlu0 %3887, %v3646
          %v3889 = vpop.permute.xlu0 %3888
          %3892 = vset.pattern.permute.xlu0 0
          %3893 = vperm.xlu0 %3892, %v3648
          %v3894 = vpop.permute.xlu0 %3893
          %3897 = vset.pattern.permute.xlu0 0
          %3898 = vperm.xlu0 %3897, %v3650
          %v3899 = vpop.permute.xlu0 %3898
          %3902 = vset.pattern.permute.xlu0 0
          %3903 = vperm.xlu0 %3902, %v3652
          %v3904 = vpop.permute.xlu0 %3903
          %3907 = vset.pattern.permute.xlu0 0
          %3908 = vperm.xlu0 %3907, %v3654
          %v3909 = vpop.permute.xlu0 %3908
          %3912 = vset.pattern.permute.xlu0 0
          %3913 = vperm.xlu0 %3912, %v3656
          %v3914 = vpop.permute.xlu0 %3913
          %3917 = vset.pattern.permute.xlu0 0
          %3918 = vperm.xlu0 %3917, %v3658
          %v3919 = vpop.permute.xlu0 %3918
          %3922 = vset.pattern.permute.xlu0 0
          %3923 = vperm.xlu0 %3922, %v3660
          %v3924 = vpop.permute.xlu0 %3923
          %3927 = vset.pattern.permute.xlu0 0
          %3928 = vperm.xlu0 %3927, %v3662
          %v3929 = vpop.permute.xlu0 %3928
          %3932 = vset.pattern.permute.xlu0 0
          %3933 = vperm.xlu0 %3932, %v3664
          %v3934 = vpop.permute.xlu0 %3933
          %3937 = vset.pattern.permute.xlu0 0
          %3938 = vperm.xlu0 %3937, %v3666
          %v3939 = vpop.permute.xlu0 %3938
          %3942 = vset.pattern.permute.xlu0 0
          %3943 = vperm.xlu0 %3942, %v3668
          %v3944 = vpop.permute.xlu0 %3943
          %3947 = vset.pattern.permute.xlu0 0
          %3948 = vperm.xlu0 %3947, %v3670
          %v3949 = vpop.permute.xlu0 %3948
          %3952 = vset.pattern.permute.xlu0 0
          %3953 = vperm.xlu0 %3952, %v3672
          %v3954 = vpop.permute.xlu0 %3953
          %3957 = vset.pattern.permute.xlu0 0
          %3958 = vperm.xlu0 %3957, %v3674
          %v3959 = vpop.permute.xlu0 %3958
          %3962 = vset.pattern.permute.xlu0 0
          %3963 = vperm.xlu0 %3962, %v3676
          %v3964 = vpop.permute.xlu0 %3963
          %v3966 = vmul.f32 %v3889, %v3870
          %v3967 = vmul.f32 %v3894, %v3871
          %v3968 = vmul.f32 %v3899, %v3872
          %v3969 = vmul.f32 %v3904, %v3873
          %v3970 = vmul.f32 %v3909, %v3874
          %v3971 = vmul.f32 %v3914, %v3875
          %v3972 = vmul.f32 %v3919, %v3876
          %v3973 = vmul.f32 %v3924, %v3877
          %v3974 = vmul.f32 %v3929, %v3878
          %v3975 = vmul.f32 %v3934, %v3879
          %v3976 = vmul.f32 %v3939, %v3880
          %v3977 = vmul.f32 %v3944, %v3881
          %v3978 = vmul.f32 %v3949, %v3882
          %v3979 = vmul.f32 %v3954, %v3883
          %v3980 = vmul.f32 %v3959, %v3884
          %v3981 = vmul.f32 %v3964, %v3885
          %3982 = vrot.lane.b32.xlu0 %v1485, 80
          %v3983 = vpop.permute.xlu0 %3982
          %3984 = vrot.lane.b32.xlu0 %v1486, 80
          %v3985 = vpop.permute.xlu0 %3984
          %3986 = vrot.lane.b32.xlu0 %v1487, 80
          %v3987 = vpop.permute.xlu0 %3986
          %3988 = vrot.lane.b32.xlu0 %v1488, 80
          %v3989 = vpop.permute.xlu0 %3988
          %3990 = vrot.lane.b32.xlu0 %v1489, 80
          %v3991 = vpop.permute.xlu0 %3990
          %3992 = vrot.lane.b32.xlu0 %v1490, 80
          %v3993 = vpop.permute.xlu0 %3992
          %3994 = vrot.lane.b32.xlu0 %v1491, 80
          %v3995 = vpop.permute.xlu0 %3994
          %3996 = vrot.lane.b32.xlu0 %v1492, 80
          %v3997 = vpop.permute.xlu0 %3996
          %3998 = vrot.lane.b32.xlu0 %v1493, 80
          %v3999 = vpop.permute.xlu0 %3998
          %4000 = vrot.lane.b32.xlu0 %v1494, 80
          %v4001 = vpop.permute.xlu0 %4000
          %4002 = vrot.lane.b32.xlu0 %v1495, 80
          %v4003 = vpop.permute.xlu0 %4002
          %4004 = vrot.lane.b32.xlu0 %v1496, 80
          %v4005 = vpop.permute.xlu0 %4004
          %4006 = vrot.lane.b32.xlu0 %v1497, 80
          %v4007 = vpop.permute.xlu0 %4006
          %4008 = vrot.lane.b32.xlu0 %v1498, 80
          %v4009 = vpop.permute.xlu0 %4008
          %4010 = vrot.lane.b32.xlu0 %v1499, 80
          %v4011 = vpop.permute.xlu0 %4010
          %4012 = vrot.lane.b32.xlu0 %v1500, 80
          %v4013 = vpop.permute.xlu0 %4012
          %4030 = vmatprep.subr.bf16.mxu0 0
          %4031 = vmatpush1.bf16.msra.mxu0 %v3983
          %4032 = vmatprep.subr.bf16.mxu0 0
          %4033 = vmatpush1.bf16.msra.mxu0 %v3985
          %4034 = vmatprep.subr.bf16.mxu0 0
          %4035 = vmatpush1.bf16.msra.mxu0 %v3987
          %4036 = vmatprep.subr.bf16.mxu0 0
          %4037 = vmatpush1.bf16.msra.mxu0 %v3989
          %4038 = vmatprep.subr.bf16.mxu0 0
          %4039 = vmatpush1.bf16.msra.mxu0 %v3991
          %4040 = vmatprep.subr.bf16.mxu0 0
          %4041 = vmatpush1.bf16.msra.mxu0 %v3993
          %4042 = vmatprep.subr.bf16.mxu0 0
          %4043 = vmatpush1.bf16.msra.mxu0 %v3995
          %4044 = vmatprep.subr.bf16.mxu0 0
          %4045 = vmatpush1.bf16.msra.mxu0 %v3997
          %4046 = vmatprep.subr.bf16.mxu0 0
          %4047 = vmatpush1.bf16.msra.mxu0 %v3999
          %4048 = vmatprep.subr.bf16.mxu0 0
          %4049 = vmatpush1.bf16.msra.mxu0 %v4001
          %4050 = vmatprep.subr.bf16.mxu0 0
          %4051 = vmatpush1.bf16.msra.mxu0 %v4003
          %4052 = vmatprep.subr.bf16.mxu0 0
          %4053 = vmatpush1.bf16.msra.mxu0 %v4005
          %4054 = vmatprep.subr.bf16.mxu0 0
          %4055 = vmatpush1.bf16.msra.mxu0 %v4007
          %4056 = vmatprep.subr.bf16.mxu0 0
          %4057 = vmatpush1.bf16.msra.mxu0 %v4009
          %4058 = vmatprep.subr.bf16.mxu0 0
          %4059 = vmatpush1.bf16.msra.mxu0 %v4011
          %4060 = vmatprep.subr.bf16.mxu0 0
          %4061 = vmatpush1.bf16.msra.mxu0 %v4013
          %4062 = vmatprep.mubr.bf16.mxu0 %v3854
          %4063 = vmatmul.mubr.bf16.gmra.mrb[0].mxu0 %v3853
          %v4064 = vpop.f32.mrb[0].mxu0
          %v4065 = vadd.f32 0.0, %v4064
          %v4066 = vpop.f32.mrb[0].mxu0
          %v4067 = vpop.f32.mrb[0].mxu0
          %v4068 = vadd.f32 0.0, %v4067
          %v4069 = vpop.f32.mrb[0].mxu0
          %4070 = vmatprep.mubr.bf16.mxu0 %v3856
          %4071 = vmatmul.mubr.bf16.gmra.mrb[0].mxu0 %v3855
          %v4072 = vpop.f32.mrb[0].mxu0
          %v4073 = vadd.f32 0.0, %v4072
          %v4074 = vpop.f32.mrb[0].mxu0
          %v4075 = vpop.f32.mrb[0].mxu0
          %v4076 = vadd.f32 0.0, %v4075
          %v4077 = vpop.f32.mrb[0].mxu0
          %4078 = vmatprep.mubr.bf16.mxu0 %v3858
          %4079 = vmatmul.mubr.bf16.gmra.mrb[0].mxu0 %v3857
          %v4080 = vpop.f32.mrb[0].mxu0
          %v4081 = vadd.f32 0.0, %v4080
          %v4082 = vpop.f32.mrb[0].mxu0
          %v4083 = vpop.f32.mrb[0].mxu0
          %v4084 = vadd.f32 0.0, %v4083
          %v4085 = vpop.f32.mrb[0].mxu0
          %4086 = vmatprep.mubr.bf16.mxu0 %v3860
          %4087 = vmatmul.mubr.bf16.gmra.mrb[0].mxu0 %v3859
          %v4088 = vpop.f32.mrb[0].mxu0
          %v4089 = vadd.f32 0.0, %v4088
          %v4090 = vpop.f32.mrb[0].mxu0
          %v4091 = vpop.f32.mrb[0].mxu0
          %v4092 = vadd.f32 0.0, %v4091
          %v4093 = vpop.f32.mrb[0].mxu0
          %4094 = vmatprep.mubr.bf16.mxu0 %v3862
          %4095 = vmatmul.mubr.bf16.gmra.mrb[0].mxu0 %v3861
          %v4096 = vpop.f32.mrb[0].mxu0
          %v4097 = vadd.f32 0.0, %v4096
          %v4098 = vpop.f32.mrb[0].mxu0
          %v4099 = vpop.f32.mrb[0].mxu0
          %v4100 = vadd.f32 0.0, %v4099
          %v4101 = vpop.f32.mrb[0].mxu0
          %4102 = vmatprep.mubr.bf16.mxu0 %v3864
          %4103 = vmatmul.mubr.bf16.gmra.mrb[0].mxu0 %v3863
          %v4104 = vpop.f32.mrb[0].mxu0
          %v4105 = vadd.f32 0.0, %v4104
          %v4106 = vpop.f32.mrb[0].mxu0
          %v4107 = vpop.f32.mrb[0].mxu0
          %v4108 = vadd.f32 0.0, %v4107
          %v4109 = vpop.f32.mrb[0].mxu0
          %4110 = vmatprep.mubr.bf16.mxu0 %v3866
          %4111 = vmatmul.mubr.bf16.gmra.mrb[0].mxu0 %v3865
          %v4112 = vpop.f32.mrb[0].mxu0
          %v4113 = vadd.f32 0.0, %v4112
          %v4114 = vpop.f32.mrb[0].mxu0
          %v4115 = vpop.f32.mrb[0].mxu0
          %v4116 = vadd.f32 0.0, %v4115
          %v4117 = vpop.f32.mrb[0].mxu0
          %4118 = vmatprep.mubr.bf16.mxu0 %v3868
          %4119 = vmatmul.mubr.bf16.gmra.mrb[0].mxu0 %v3867
          %v4120 = vpop.f32.mrb[0].mxu0
          %v4121 = vadd.f32 0.0, %v4120
          %v4122 = vpop.f32.mrb[0].mxu0
          %v4123 = vpop.f32.mrb[0].mxu0
          %v4124 = vadd.f32 0.0, %v4123
          %v4125 = vpop.f32.mrb[0].mxu0
          %4126 = vdwg.mxu0
          %v4127 = vadd.f32 %v3966, %v4065
          %v4128 = vadd.f32 %v3967, %v4068
          %v4129 = vadd.f32 %v3968, %v4073
          %v4130 = vadd.f32 %v3969, %v4076
          %v4131 = vadd.f32 %v3970, %v4081
          %v4132 = vadd.f32 %v3971, %v4084
          %v4133 = vadd.f32 %v3972, %v4089
          %v4134 = vadd.f32 %v3973, %v4092
          %v4135 = vadd.f32 %v3974, %v4097
          %v4136 = vadd.f32 %v3975, %v4100
          %v4137 = vadd.f32 %v3976, %v4105
          %v4138 = vadd.f32 %v3977, %v4108
          %v4139 = vadd.f32 %v3978, %v4113
          %v4140 = vadd.f32 %v3979, %v4116
          %v4141 = vadd.f32 %v3980, %v4121
          %v4142 = vadd.f32 %v3981, %v4124
          %4143 = vst.msk [vmem:[%s3869] sm:$0xff] %vm1630, %v4127
          %4144 = vst.msk [vmem:[%s3869 + $0x8] sm:$0xff] %vm1630, %v4128
          %4145 = vst.msk [vmem:[%s3869 + $0x10] sm:$0xff] %vm1630, %v4129
          %4146 = vst.msk [vmem:[%s3869 + $0x18] sm:$0xff] %vm1630, %v4130
          %4147 = vst.msk [vmem:[%s3869 + $0x20] sm:$0xff] %vm1630, %v4131
          %4148 = vst.msk [vmem:[%s3869 + $0x28] sm:$0xff] %vm1630, %v4132
          %4149 = vst.msk [vmem:[%s3869 + $0x30] sm:$0xff] %vm1630, %v4133
          %4150 = vst.msk [vmem:[%s3869 + $0x38] sm:$0xff] %vm1630, %v4134
          %4151 = vst.msk [vmem:[%s3869 + $0x40] sm:$0xff] %vm1630, %v4135
          %4152 = vst.msk [vmem:[%s3869 + $0x48] sm:$0xff] %vm1630, %v4136
          %4153 = vst.msk [vmem:[%s3869 + $0x50] sm:$0xff] %vm1630, %v4137
          %4154 = vst.msk [vmem:[%s3869 + $0x58] sm:$0xff] %vm1630, %v4138
          %4155 = vst.msk [vmem:[%s3869 + $0x60] sm:$0xff] %vm1630, %v4139
          %4156 = vst.msk [vmem:[%s3869 + $0x68] sm:$0xff] %vm1630, %v4140
          %4157 = vst.msk [vmem:[%s3869 + $0x70] sm:$0xff] %vm1630, %v4141
          %4158 = vst.msk [vmem:[%s3869 + $0x78] sm:$0xff] %vm1630, %v4142
          %4159 = vst.msk [vmem:[%s3548] sm:$0xff] %vm1647, %v3613
          %4160 = vst.msk [vmem:[%s3548 + $0x8] sm:$0xff] %vm1647, %v3614
          %4161 = vst.msk [vmem:[%s3548 + $0x10] sm:$0xff] %vm1647, %v3615
          %4162 = vst.msk [vmem:[%s3548 + $0x18] sm:$0xff] %vm1647, %v3616
          %4163 = vst.msk [vmem:[%s3548 + $0x20] sm:$0xff] %vm1647, %v3617
          %4164 = vst.msk [vmem:[%s3548 + $0x28] sm:$0xff] %vm1647, %v3618
          %4165 = vst.msk [vmem:[%s3548 + $0x30] sm:$0xff] %vm1647, %v3619
          %4166 = vst.msk [vmem:[%s3548 + $0x38] sm:$0xff] %vm1647, %v3620
          %4167 = vst.msk [vmem:[%s3548 + $0x40] sm:$0xff] %vm1647, %v3621
          %4168 = vst.msk [vmem:[%s3548 + $0x48] sm:$0xff] %vm1647, %v3622
          %4169 = vst.msk [vmem:[%s3548 + $0x50] sm:$0xff] %vm1647, %v3623
          %4170 = vst.msk [vmem:[%s3548 + $0x58] sm:$0xff] %vm1647, %v3624
          %4171 = vst.msk [vmem:[%s3548 + $0x60] sm:$0xff] %vm1647, %v3625
          %4172 = vst.msk [vmem:[%s3548 + $0x68] sm:$0xff] %vm1647, %v3626
          %4173 = vst.msk [vmem:[%s3548 + $0x70] sm:$0xff] %vm1647, %v3627
          %4174 = vst.msk [vmem:[%s3548 + $0x78] sm:$0xff] %vm1647, %v3628
        $region52: #{tpu_custom_call.1} parent=39 // pred_fallthru
          _
        %p4175 = scmp.eq.s32.totalorder %s31, 1
        // Predicated region
        $region53: #{tpu_custom_call.1} parent=39 // pred_check
          %p4176 = pneg %p4175
        $region54: #{tpu_custom_call.1} parent=39 // pred_check_branch
          %4178 = sbr.rel (%p4176) target = $region56
        $region55: #{tpu_custom_call.1} parent=39 // pred_region
          %v4179 = vld [vmem:[#allocation3] sm:$0xff]
          %v4180 = vld [vmem:[#allocation3 + $0x8] sm:$0xff]
          %v4181 = vld [vmem:[#allocation3 + $0x10] sm:$0xff]
          %v4182 = vld [vmem:[#allocation3 + $0x18] sm:$0xff]
          %v4183 = vld [vmem:[#allocation3 + $0x20] sm:$0xff]
          %v4184 = vld [vmem:[#allocation3 + $0x28] sm:$0xff]
          %v4185 = vld [vmem:[#allocation3 + $0x30] sm:$0xff]
          %v4186 = vld [vmem:[#allocation3 + $0x38] sm:$0xff]
          %v4187 = vld [vmem:[#allocation3 + $0x40] sm:$0xff]
          %v4188 = vld [vmem:[#allocation3 + $0x48] sm:$0xff]
          %v4189 = vld [vmem:[#allocation3 + $0x50] sm:$0xff]
          %v4190 = vld [vmem:[#allocation3 + $0x58] sm:$0xff]
          %v4191 = vld [vmem:[#allocation3 + $0x60] sm:$0xff]
          %v4192 = vld [vmem:[#allocation3 + $0x68] sm:$0xff]
          %v4193 = vld [vmem:[#allocation3 + $0x70] sm:$0xff]
          %v4194 = vld [vmem:[#allocation3 + $0x78] sm:$0xff]
          %v4195 = vrcp.pop %v4179
          %v4196 = vrcp.pop %v4180
          %v4197 = vrcp.pop %v4181
          %v4198 = vrcp.pop %v4182
          %v4199 = vrcp.pop %v4183
          %v4200 = vrcp.pop %v4184
          %v4201 = vrcp.pop %v4185
          %v4202 = vrcp.pop %v4186
          %v4203 = vrcp.pop %v4187
          %v4204 = vrcp.pop %v4188
          %v4205 = vrcp.pop %v4189
          %v4206 = vrcp.pop %v4190
          %v4207 = vrcp.pop %v4191
          %v4208 = vrcp.pop %v4192
          %v4209 = vrcp.pop %v4193
          %v4210 = vrcp.pop %v4194
          %4212 = vset.pattern.permute.xlu0 8
          %4213 = vperm.xlu0 %4212, %v4195
          %v4214 = vpop.permute.xlu0 %4213
          %4217 = vset.pattern.permute.xlu0 8
          %4218 = vperm.xlu0 %4217, %v4196
          %v4219 = vpop.permute.xlu0 %4218
          %4222 = vset.pattern.permute.xlu0 8
          %4223 = vperm.xlu0 %4222, %v4197
          %v4224 = vpop.permute.xlu0 %4223
          %4227 = vset.pattern.permute.xlu0 8
          %4228 = vperm.xlu0 %4227, %v4198
          %v4229 = vpop.permute.xlu0 %4228
          %4232 = vset.pattern.permute.xlu0 8
          %4233 = vperm.xlu0 %4232, %v4199
          %v4234 = vpop.permute.xlu0 %4233
          %4237 = vset.pattern.permute.xlu0 8
          %4238 = vperm.xlu0 %4237, %v4200
          %v4239 = vpop.permute.xlu0 %4238
          %4242 = vset.pattern.permute.xlu0 8
          %4243 = vperm.xlu0 %4242, %v4201
          %v4244 = vpop.permute.xlu0 %4243
          %4247 = vset.pattern.permute.xlu0 8
          %4248 = vperm.xlu0 %4247, %v4202
          %v4249 = vpop.permute.xlu0 %4248
          %4252 = vset.pattern.permute.xlu0 8
          %4253 = vperm.xlu0 %4252, %v4203
          %v4254 = vpop.permute.xlu0 %4253
          %4257 = vset.pattern.permute.xlu0 8
          %4258 = vperm.xlu0 %4257, %v4204
          %v4259 = vpop.permute.xlu0 %4258
          %4262 = vset.pattern.permute.xlu0 8
          %4263 = vperm.xlu0 %4262, %v4205
          %v4264 = vpop.permute.xlu0 %4263
          %4267 = vset.pattern.permute.xlu0 8
          %4268 = vperm.xlu0 %4267, %v4206
          %v4269 = vpop.permute.xlu0 %4268
          %4272 = vset.pattern.permute.xlu0 8
          %4273 = vperm.xlu0 %4272, %v4207
          %v4274 = vpop.permute.xlu0 %4273
          %4277 = vset.pattern.permute.xlu0 8
          %4278 = vperm.xlu0 %4277, %v4208
          %v4279 = vpop.permute.xlu0 %4278
          %4282 = vset.pattern.permute.xlu0 8
          %4283 = vperm.xlu0 %4282, %v4209
          %v4284 = vpop.permute.xlu0 %4283
          %4287 = vset.pattern.permute.xlu0 8
          %4288 = vperm.xlu0 %4287, %v4210
          %v4289 = vpop.permute.xlu0 %4288
          %v4291 = vmul.f32 %v4179, %v4214
          %v4292 = vmul.f32 %v4180, %v4219
          %v4293 = vmul.f32 %v4181, %v4224
          %v4294 = vmul.f32 %v4182, %v4229
          %v4295 = vmul.f32 %v4183, %v4234
          %v4296 = vmul.f32 %v4184, %v4239
          %v4297 = vmul.f32 %v4185, %v4244
          %v4298 = vmul.f32 %v4186, %v4249
          %v4299 = vmul.f32 %v4187, %v4254
          %v4300 = vmul.f32 %v4188, %v4259
          %v4301 = vmul.f32 %v4189, %v4264
          %v4302 = vmul.f32 %v4190, %v4269
          %v4303 = vmul.f32 %v4191, %v4274
          %v4304 = vmul.f32 %v4192, %v4279
          %v4305 = vmul.f32 %v4193, %v4284
          %v4306 = vmul.f32 %v4194, %v4289
          %s4307 = scalar_lea.vmem [#allocation3], 128
          %v4308 = vld [vmem:[%s4307] sm:$0xff]
          %v4309 = vld [vmem:[%s4307 + $0x8] sm:$0xff]
          %v4310 = vld [vmem:[%s4307 + $0x10] sm:$0xff]
          %v4311 = vld [vmem:[%s4307 + $0x18] sm:$0xff]
          %v4312 = vld [vmem:[%s4307 + $0x20] sm:$0xff]
          %v4313 = vld [vmem:[%s4307 + $0x28] sm:$0xff]
          %v4314 = vld [vmem:[%s4307 + $0x30] sm:$0xff]
          %v4315 = vld [vmem:[%s4307 + $0x38] sm:$0xff]
          %v4316 = vld [vmem:[%s4307 + $0x40] sm:$0xff]
          %v4317 = vld [vmem:[%s4307 + $0x48] sm:$0xff]
          %v4318 = vld [vmem:[%s4307 + $0x50] sm:$0xff]
          %v4319 = vld [vmem:[%s4307 + $0x58] sm:$0xff]
          %v4320 = vld [vmem:[%s4307 + $0x60] sm:$0xff]
          %v4321 = vld [vmem:[%s4307 + $0x68] sm:$0xff]
          %v4322 = vld [vmem:[%s4307 + $0x70] sm:$0xff]
          %v4323 = vld [vmem:[%s4307 + $0x78] sm:$0xff]
          %v4324 = vrcp.pop %v4308
          %v4325 = vrcp.pop %v4309
          %v4326 = vrcp.pop %v4310
          %v4327 = vrcp.pop %v4311
          %v4328 = vrcp.pop %v4312
          %v4329 = vrcp.pop %v4313
          %v4330 = vrcp.pop %v4314
          %v4331 = vrcp.pop %v4315
          %v4332 = vrcp.pop %v4316
          %v4333 = vrcp.pop %v4317
          %v4334 = vrcp.pop %v4318
          %v4335 = vrcp.pop %v4319
          %v4336 = vrcp.pop %v4320
          %v4337 = vrcp.pop %v4321
          %v4338 = vrcp.pop %v4322
          %v4339 = vrcp.pop %v4323
          %4341 = vset.pattern.permute.xlu0 8
          %4342 = vperm.xlu0 %4341, %v4324
          %v4343 = vpop.permute.xlu0 %4342
          %4346 = vset.pattern.permute.xlu0 8
          %4347 = vperm.xlu0 %4346, %v4325
          %v4348 = vpop.permute.xlu0 %4347
          %4351 = vset.pattern.permute.xlu0 8
          %4352 = vperm.xlu0 %4351, %v4326
          %v4353 = vpop.permute.xlu0 %4352
          %4356 = vset.pattern.permute.xlu0 8
          %4357 = vperm.xlu0 %4356, %v4327
          %v4358 = vpop.permute.xlu0 %4357
          %4361 = vset.pattern.permute.xlu0 8
          %4362 = vperm.xlu0 %4361, %v4328
          %v4363 = vpop.permute.xlu0 %4362
          %4366 = vset.pattern.permute.xlu0 8
          %4367 = vperm.xlu0 %4366, %v4329
          %v4368 = vpop.permute.xlu0 %4367
          %4371 = vset.pattern.permute.xlu0 8
          %4372 = vperm.xlu0 %4371, %v4330
          %v4373 = vpop.permute.xlu0 %4372
          %4376 = vset.pattern.permute.xlu0 8
          %4377 = vperm.xlu0 %4376, %v4331
          %v4378 = vpop.permute.xlu0 %4377
          %4381 = vset.pattern.permute.xlu0 8
          %4382 = vperm.xlu0 %4381, %v4332
          %v4383 = vpop.permute.xlu0 %4382
          %4386 = vset.pattern.permute.xlu0 8
          %4387 = vperm.xlu0 %4386, %v4333
          %v4388 = vpop.permute.xlu0 %4387
          %4391 = vset.pattern.permute.xlu0 8
          %4392 = vperm.xlu0 %4391, %v4334
          %v4393 = vpop.permute.xlu0 %4392
          %4396 = vset.pattern.permute.xlu0 8
          %4397 = vperm.xlu0 %4396, %v4335
          %v4398 = vpop.permute.xlu0 %4397
          %4401 = vset.pattern.permute.xlu0 8
          %4402 = vperm.xlu0 %4401, %v4336
          %v4403 = vpop.permute.xlu0 %4402
          %4406 = vset.pattern.permute.xlu0 8
          %4407 = vperm.xlu0 %4406, %v4337
          %v4408 = vpop.permute.xlu0 %4407
          %4411 = vset.pattern.permute.xlu0 8
          %4412 = vperm.xlu0 %4411, %v4338
          %v4413 = vpop.permute.xlu0 %4412
          %4416 = vset.pattern.permute.xlu0 8
          %4417 = vperm.xlu0 %4416, %v4339
          %v4418 = vpop.permute.xlu0 %4417
          %v4420 = vmul.f32 %v4308, %v4343
          %v4421 = vmul.f32 %v4309, %v4348
          %v4422 = vmul.f32 %v4310, %v4353
          %v4423 = vmul.f32 %v4311, %v4358
          %v4424 = vmul.f32 %v4312, %v4363
          %v4425 = vmul.f32 %v4313, %v4368
          %v4426 = vmul.f32 %v4314, %v4373
          %v4427 = vmul.f32 %v4315, %v4378
          %v4428 = vmul.f32 %v4316, %v4383
          %v4429 = vmul.f32 %v4317, %v4388
          %v4430 = vmul.f32 %v4318, %v4393
          %v4431 = vmul.f32 %v4319, %v4398
          %v4432 = vmul.f32 %v4320, %v4403
          %v4433 = vmul.f32 %v4321, %v4408
          %v4434 = vmul.f32 %v4322, %v4413
          %v4435 = vmul.f32 %v4323, %v4418
          %s4436 = scalar_lea.vmem [#allocation3], 256
          %v4437 = vld [vmem:[%s4436] sm:$0xff]
          %v4438 = vld [vmem:[%s4436 + $0x8] sm:$0xff]
          %v4439 = vld [vmem:[%s4436 + $0x10] sm:$0xff]
          %v4440 = vld [vmem:[%s4436 + $0x18] sm:$0xff]
          %v4441 = vld [vmem:[%s4436 + $0x20] sm:$0xff]
          %v4442 = vld [vmem:[%s4436 + $0x28] sm:$0xff]
          %v4443 = vld [vmem:[%s4436 + $0x30] sm:$0xff]
          %v4444 = vld [vmem:[%s4436 + $0x38] sm:$0xff]
          %v4445 = vld [vmem:[%s4436 + $0x40] sm:$0xff]
          %v4446 = vld [vmem:[%s4436 + $0x48] sm:$0xff]
          %v4447 = vld [vmem:[%s4436 + $0x50] sm:$0xff]
          %v4448 = vld [vmem:[%s4436 + $0x58] sm:$0xff]
          %v4449 = vld [vmem:[%s4436 + $0x60] sm:$0xff]
          %v4450 = vld [vmem:[%s4436 + $0x68] sm:$0xff]
          %v4451 = vld [vmem:[%s4436 + $0x70] sm:$0xff]
          %v4452 = vld [vmem:[%s4436 + $0x78] sm:$0xff]
          %v4453 = vrcp.pop %v4437
          %v4454 = vrcp.pop %v4438
          %v4455 = vrcp.pop %v4439
          %v4456 = vrcp.pop %v4440
          %v4457 = vrcp.pop %v4441
          %v4458 = vrcp.pop %v4442
          %v4459 = vrcp.pop %v4443
          %v4460 = vrcp.pop %v4444
          %v4461 = vrcp.pop %v4445
          %v4462 = vrcp.pop %v4446
          %v4463 = vrcp.pop %v4447
          %v4464 = vrcp.pop %v4448
          %v4465 = vrcp.pop %v4449
          %v4466 = vrcp.pop %v4450
          %v4467 = vrcp.pop %v4451
          %v4468 = vrcp.pop %v4452
          %4470 = vset.pattern.permute.xlu0 8
          %4471 = vperm.xlu0 %4470, %v4453
          %v4472 = vpop.permute.xlu0 %4471
          %4475 = vset.pattern.permute.xlu0 8
          %4476 = vperm.xlu0 %4475, %v4454
          %v4477 = vpop.permute.xlu0 %4476
          %4480 = vset.pattern.permute.xlu0 8
          %4481 = vperm.xlu0 %4480, %v4455
          %v4482 = vpop.permute.xlu0 %4481
          %4485 = vset.pattern.permute.xlu0 8
          %4486 = vperm.xlu0 %4485, %v4456
          %v4487 = vpop.permute.xlu0 %4486
          %4490 = vset.pattern.permute.xlu0 8
          %4491 = vperm.xlu0 %4490, %v4457
          %v4492 = vpop.permute.xlu0 %4491
          %4495 = vset.pattern.permute.xlu0 8
          %4496 = vperm.xlu0 %4495, %v4458
          %v4497 = vpop.permute.xlu0 %4496
          %4500 = vset.pattern.permute.xlu0 8
          %4501 = vperm.xlu0 %4500, %v4459
          %v4502 = vpop.permute.xlu0 %4501
          %4505 = vset.pattern.permute.xlu0 8
          %4506 = vperm.xlu0 %4505, %v4460
          %v4507 = vpop.permute.xlu0 %4506
          %4510 = vset.pattern.permute.xlu0 8
          %4511 = vperm.xlu0 %4510, %v4461
          %v4512 = vpop.permute.xlu0 %4511
          %4515 = vset.pattern.permute.xlu0 8
          %4516 = vperm.xlu0 %4515, %v4462
          %v4517 = vpop.permute.xlu0 %4516
          %4520 = vset.pattern.permute.xlu0 8
          %4521 = vperm.xlu0 %4520, %v4463
          %v4522 = vpop.permute.xlu0 %4521
          %4525 = vset.pattern.permute.xlu0 8
          %4526 = vperm.xlu0 %4525, %v4464
          %v4527 = vpop.permute.xlu0 %4526
          %4530 = vset.pattern.permute.xlu0 8
          %4531 = vperm.xlu0 %4530, %v4465
          %v4532 = vpop.permute.xlu0 %4531
          %4535 = vset.pattern.permute.xlu0 8
          %4536 = vperm.xlu0 %4535, %v4466
          %v4537 = vpop.permute.xlu0 %4536
          %4540 = vset.pattern.permute.xlu0 8
          %4541 = vperm.xlu0 %4540, %v4467
          %v4542 = vpop.permute.xlu0 %4541
          %4545 = vset.pattern.permute.xlu0 8
          %4546 = vperm.xlu0 %4545, %v4468
          %v4547 = vpop.permute.xlu0 %4546
          %v4549 = vmul.f32 %v4437, %v4472
          %v4550 = vmul.f32 %v4438, %v4477
          %v4551 = vmul.f32 %v4439, %v4482
          %v4552 = vmul.f32 %v4440, %v4487
          %v4553 = vmul.f32 %v4441, %v4492
          %v4554 = vmul.f32 %v4442, %v4497
          %v4555 = vmul.f32 %v4443, %v4502
          %v4556 = vmul.f32 %v4444, %v4507
          %v4557 = vmul.f32 %v4445, %v4512
          %v4558 = vmul.f32 %v4446, %v4517
          %v4559 = vmul.f32 %v4447, %v4522
          %v4560 = vmul.f32 %v4448, %v4527
          %v4561 = vmul.f32 %v4449, %v4532
          %v4562 = vmul.f32 %v4450, %v4537
          %v4563 = vmul.f32 %v4451, %v4542
          %v4564 = vmul.f32 %v4452, %v4547
          %s4565 = scalar_lea.vmem [#allocation3], 384
          %v4566 = vld [vmem:[%s4565] sm:$0xff]
          %v4567 = vld [vmem:[%s4565 + $0x8] sm:$0xff]
          %v4568 = vld [vmem:[%s4565 + $0x10] sm:$0xff]
          %v4569 = vld [vmem:[%s4565 + $0x18] sm:$0xff]
          %v4570 = vld [vmem:[%s4565 + $0x20] sm:$0xff]
          %v4571 = vld [vmem:[%s4565 + $0x28] sm:$0xff]
          %v4572 = vld [vmem:[%s4565 + $0x30] sm:$0xff]
          %v4573 = vld [vmem:[%s4565 + $0x38] sm:$0xff]
          %v4574 = vld [vmem:[%s4565 + $0x40] sm:$0xff]
          %v4575 = vld [vmem:[%s4565 + $0x48] sm:$0xff]
          %v4576 = vld [vmem:[%s4565 + $0x50] sm:$0xff]
          %v4577 = vld [vmem:[%s4565 + $0x58] sm:$0xff]
          %v4578 = vld [vmem:[%s4565 + $0x60] sm:$0xff]
          %v4579 = vld [vmem:[%s4565 + $0x68] sm:$0xff]
          %v4580 = vld [vmem:[%s4565 + $0x70] sm:$0xff]
          %v4581 = vld [vmem:[%s4565 + $0x78] sm:$0xff]
          %v4582 = vrcp.pop %v4566
          %v4583 = vrcp.pop %v4567
          %v4584 = vrcp.pop %v4568
          %v4585 = vrcp.pop %v4569
          %v4586 = vrcp.pop %v4570
          %v4587 = vrcp.pop %v4571
          %v4588 = vrcp.pop %v4572
          %v4589 = vrcp.pop %v4573
          %v4590 = vrcp.pop %v4574
          %v4591 = vrcp.pop %v4575
          %v4592 = vrcp.pop %v4576
          %v4593 = vrcp.pop %v4577
          %v4594 = vrcp.pop %v4578
          %v4595 = vrcp.pop %v4579
          %v4596 = vrcp.pop %v4580
          %v4597 = vrcp.pop %v4581
          %4599 = vset.pattern.permute.xlu0 8
          %4600 = vperm.xlu0 %4599, %v4582
          %v4601 = vpop.permute.xlu0 %4600
          %4604 = vset.pattern.permute.xlu0 8
          %4605 = vperm.xlu0 %4604, %v4583
          %v4606 = vpop.permute.xlu0 %4605
          %4609 = vset.pattern.permute.xlu0 8
          %4610 = vperm.xlu0 %4609, %v4584
          %v4611 = vpop.permute.xlu0 %4610
          %4614 = vset.pattern.permute.xlu0 8
          %4615 = vperm.xlu0 %4614, %v4585
          %v4616 = vpop.permute.xlu0 %4615
          %4619 = vset.pattern.permute.xlu0 8
          %4620 = vperm.xlu0 %4619, %v4586
          %v4621 = vpop.permute.xlu0 %4620
          %4624 = vset.pattern.permute.xlu0 8
          %4625 = vperm.xlu0 %4624, %v4587
          %v4626 = vpop.permute.xlu0 %4625
          %4629 = vset.pattern.permute.xlu0 8
          %4630 = vperm.xlu0 %4629, %v4588
          %v4631 = vpop.permute.xlu0 %4630
          %4634 = vset.pattern.permute.xlu0 8
          %4635 = vperm.xlu0 %4634, %v4589
          %v4636 = vpop.permute.xlu0 %4635
          %4639 = vset.pattern.permute.xlu0 8
          %4640 = vperm.xlu0 %4639, %v4590
          %v4641 = vpop.permute.xlu0 %4640
          %4644 = vset.pattern.permute.xlu0 8
          %4645 = vperm.xlu0 %4644, %v4591
          %v4646 = vpop.permute.xlu0 %4645
          %4649 = vset.pattern.permute.xlu0 8
          %4650 = vperm.xlu0 %4649, %v4592
          %v4651 = vpop.permute.xlu0 %4650
          %4654 = vset.pattern.permute.xlu0 8
          %4655 = vperm.xlu0 %4654, %v4593
          %v4656 = vpop.permute.xlu0 %4655
          %4659 = vset.pattern.permute.xlu0 8
          %4660 = vperm.xlu0 %4659, %v4594
          %v4661 = vpop.permute.xlu0 %4660
          %4664 = vset.pattern.permute.xlu0 8
          %4665 = vperm.xlu0 %4664, %v4595
          %v4666 = vpop.permute.xlu0 %4665
          %4669 = vset.pattern.permute.xlu0 8
          %4670 = vperm.xlu0 %4669, %v4596
          %v4671 = vpop.permute.xlu0 %4670
          %4674 = vset.pattern.permute.xlu0 8
          %4675 = vperm.xlu0 %4674, %v4597
          %v4676 = vpop.permute.xlu0 %4675
          %v4678 = vmul.f32 %v4566, %v4601
          %v4679 = vmul.f32 %v4567, %v4606
          %v4680 = vmul.f32 %v4568, %v4611
          %v4681 = vmul.f32 %v4569, %v4616
          %v4682 = vmul.f32 %v4570, %v4621
          %v4683 = vmul.f32 %v4571, %v4626
          %v4684 = vmul.f32 %v4572, %v4631
          %v4685 = vmul.f32 %v4573, %v4636
          %v4686 = vmul.f32 %v4574, %v4641
          %v4687 = vmul.f32 %v4575, %v4646
          %v4688 = vmul.f32 %v4576, %v4651
          %v4689 = vmul.f32 %v4577, %v4656
          %v4690 = vmul.f32 %v4578, %v4661
          %v4691 = vmul.f32 %v4579, %v4666
          %v4692 = vmul.f32 %v4580, %v4671
          %v4693 = vmul.f32 %v4581, %v4676
          %4710 = vrot.lane.b32.xlu0 %v4420, 8
          %v4711 = vpop.permute.xlu0 %4710
          %4712 = vrot.lane.b32.xlu0 %v4421, 8
          %v4713 = vpop.permute.xlu0 %4712
          %4714 = vrot.lane.b32.xlu0 %v4422, 8
          %v4715 = vpop.permute.xlu0 %4714
          %4716 = vrot.lane.b32.xlu0 %v4423, 8
          %v4717 = vpop.permute.xlu0 %4716
          %4718 = vrot.lane.b32.xlu0 %v4424, 8
          %v4719 = vpop.permute.xlu0 %4718
          %4720 = vrot.lane.b32.xlu0 %v4425, 8
          %v4721 = vpop.permute.xlu0 %4720
          %4722 = vrot.lane.b32.xlu0 %v4426, 8
          %v4723 = vpop.permute.xlu0 %4722
          %4724 = vrot.lane.b32.xlu0 %v4427, 8
          %v4725 = vpop.permute.xlu0 %4724
          %4726 = vrot.lane.b32.xlu0 %v4428, 8
          %v4727 = vpop.permute.xlu0 %4726
          %4728 = vrot.lane.b32.xlu0 %v4429, 8
          %v4729 = vpop.permute.xlu0 %4728
          %4730 = vrot.lane.b32.xlu0 %v4430, 8
          %v4731 = vpop.permute.xlu0 %4730
          %4732 = vrot.lane.b32.xlu0 %v4431, 8
          %v4733 = vpop.permute.xlu0 %4732
          %4734 = vrot.lane.b32.xlu0 %v4432, 8
          %v4735 = vpop.permute.xlu0 %4734
          %4736 = vrot.lane.b32.xlu0 %v4433, 8
          %v4737 = vpop.permute.xlu0 %4736
          %4738 = vrot.lane.b32.xlu0 %v4434, 8
          %v4739 = vpop.permute.xlu0 %4738
          %4740 = vrot.lane.b32.xlu0 %v4435, 8
          %v4741 = vpop.permute.xlu0 %4740
          %4774 = vrot.lane.b32.xlu0 %v4549, 16
          %v4775 = vpop.permute.xlu0 %4774
          %4776 = vrot.lane.b32.xlu0 %v4550, 16
          %v4777 = vpop.permute.xlu0 %4776
          %4778 = vrot.lane.b32.xlu0 %v4551, 16
          %v4779 = vpop.permute.xlu0 %4778
          %4780 = vrot.lane.b32.xlu0 %v4552, 16
          %v4781 = vpop.permute.xlu0 %4780
          %4782 = vrot.lane.b32.xlu0 %v4553, 16
          %v4783 = vpop.permute.xlu0 %4782
          %4784 = vrot.lane.b32.xlu0 %v4554, 16
          %v4785 = vpop.permute.xlu0 %4784
          %4786 = vrot.lane.b32.xlu0 %v4555, 16
          %v4787 = vpop.permute.xlu0 %4786
          %4788 = vrot.lane.b32.xlu0 %v4556, 16
          %v4789 = vpop.permute.xlu0 %4788
          %4790 = vrot.lane.b32.xlu0 %v4557, 16
          %v4791 = vpop.permute.xlu0 %4790
          %4792 = vrot.lane.b32.xlu0 %v4558, 16
          %v4793 = vpop.permute.xlu0 %4792
          %4794 = vrot.lane.b32.xlu0 %v4559, 16
          %v4795 = vpop.permute.xlu0 %4794
          %4796 = vrot.lane.b32.xlu0 %v4560, 16
          %v4797 = vpop.permute.xlu0 %4796
          %4798 = vrot.lane.b32.xlu0 %v4561, 16
          %v4799 = vpop.permute.xlu0 %4798
          %4800 = vrot.lane.b32.xlu0 %v4562, 16
          %v4801 = vpop.permute.xlu0 %4800
          %4802 = vrot.lane.b32.xlu0 %v4563, 16
          %v4803 = vpop.permute.xlu0 %4802
          %4804 = vrot.lane.b32.xlu0 %v4564, 16
          %v4805 = vpop.permute.xlu0 %4804
          %4838 = vrot.lane.b32.xlu0 %v4678, 24
          %v4839 = vpop.permute.xlu0 %4838
          %4840 = vrot.lane.b32.xlu0 %v4679, 24
          %v4841 = vpop.permute.xlu0 %4840
          %4842 = vrot.lane.b32.xlu0 %v4680, 24
          %v4843 = vpop.permute.xlu0 %4842
          %4844 = vrot.lane.b32.xlu0 %v4681, 24
          %v4845 = vpop.permute.xlu0 %4844
          %4846 = vrot.lane.b32.xlu0 %v4682, 24
          %v4847 = vpop.permute.xlu0 %4846
          %4848 = vrot.lane.b32.xlu0 %v4683, 24
          %v4849 = vpop.permute.xlu0 %4848
          %4850 = vrot.lane.b32.xlu0 %v4684, 24
          %v4851 = vpop.permute.xlu0 %4850
          %4852 = vrot.lane.b32.xlu0 %v4685, 24
          %v4853 = vpop.permute.xlu0 %4852
          %4854 = vrot.lane.b32.xlu0 %v4686, 24
          %v4855 = vpop.permute.xlu0 %4854
          %4856 = vrot.lane.b32.xlu0 %v4687, 24
          %v4857 = vpop.permute.xlu0 %4856
          %4858 = vrot.lane.b32.xlu0 %v4688, 24
          %v4859 = vpop.permute.xlu0 %4858
          %4860 = vrot.lane.b32.xlu0 %v4689, 24
          %v4861 = vpop.permute.xlu0 %4860
          %4862 = vrot.lane.b32.xlu0 %v4690, 24
          %v4863 = vpop.permute.xlu0 %4862
          %4864 = vrot.lane.b32.xlu0 %v4691, 24
          %v4865 = vpop.permute.xlu0 %4864
          %4866 = vrot.lane.b32.xlu0 %v4692, 24
          %v4867 = vpop.permute.xlu0 %4866
          %4868 = vrot.lane.b32.xlu0 %v4693, 24
          %v4869 = vpop.permute.xlu0 %4868
          %vm4886 = vcmask 64512
          %v4887 = vsel %vm4886, %v4291, %v4711
          %v4888 = vsel %vm4886, %v4292, %v4713
          %v4889 = vsel %vm4886, %v4293, %v4715
          %v4890 = vsel %vm4886, %v4294, %v4717
          %v4891 = vsel %vm4886, %v4295, %v4719
          %v4892 = vsel %vm4886, %v4296, %v4721
          %v4893 = vsel %vm4886, %v4297, %v4723
          %v4894 = vsel %vm4886, %v4298, %v4725
          %v4895 = vsel %vm4886, %v4299, %v4727
          %v4896 = vsel %vm4886, %v4300, %v4729
          %v4897 = vsel %vm4886, %v4301, %v4731
          %v4898 = vsel %vm4886, %v4302, %v4733
          %v4899 = vsel %vm4886, %v4303, %v4735
          %v4900 = vsel %vm4886, %v4304, %v4737
          %v4901 = vsel %vm4886, %v4305, %v4739
          %v4902 = vsel %vm4886, %v4306, %v4741
          %vm4903 = vcmask 130048
          %v4904 = vsel %vm4903, %v4887, %v4775
          %v4905 = vsel %vm4903, %v4888, %v4777
          %v4906 = vsel %vm4903, %v4889, %v4779
          %v4907 = vsel %vm4903, %v4890, %v4781
          %v4908 = vsel %vm4903, %v4891, %v4783
          %v4909 = vsel %vm4903, %v4892, %v4785
          %v4910 = vsel %vm4903, %v4893, %v4787
          %v4911 = vsel %vm4903, %v4894, %v4789
          %v4912 = vsel %vm4903, %v4895, %v4791
          %v4913 = vsel %vm4903, %v4896, %v4793
          %v4914 = vsel %vm4903, %v4897, %v4795
          %v4915 = vsel %vm4903, %v4898, %v4797
          %v4916 = vsel %vm4903, %v4899, %v4799
          %v4917 = vsel %vm4903, %v4900, %v4801
          %v4918 = vsel %vm4903, %v4901, %v4803
          %v4919 = vsel %vm4903, %v4902, %v4805
          %vm4920 = vcmask 195584
          %v4921 = vsel %vm4920, %v4904, %v4839
          %v4922 = vsel %vm4920, %v4905, %v4841
          %v4923 = vsel %vm4920, %v4906, %v4843
          %v4924 = vsel %vm4920, %v4907, %v4845
          %v4925 = vsel %vm4920, %v4908, %v4847
          %v4926 = vsel %vm4920, %v4909, %v4849
          %v4927 = vsel %vm4920, %v4910, %v4851
          %v4928 = vsel %vm4920, %v4911, %v4853
          %v4929 = vsel %vm4920, %v4912, %v4855
          %v4930 = vsel %vm4920, %v4913, %v4857
          %v4931 = vsel %vm4920, %v4914, %v4859
          %v4932 = vsel %vm4920, %v4915, %v4861
          %v4933 = vsel %vm4920, %v4916, %v4863
          %v4934 = vsel %vm4920, %v4917, %v4865
          %v4935 = vsel %vm4920, %v4918, %v4867
          %v4936 = vsel %vm4920, %v4919, %v4869
          %v4937 = vld [vmem:[%s5] sm:$0x1]
          %v4939 = vlaneseq
          %v4940 = vshrl.u32 %v4939, 7
          %v4941 = vsub.s32 0, %v4940
          %v4942 = vrot.slane %v4937, %v4941
          %v4944 = vadd.f32 %v4921, %v4942
          %v4945 = vadd.f32 %v4922, %v4942
          %v4946 = vadd.f32 %v4923, %v4942
          %v4947 = vadd.f32 %v4924, %v4942
          %v4948 = vadd.f32 %v4925, %v4942
          %v4949 = vadd.f32 %v4926, %v4942
          %v4950 = vadd.f32 %v4927, %v4942
          %v4951 = vadd.f32 %v4928, %v4942
          %v4952 = vadd.f32 %v4929, %v4942
          %v4953 = vadd.f32 %v4930, %v4942
          %v4954 = vadd.f32 %v4931, %v4942
          %v4955 = vadd.f32 %v4932, %v4942
          %v4956 = vadd.f32 %v4933, %v4942
          %v4957 = vadd.f32 %v4934, %v4942
          %v4958 = vadd.f32 %v4935, %v4942
          %v4959 = vadd.f32 %v4936, %v4942
          %vm4960 = vcmp.gt.f32.partialorder %v4944, 0.0
          %vm4961 = vcmp.gt.f32.partialorder %v4945, 0.0
          %vm4962 = vcmp.gt.f32.partialorder %v4946, 0.0
          %vm4963 = vcmp.gt.f32.partialorder %v4947, 0.0
          %vm4964 = vcmp.gt.f32.partialorder %v4948, 0.0
          %vm4965 = vcmp.gt.f32.partialorder %v4949, 0.0
          %vm4966 = vcmp.gt.f32.partialorder %v4950, 0.0
          %vm4967 = vcmp.gt.f32.partialorder %v4951, 0.0
          %vm4968 = vcmp.gt.f32.partialorder %v4952, 0.0
          %vm4969 = vcmp.gt.f32.partialorder %v4953, 0.0
          %vm4970 = vcmp.gt.f32.partialorder %v4954, 0.0
          %vm4971 = vcmp.gt.f32.partialorder %v4955, 0.0
          %vm4972 = vcmp.gt.f32.partialorder %v4956, 0.0
          %vm4973 = vcmp.gt.f32.partialorder %v4957, 0.0
          %vm4974 = vcmp.gt.f32.partialorder %v4958, 0.0
          %vm4975 = vcmp.gt.f32.partialorder %v4959, 0.0
          %v4976 = vmin.f32 %v4944, 0.0
          %v4977 = vmin.f32 %v4945, 0.0
          %v4978 = vmin.f32 %v4946, 0.0
          %v4979 = vmin.f32 %v4947, 0.0
          %v4980 = vmin.f32 %v4948, 0.0
          %v4981 = vmin.f32 %v4949, 0.0
          %v4982 = vmin.f32 %v4950, 0.0
          %v4983 = vmin.f32 %v4951, 0.0
          %v4984 = vmin.f32 %v4952, 0.0
          %v4985 = vmin.f32 %v4953, 0.0
          %v4986 = vmin.f32 %v4954, 0.0
          %v4987 = vmin.f32 %v4955, 0.0
          %v4988 = vmin.f32 %v4956, 0.0
          %v4989 = vmin.f32 %v4957, 0.0
          %v4990 = vmin.f32 %v4958, 0.0
          %v4991 = vmin.f32 %v4959, 0.0
          %v4992 = vmul.f32 %v4976, 1.442695
          %v4993 = vpow.pop %v4992
          %v4994 = vmul.f32 %v4977, 1.442695
          %v4995 = vpow.pop %v4994
          %v4996 = vmul.f32 %v4978, 1.442695
          %v4997 = vpow.pop %v4996
          %v4998 = vmul.f32 %v4979, 1.442695
          %v4999 = vpow.pop %v4998
          %v5000 = vmul.f32 %v4980, 1.442695
          %v5001 = vpow.pop %v5000
          %v5002 = vmul.f32 %v4981, 1.442695
          %v5003 = vpow.pop %v5002
          %v5004 = vmul.f32 %v4982, 1.442695
          %v5005 = vpow.pop %v5004
          %v5006 = vmul.f32 %v4983, 1.442695
          %v5007 = vpow.pop %v5006
          %v5008 = vmul.f32 %v4984, 1.442695
          %v5009 = vpow.pop %v5008
          %v5010 = vmul.f32 %v4985, 1.442695
          %v5011 = vpow.pop %v5010
          %v5012 = vmul.f32 %v4986, 1.442695
          %v5013 = vpow.pop %v5012
          %v5014 = vmul.f32 %v4987, 1.442695
          %v5015 = vpow.pop %v5014
          %v5016 = vmul.f32 %v4988, 1.442695
          %v5017 = vpow.pop %v5016
          %v5018 = vmul.f32 %v4989, 1.442695
          %v5019 = vpow.pop %v5018
          %v5020 = vmul.f32 %v4990, 1.442695
          %v5021 = vpow.pop %v5020
          %v5022 = vmul.f32 %v4991, 1.442695
          %v5023 = vpow.pop %v5022
          %v5024 = vsub.f32 %v4993, 1.0
          %v5025 = vsub.f32 %v4995, 1.0
          %v5026 = vsub.f32 %v4997, 1.0
          %v5027 = vsub.f32 %v4999, 1.0
          %v5028 = vsub.f32 %v5001, 1.0
          %v5029 = vsub.f32 %v5003, 1.0
          %v5030 = vsub.f32 %v5005, 1.0
          %v5031 = vsub.f32 %v5007, 1.0
          %v5032 = vsub.f32 %v5009, 1.0
          %v5033 = vsub.f32 %v5011, 1.0
          %v5034 = vsub.f32 %v5013, 1.0
          %v5035 = vsub.f32 %v5015, 1.0
          %v5036 = vsub.f32 %v5017, 1.0
          %v5037 = vsub.f32 %v5019, 1.0
          %v5038 = vsub.f32 %v5021, 1.0
          %v5039 = vsub.f32 %v5023, 1.0
          %v5040 = vsel %vm4960, %v4944, %v5024
          %v5041 = vsel %vm4961, %v4945, %v5025
          %v5042 = vsel %vm4962, %v4946, %v5026
          %v5043 = vsel %vm4963, %v4947, %v5027
          %v5044 = vsel %vm4964, %v4948, %v5028
          %v5045 = vsel %vm4965, %v4949, %v5029
          %v5046 = vsel %vm4966, %v4950, %v5030
          %v5047 = vsel %vm4967, %v4951, %v5031
          %v5048 = vsel %vm4968, %v4952, %v5032
          %v5049 = vsel %vm4969, %v4953, %v5033
          %v5050 = vsel %vm4970, %v4954, %v5034
          %v5051 = vsel %vm4971, %v4955, %v5035
          %v5052 = vsel %vm4972, %v4956, %v5036
          %v5053 = vsel %vm4973, %v4957, %v5037
          %v5054 = vsel %vm4974, %v4958, %v5038
          %v5055 = vsel %vm4975, %v4959, %v5039
          %vm5056 = vcmask 261120
          %5057 = vst.msk [vmem:[%s516] sm:$0xff] %vm5056, %v5040
          %5058 = vst.msk [vmem:[%s516 + $0x8] sm:$0xff] %vm5056, %v5041
          %5059 = vst.msk [vmem:[%s516 + $0x10] sm:$0xff] %vm5056, %v5042
          %5060 = vst.msk [vmem:[%s516 + $0x18] sm:$0xff] %vm5056, %v5043
          %5061 = vst.msk [vmem:[%s516 + $0x20] sm:$0xff] %vm5056, %v5044
          %5062 = vst.msk [vmem:[%s516 + $0x28] sm:$0xff] %vm5056, %v5045
          %5063 = vst.msk [vmem:[%s516 + $0x30] sm:$0xff] %vm5056, %v5046
          %5064 = vst.msk [vmem:[%s516 + $0x38] sm:$0xff] %vm5056, %v5047
          %5065 = vst.msk [vmem:[%s516 + $0x40] sm:$0xff] %vm5056, %v5048
          %5066 = vst.msk [vmem:[%s516 + $0x48] sm:$0xff] %vm5056, %v5049
          %5067 = vst.msk [vmem:[%s516 + $0x50] sm:$0xff] %vm5056, %v5050
          %5068 = vst.msk [vmem:[%s516 + $0x58] sm:$0xff] %vm5056, %v5051
          %5069 = vst.msk [vmem:[%s516 + $0x60] sm:$0xff] %vm5056, %v5052
          %5070 = vst.msk [vmem:[%s516 + $0x68] sm:$0xff] %vm5056, %v5053
          %5071 = vst.msk [vmem:[%s516 + $0x70] sm:$0xff] %vm5056, %v5054
          %5072 = vst.msk [vmem:[%s516 + $0x78] sm:$0xff] %vm5056, %v5055
        $region56: #{tpu_custom_call.1} parent=39 // pred_fallthru
          _
        %s5073 = smul.u32 16, %s30
        %p5074 = scmp.lt.s32.totalorder %s5073, 63
        %s5075 = scalar_select %p5074, %s5073, 63
        %s5076 = smul.addr %s5075, 8
        %s5077 = scalar_lea.vmem %s6, %s5076
        // Predicated region
        $region57: #{tpu_custom_call.1} parent=39 // pred_check
          %p5078 = pneg %p243
        $region58: #{tpu_custom_call.1} parent=39 // pred_check_branch
          %5080 = sbr.rel (%p5078) target = $region60
        $region59: #{tpu_custom_call.1} parent=39 // pred_region
          %s5081 = smul.u32 16, %s30
        $region60: #{tpu_custom_call.1} parent=39 // pred_fallthru
          _
      $region40: #{tpu_custom_call.1} parent=5 // pred_fallthru
        _
      %p5082 = scmp.le.s32.totalorder 2, %s21
      // Predicated region
      $region61: #{tpu_custom_call.1} parent=5 // pred_check
        %p5083 = pneg %p5082
      $region62: #{tpu_custom_call.1} parent=5 // pred_check_branch
        %5085 = sbr.rel (%p5083) target = $region64
      $region63: #{tpu_custom_call.1} parent=5 // pred_region
        %s5086 = ssub.s32 %s21, 2
        // Predicated region
        $region65: #{tpu_custom_call.1} parent=63 // pred_check
          %p5087 = pneg %p249
        $region66: #{tpu_custom_call.1} parent=63 // pred_check_branch
          %5089 = sbr.rel (%p5087) target = $region68
        $region67: #{tpu_custom_call.1} parent=63 // pred_region
          %s5090 = smul.u32 16, %s32
          %p5091 = scmp.lt.s32.totalorder %s5090, 63
          %s5092 = scalar_select %p5091, %s5090, 63
          %s5093 = smul.addr %s5092, 8
          %s5094 = scalar_lea.vmem %s6, %s5093
        $region68: #{tpu_custom_call.1} parent=63 // pred_fallthru
          _
      $region64: #{tpu_custom_call.1} parent=5 // pred_fallthru
        _
    $region6: #{tpu_custom_call.1} parent=1 // loop_footer
      %s25 = sadd.s32 1, %s21
    $region7: #{tpu_custom_call.1} parent=1 // loop_footer_branch
      %20 = sbr.rel target = $region3
    $region8: #{tpu_custom_call.1} parent=1 // loop_exit
      _
    %5095 = vsyncpa [#allocation7], 1
    %s5096 = scalar_lea.sflag [#allocation7], 1
    %5097 = vsyncpa %s5096, 1

</llo_original>
